<compile_context>
chip_gen: v7x
topology: tpu7x:2x2x1
jax: 0.10.0
libtpu: 0.0.40
codegen_flags: <defaults>
</compile_context>

<pallas_src>
import math

import jax
import jax.numpy as jnp
import numpy as np
from jax import lax
from jax.experimental import pallas as pl
from jax.experimental.pallas import tpu as pltpu

NEG_SLOPE = 0.01   # nn.LeakyReLU default
BN_EPS = 1e-5      # nn.BatchNorm3d default


def _leaky(v):
    return jnp.where(v > 0, v, NEG_SLOPE * v)


def _conv_weight_full(w_dense, n):
    """(Cout, Cin, ksz) dense conv weight -> (n*Cout, ksz*n*Cin) im2col weight.

    Row index    = nb*Cout + co
    Column index = k*(n*Cin) + nb*Cin + ci      (block-diagonal over batch nb)
    """
    cout, cin, ksz = w_dense.shape
    wt = jnp.transpose(w_dense, (2, 0, 1))               # (ksz, Cout, Cin)
    eye = jnp.eye(n, dtype=w_dense.dtype)                 # batch block-diagonal
    wb = jnp.einsum('koc,nm->nokmc', wt, eye)             # (n, Cout, ksz, n, Cin)
    return wb.reshape(n * cout, ksz * n * cin)


def net_forward(x5, params):
    """x5: (N, 2, D, 1, 1) float32 — PyTorch NCDHW input."""
    n, cin0, d, h, w = x5.shape
    assert cin0 == 2 and h == 1 and w == 1
    f32 = jnp.float32

    # Batch folded onto sublanes: (N*Cin, D).
    x = x5.reshape(n, cin0, d).reshape(n * cin0, d).astype(f32)

    # Depths after the four VALID convs (k = 5, 10, 15, 31).
    d1, d2, d3, d4 = d - 4, d - 13, d - 27, d - 57
    assert 30 * d4 == 1020, "input depth must make view(-1, 1020) valid"
    conv_meta = ((5, 10, d1), (10, 20, d2), (15, 20, d3), (31, 30, d4))

    # Grouped Conv3d(2, 10, groups=2) as a dense conv with block-diag weight.
    gmask = (jnp.arange(2)[None, :] == (jnp.arange(10) // 5)[:, None]).astype(f32)
    w1_dense = params["w1"][:, 0, :][:, None, :] * gmask[:, :, None]   # (10,2,5)

    # Host-built im2col weights.  Conv biases b1..b4 are intentionally dropped:
    # the following affine-free training-mode BatchNorm cancels them exactly.
    wf1 = _conv_weight_full(w1_dense, n)            # (n*10,  5*n*2 )
    wf2 = _conv_weight_full(params["w2"], n)        # (n*20, 10*n*10)
    wf3 = _conv_weight_full(params["w3"], n)        # (n*20, 15*n*20)
    wf4 = _conv_weight_full(params["w4"], n)        # (n*30, 31*n*20)

    # FC weight rearranged so lane j contracts:  wbT[j, o*30 + c] = fcw[o, c*d4 + j]
    fcw3 = params["fcw"].reshape(4, 30, d4)
    wbT = jnp.transpose(fcw3, (2, 0, 1)).reshape(d4, 4 * 30)
    fcb = params["fcb"].reshape(1, 4)

    def kernel(x_ref, w1_ref, w2_ref, w3_ref, w4_ref, wbT_ref, fcb_ref, out_ref):

        def conv(y, w_ref, ksz, d_out):
            # im2col: stack the ksz shifted lane windows along the contraction
            # (sublane) axis -> one MXU matmul per layer.
            cols = [y[:, k:k + d_out] for k in range(ksz)]
            xcol = cols[0] if ksz == 1 else jnp.concatenate(cols, axis=0)
            return jnp.dot(w_ref[...], xcol, preferred_element_type=f32)

        def bn_lrelu(y, cout, d_out):
            # Training-mode BatchNorm3d: per-channel stats over (N, D), biased
            # variance, gamma=1 / beta=0.  Centered two-pass variance.
            cnt = float(n * d_out)
            s1 = jnp.sum(y, axis=1, keepdims=True)                 # (n*C, 1)
            sc = s1[0:cout]
            for i in range(1, n):
                sc = sc + s1[i * cout:(i + 1) * cout]
            mean_c = sc / cnt                                       # (C, 1)
            mean_b = (jnp.concatenate([mean_c] * n, axis=0) if n > 1 else mean_c)
            yc = y - mean_b
            s2 = jnp.sum(yc * yc, axis=1, keepdims=True)
            vc = s2[0:cout]
            for i in range(1, n):
                vc = vc + s2[i * cout:(i + 1) * cout]
            rstd_c = lax.rsqrt(vc / cnt + BN_EPS)
            rstd_b = (jnp.concatenate([rstd_c] * n, axis=0) if n > 1 else rstd_c)
            return _leaky(yc * rstd_b)

        y = x_ref[...]                                              # (n*2, D)
        for w_ref, (ksz, cout, d_out) in zip(
                (w1_ref, w2_ref, w3_ref, w4_ref), conv_meta):
            y = bn_lrelu(conv(y, w_ref, ksz, d_out), cout, d_out)
        # y: (n*30, d4)

        # ---- Fused Linear(1020, 4) -------------------------------------
        # g[r, o*30+c'] = <y[r,:], fcw[o, c'*d4:(c'+1)*d4]>; keep c' == c(r),
        # sum the channel block per output o, then sum each batch's rows.
        # Selector/mask constants built in-kernel from iota (compare-only).
        def blocked_mod(idx, m, nblocks):
            out = idx
            for i in range(1, nblocks):
                out = out - m * (idx >= m * i).astype(idx.dtype)
            return out

        def blocked_div(idx, m, nblocks):
            out = jnp.zeros_like(idx)
            for i in range(1, nblocks):
                out = out + (idx >= m * i).astype(idx.dtype)
            return out

        nrows = n * 30
        r_i = lax.broadcasted_iota(jnp.int32, (nrows, 4 * 30), 0)
        l_i = lax.broadcasted_iota(jnp.int32, (nrows, 4 * 30), 1)
        mask = (blocked_mod(r_i, 30, n) == blocked_mod(l_i, 30, 4)).astype(f32)

        ll = lax.broadcasted_iota(jnp.int32, (4 * 30, 4), 0)
        oo = lax.broadcasted_iota(jnp.int32, (4 * 30, 4), 1)
        lane_sel = (blocked_div(ll, 30, 4) == oo).astype(f32)       # (120, 4)

        nn = lax.broadcasted_iota(jnp.int32, (n, nrows), 0)
        rr = lax.broadcasted_iota(jnp.int32, (n, nrows), 1)
        row_sel = (nn == blocked_div(rr, 30, n)).astype(f32)        # (n, n*30)

        g = jnp.dot(y, wbT_ref[...], preferred_element_type=f32)    # (n*30, 120)
        s = jnp.dot(g * mask, lane_sel, preferred_element_type=f32) # (n*30, 4)
        o2 = jnp.dot(row_sel, s, preferred_element_type=f32)        # (n, 4)
        out_ref[...] = _leaky(o2 + fcb_ref[...])                    # (n, 4)

    vmem = pl.BlockSpec(memory_space=pltpu.MemorySpace.VMEM)
    return pl.pallas_call(
        kernel,
        out_shape=jax.ShapeDtypeStruct((n, 4), f32),
        in_specs=[vmem] * 7,
        out_specs=vmem,
    )(x, wf1, wf2, wf3, wf4, wbT, fcb)


def init_params(key):
    # kaiming_uniform-style init (bound = sqrt(6 / fan_in)), zero biases —
    # matches the module's _initialize_weights statistics.
    def ku(k, shape, fan_in):
        bound = math.sqrt(6.0 / fan_in)
        return jax.random.uniform(k, shape, jnp.float32, -bound, bound)

    ks = jax.random.split(key, 5)
    return dict(
        w1=ku(ks[0], (10, 1, 5), 1 * 5),      # Conv3d(2,10,(5,1,1),groups=2)
        w2=ku(ks[1], (20, 10, 10), 10 * 10),  # Conv3d(10,20,(10,1,1))
        w3=ku(ks[2], (20, 20, 15), 20 * 15),  # Conv3d(20,20,(15,1,1))
        w4=ku(ks[3], (30, 20, 31), 20 * 31),  # Conv3d(20,30,(31,1,1))
        fcw=ku(ks[4], (4, 1020), 1020),       # Linear(1020, 4)
        b1=jnp.zeros((10,), jnp.float32),
        b2=jnp.zeros((20,), jnp.float32),
        b3=jnp.zeros((20,), jnp.float32),
        b4=jnp.zeros((30,), jnp.float32),
        fcb=jnp.zeros((4,), jnp.float32),
    )


def ref_forward(x5, params):
    """Pure-JAX reference (mirrors the PyTorch forward in training mode)."""
    n = x5.shape[0]
    x = x5.reshape(n, 2, -1)

    def conv1d(x, w, b, groups=1):
        y = jax.lax.conv_general_dilated(
            x, w, window_strides=(1,), padding="VALID",
            dimension_numbers=("NCH", "OIH", "NCH"),
            feature_group_count=groups)
        return y + b[None, :, None]

    def bn(x):
        mean = x.mean(axis=(0, 2), keepdims=True)
        var = ((x - mean) ** 2).mean(axis=(0, 2), keepdims=True)
        return (x - mean) * jax.lax.rsqrt(var + BN_EPS)

    y = _leaky(bn(conv1d(x, params["w1"], params["b1"], groups=2)))
    y = _leaky(bn(conv1d(y, params["w2"], params["b2"])))
    y = _leaky(bn(conv1d(y, params["w3"], params["b3"])))
    y = _leaky(bn(conv1d(y, params["w4"], params["b4"])))
    y = y.reshape(n, -1)
    y = y @ params["fcw"].T + params["fcb"]
    return _leaky(y)


if __name__ == "__main__":
    key = jax.random.PRNGKey(0)
    kp, kx, kb = jax.random.split(key, 3)
    params = init_params(kp)

    # The module initializes all biases to 0; make them nonzero here so the
    # test also exercises the kernel's bias handling (conv biases cancel
    # exactly through the training-mode BatchNorm and are never sent to the
    # kernel; the FC bias is applied in-kernel).
    bkeys = jax.random.split(kb, 5)
    params.update(
        b1=0.1 * jax.random.normal(bkeys[0], (10,), jnp.float32),
        b2=0.1 * jax.random.normal(bkeys[1], (20,), jnp.float32),
        b3=0.1 * jax.random.normal(bkeys[2], (20,), jnp.float32),
        b4=0.1 * jax.random.normal(bkeys[3], (30,), jnp.float32),
        fcb=0.1 * jax.random.normal(bkeys[4], (4,), jnp.float32),
    )

    # batch=2, 2 input channels (real/imag), depth 91, H=W=1 (NCDHW)
    x = jax.random.normal(kx, (2, 2, 91, 1, 1), jnp.float32)

    out = jax.block_until_ready(net_forward(x, params))
    ref = jax.block_until_ready(ref_forward(x, params))

    assert out.shape == (2, 4)
    np.testing.assert_allclose(np.asarray(out), np.asarray(ref),
                               rtol=2e-4, atol=2e-4)
    print("KERNEL_OK")
</pallas_src>

<mosaic_0001>
module attributes {stable_mosaic.version = 11 : i64} {
  func.func @kernel(%arg0: memref<4x91xf32, #tpu.memory_space<vmem>>, %arg1: memref<20x20xf32, #tpu.memory_space<vmem>>, %arg2: memref<40x200xf32, #tpu.memory_space<vmem>>, %arg3: memref<40x600xf32, #tpu.memory_space<vmem>>, %arg4: memref<60x1240xf32, #tpu.memory_space<vmem>>, %arg5: memref<34x120xf32, #tpu.memory_space<vmem>>, %arg6: memref<1x4xf32, #tpu.memory_space<vmem>>, %arg7: memref<2x4xf32, #tpu.memory_space<vmem>>) attributes {dimension_semantics = [], scalar_prefetch = 0 : i64, scratch_operands = 0 : i64, tpu.core_type = #tpu.core_type<tc>} {
    %c0 = arith.constant 0 : index
    %c0_0 = arith.constant 0 : index
    %0 = vector.load %arg0[%c0, %c0_0] : memref<4x91xf32, #tpu.memory_space<vmem>>, vector<4x91xf32>
    %1 = vector.extract_strided_slice %0 {offsets = [0, 0], sizes = [4, 87], strides = [1, 1]} : vector<4x91xf32> to vector<4x87xf32>
    %2 = vector.extract_strided_slice %0 {offsets = [0, 1], sizes = [4, 87], strides = [1, 1]} : vector<4x91xf32> to vector<4x87xf32>
    %3 = vector.extract_strided_slice %0 {offsets = [0, 2], sizes = [4, 87], strides = [1, 1]} : vector<4x91xf32> to vector<4x87xf32>
    %4 = vector.extract_strided_slice %0 {offsets = [0, 3], sizes = [4, 87], strides = [1, 1]} : vector<4x91xf32> to vector<4x87xf32>
    %5 = vector.extract_strided_slice %0 {offsets = [0, 4], sizes = [4, 87], strides = [1, 1]} : vector<4x91xf32> to vector<4x87xf32>
    %6 = tpu.concatenate %1, %2, %3, %4, %5 in 0 : vector<4x87xf32>, vector<4x87xf32>, vector<4x87xf32>, vector<4x87xf32>, vector<4x87xf32> -> vector<20x87xf32>
    %c0_1 = arith.constant 0 : index
    %c0_2 = arith.constant 0 : index
    %7 = vector.load %arg1[%c0_1, %c0_2] : memref<20x20xf32, #tpu.memory_space<vmem>>, vector<20x20xf32>
    %cst = arith.constant dense<0.000000e+00> : vector<20x87xf32>
    %8 = tpu.matmul %7, %6, %cst {dimension_numbers = #tpu.dot_dimension_numbers<[1], [0], [0], [1], [0, 0, 1, 1], [], []>} : vector<20x20xf32>, vector<20x87xf32>, vector<20x87xf32> -> vector<20x87xf32>
    %cst_3 = arith.constant dense<0.000000e+00> : vector<20xf32>
    %9 = vector.multi_reduction <add>, %8, %cst_3 [1] : vector<20x87xf32> to vector<20xf32>
    %10 = vector.shape_cast %9 : vector<20xf32> to vector<20x1xf32>
    %11 = vector.extract_strided_slice %10 {offsets = [0, 0], sizes = [10, 1], strides = [1, 1]} : vector<20x1xf32> to vector<10x1xf32>
    %12 = vector.extract_strided_slice %10 {offsets = [10, 0], sizes = [10, 1], strides = [1, 1]} : vector<20x1xf32> to vector<10x1xf32>
    %13 = arith.addf %11, %12 : vector<10x1xf32>
    %cst_4 = arith.constant 1.740000e+02 : f32
    %14 = vector.broadcast %cst_4 : f32 to vector<10x1xf32>
    %15 = arith.divf %13, %14 : vector<10x1xf32>
    %16 = tpu.concatenate %15, %15 in 0 : vector<10x1xf32>, vector<10x1xf32> -> vector<20x1xf32>
    %17 = vector.broadcast %16 : vector<20x1xf32> to vector<20x87xf32>
    %18 = arith.subf %8, %17 : vector<20x87xf32>
    %19 = arith.mulf %18, %18 : vector<20x87xf32>
    %cst_5 = arith.constant dense<0.000000e+00> : vector<20xf32>
    %20 = vector.multi_reduction <add>, %19, %cst_5 [1] : vector<20x87xf32> to vector<20xf32>
    %21 = vector.shape_cast %20 : vector<20xf32> to vector<20x1xf32>
    %22 = vector.extract_strided_slice %21 {offsets = [0, 0], sizes = [10, 1], strides = [1, 1]} : vector<20x1xf32> to vector<10x1xf32>
    %23 = vector.extract_strided_slice %21 {offsets = [10, 0], sizes = [10, 1], strides = [1, 1]} : vector<20x1xf32> to vector<10x1xf32>
    %24 = arith.addf %22, %23 : vector<10x1xf32>
    %cst_6 = arith.constant 1.740000e+02 : f32
    %25 = vector.broadcast %cst_6 : f32 to vector<10x1xf32>
    %26 = arith.divf %24, %25 : vector<10x1xf32>
    %cst_7 = arith.constant 9.99999974E-6 : f32
    %27 = vector.broadcast %cst_7 : f32 to vector<10x1xf32>
    %28 = arith.addf %26, %27 : vector<10x1xf32>
    %29 = math.rsqrt %28 : vector<10x1xf32>
    %30 = tpu.concatenate %29, %29 in 0 : vector<10x1xf32>, vector<10x1xf32> -> vector<20x1xf32>
    %31 = vector.broadcast %30 : vector<20x1xf32> to vector<20x87xf32>
    %32 = arith.mulf %18, %31 : vector<20x87xf32>
    %cst_8 = arith.constant 0.000000e+00 : f32
    %33 = vector.broadcast %cst_8 : f32 to vector<20x87xf32>
    %34 = arith.cmpf ogt, %32, %33 : vector<20x87xf32>
    %cst_9 = arith.constant 0.00999999977 : f32
    %35 = vector.broadcast %cst_9 : f32 to vector<20x87xf32>
    %36 = arith.mulf %35, %32 : vector<20x87xf32>
    %37 = arith.select %34, %32, %36 : vector<20x87xi1>, vector<20x87xf32>
    %38 = vector.extract_strided_slice %37 {offsets = [0, 0], sizes = [20, 78], strides = [1, 1]} : vector<20x87xf32> to vector<20x78xf32>
    %39 = vector.extract_strided_slice %37 {offsets = [0, 1], sizes = [20, 78], strides = [1, 1]} : vector<20x87xf32> to vector<20x78xf32>
    %40 = vector.extract_strided_slice %37 {offsets = [0, 2], sizes = [20, 78], strides = [1, 1]} : vector<20x87xf32> to vector<20x78xf32>
    %41 = vector.extract_strided_slice %37 {offsets = [0, 3], sizes = [20, 78], strides = [1, 1]} : vector<20x87xf32> to vector<20x78xf32>
    %42 = vector.extract_strided_slice %37 {offsets = [0, 4], sizes = [20, 78], strides = [1, 1]} : vector<20x87xf32> to vector<20x78xf32>
    %43 = vector.extract_strided_slice %37 {offsets = [0, 5], sizes = [20, 78], strides = [1, 1]} : vector<20x87xf32> to vector<20x78xf32>
    %44 = vector.extract_strided_slice %37 {offsets = [0, 6], sizes = [20, 78], strides = [1, 1]} : vector<20x87xf32> to vector<20x78xf32>
    %45 = vector.extract_strided_slice %37 {offsets = [0, 7], sizes = [20, 78], strides = [1, 1]} : vector<20x87xf32> to vector<20x78xf32>
    %46 = vector.extract_strided_slice %37 {offsets = [0, 8], sizes = [20, 78], strides = [1, 1]} : vector<20x87xf32> to vector<20x78xf32>
    %47 = vector.extract_strided_slice %37 {offsets = [0, 9], sizes = [20, 78], strides = [1, 1]} : vector<20x87xf32> to vector<20x78xf32>
    %48 = tpu.concatenate %38, %39, %40, %41, %42, %43, %44, %45, %46, %47 in 0 : vector<20x78xf32>, vector<20x78xf32>, vector<20x78xf32>, vector<20x78xf32>, vector<20x78xf32>, vector<20x78xf32>, vector<20x78xf32>, vector<20x78xf32>, vector<20x78xf32>, vector<20x78xf32> -> vector<200x78xf32>
    %c0_10 = arith.constant 0 : index
    %c0_11 = arith.constant 0 : index
    %49 = vector.load %arg2[%c0_10, %c0_11] : memref<40x200xf32, #tpu.memory_space<vmem>>, vector<40x200xf32>
    %cst_12 = arith.constant dense<0.000000e+00> : vector<40x78xf32>
    %50 = tpu.matmul %49, %48, %cst_12 {dimension_numbers = #tpu.dot_dimension_numbers<[1], [0], [0], [1], [0, 0, 1, 1], [], []>} : vector<40x200xf32>, vector<200x78xf32>, vector<40x78xf32> -> vector<40x78xf32>
    %cst_13 = arith.constant dense<0.000000e+00> : vector<40xf32>
    %51 = vector.multi_reduction <add>, %50, %cst_13 [1] : vector<40x78xf32> to vector<40xf32>
    %52 = vector.shape_cast %51 : vector<40xf32> to vector<40x1xf32>
    %53 = vector.extract_strided_slice %52 {offsets = [0, 0], sizes = [20, 1], strides = [1, 1]} : vector<40x1xf32> to vector<20x1xf32>
    %54 = vector.extract_strided_slice %52 {offsets = [20, 0], sizes = [20, 1], strides = [1, 1]} : vector<40x1xf32> to vector<20x1xf32>
    %55 = arith.addf %53, %54 : vector<20x1xf32>
    %cst_14 = arith.constant 1.560000e+02 : f32
    %56 = vector.broadcast %cst_14 : f32 to vector<20x1xf32>
    %57 = arith.divf %55, %56 : vector<20x1xf32>
    %58 = tpu.concatenate %57, %57 in 0 : vector<20x1xf32>, vector<20x1xf32> -> vector<40x1xf32>
    %59 = vector.broadcast %58 : vector<40x1xf32> to vector<40x78xf32>
    %60 = arith.subf %50, %59 : vector<40x78xf32>
    %61 = arith.mulf %60, %60 : vector<40x78xf32>
    %cst_15 = arith.constant dense<0.000000e+00> : vector<40xf32>
    %62 = vector.multi_reduction <add>, %61, %cst_15 [1] : vector<40x78xf32> to vector<40xf32>
    %63 = vector.shape_cast %62 : vector<40xf32> to vector<40x1xf32>
    %64 = vector.extract_strided_slice %63 {offsets = [0, 0], sizes = [20, 1], strides = [1, 1]} : vector<40x1xf32> to vector<20x1xf32>
    %65 = vector.extract_strided_slice %63 {offsets = [20, 0], sizes = [20, 1], strides = [1, 1]} : vector<40x1xf32> to vector<20x1xf32>
    %66 = arith.addf %64, %65 : vector<20x1xf32>
    %cst_16 = arith.constant 1.560000e+02 : f32
    %67 = vector.broadcast %cst_16 : f32 to vector<20x1xf32>
    %68 = arith.divf %66, %67 : vector<20x1xf32>
    %cst_17 = arith.constant 9.99999974E-6 : f32
    %69 = vector.broadcast %cst_17 : f32 to vector<20x1xf32>
    %70 = arith.addf %68, %69 : vector<20x1xf32>
    %71 = math.rsqrt %70 : vector<20x1xf32>
    %72 = tpu.concatenate %71, %71 in 0 : vector<20x1xf32>, vector<20x1xf32> -> vector<40x1xf32>
    %73 = vector.broadcast %72 : vector<40x1xf32> to vector<40x78xf32>
    %74 = arith.mulf %60, %73 : vector<40x78xf32>
    %cst_18 = arith.constant 0.000000e+00 : f32
    %75 = vector.broadcast %cst_18 : f32 to vector<40x78xf32>
    %76 = arith.cmpf ogt, %74, %75 : vector<40x78xf32>
    %cst_19 = arith.constant 0.00999999977 : f32
    %77 = vector.broadcast %cst_19 : f32 to vector<40x78xf32>
    %78 = arith.mulf %77, %74 : vector<40x78xf32>
    %79 = arith.select %76, %74, %78 : vector<40x78xi1>, vector<40x78xf32>
    %80 = vector.extract_strided_slice %79 {offsets = [0, 0], sizes = [40, 64], strides = [1, 1]} : vector<40x78xf32> to vector<40x64xf32>
    %81 = vector.extract_strided_slice %79 {offsets = [0, 1], sizes = [40, 64], strides = [1, 1]} : vector<40x78xf32> to vector<40x64xf32>
    %82 = vector.extract_strided_slice %79 {offsets = [0, 2], sizes = [40, 64], strides = [1, 1]} : vector<40x78xf32> to vector<40x64xf32>
    %83 = vector.extract_strided_slice %79 {offsets = [0, 3], sizes = [40, 64], strides = [1, 1]} : vector<40x78xf32> to vector<40x64xf32>
    %84 = vector.extract_strided_slice %79 {offsets = [0, 4], sizes = [40, 64], strides = [1, 1]} : vector<40x78xf32> to vector<40x64xf32>
    %85 = vector.extract_strided_slice %79 {offsets = [0, 5], sizes = [40, 64], strides = [1, 1]} : vector<40x78xf32> to vector<40x64xf32>
    %86 = vector.extract_strided_slice %79 {offsets = [0, 6], sizes = [40, 64], strides = [1, 1]} : vector<40x78xf32> to vector<40x64xf32>
    %87 = vector.extract_strided_slice %79 {offsets = [0, 7], sizes = [40, 64], strides = [1, 1]} : vector<40x78xf32> to vector<40x64xf32>
    %88 = vector.extract_strided_slice %79 {offsets = [0, 8], sizes = [40, 64], strides = [1, 1]} : vector<40x78xf32> to vector<40x64xf32>
    %89 = vector.extract_strided_slice %79 {offsets = [0, 9], sizes = [40, 64], strides = [1, 1]} : vector<40x78xf32> to vector<40x64xf32>
    %90 = vector.extract_strided_slice %79 {offsets = [0, 10], sizes = [40, 64], strides = [1, 1]} : vector<40x78xf32> to vector<40x64xf32>
    %91 = vector.extract_strided_slice %79 {offsets = [0, 11], sizes = [40, 64], strides = [1, 1]} : vector<40x78xf32> to vector<40x64xf32>
    %92 = vector.extract_strided_slice %79 {offsets = [0, 12], sizes = [40, 64], strides = [1, 1]} : vector<40x78xf32> to vector<40x64xf32>
    %93 = vector.extract_strided_slice %79 {offsets = [0, 13], sizes = [40, 64], strides = [1, 1]} : vector<40x78xf32> to vector<40x64xf32>
    %94 = vector.extract_strided_slice %79 {offsets = [0, 14], sizes = [40, 64], strides = [1, 1]} : vector<40x78xf32> to vector<40x64xf32>
    %95 = tpu.concatenate %80, %81, %82, %83, %84, %85, %86, %87, %88, %89, %90, %91, %92, %93, %94 in 0 : vector<40x64xf32>, vector<40x64xf32>, vector<40x64xf32>, vector<40x64xf32>, vector<40x64xf32>, vector<40x64xf32>, vector<40x64xf32>, vector<40x64xf32>, vector<40x64xf32>, vector<40x64xf32>, vector<40x64xf32>, vector<40x64xf32>, vector<40x64xf32>, vector<40x64xf32>, vector<40x64xf32> -> vector<600x64xf32>
    %c0_20 = arith.constant 0 : index
    %c0_21 = arith.constant 0 : index
    %96 = vector.load %arg3[%c0_20, %c0_21] : memref<40x600xf32, #tpu.memory_space<vmem>>, vector<40x600xf32>
    %cst_22 = arith.constant dense<0.000000e+00> : vector<40x64xf32>
    %97 = tpu.matmul %96, %95, %cst_22 {dimension_numbers = #tpu.dot_dimension_numbers<[1], [0], [0], [1], [0, 0, 1, 1], [], []>} : vector<40x600xf32>, vector<600x64xf32>, vector<40x64xf32> -> vector<40x64xf32>
    %cst_23 = arith.constant dense<0.000000e+00> : vector<40xf32>
    %98 = vector.multi_reduction <add>, %97, %cst_23 [1] : vector<40x64xf32> to vector<40xf32>
    %99 = vector.shape_cast %98 : vector<40xf32> to vector<40x1xf32>
    %100 = vector.extract_strided_slice %99 {offsets = [0, 0], sizes = [20, 1], strides = [1, 1]} : vector<40x1xf32> to vector<20x1xf32>
    %101 = vector.extract_strided_slice %99 {offsets = [20, 0], sizes = [20, 1], strides = [1, 1]} : vector<40x1xf32> to vector<20x1xf32>
    %102 = arith.addf %100, %101 : vector<20x1xf32>
    %cst_24 = arith.constant 1.280000e+02 : f32
    %103 = vector.broadcast %cst_24 : f32 to vector<20x1xf32>
    %104 = arith.divf %102, %103 : vector<20x1xf32>
    %105 = tpu.concatenate %104, %104 in 0 : vector<20x1xf32>, vector<20x1xf32> -> vector<40x1xf32>
    %106 = vector.broadcast %105 : vector<40x1xf32> to vector<40x64xf32>
    %107 = arith.subf %97, %106 : vector<40x64xf32>
    %108 = arith.mulf %107, %107 : vector<40x64xf32>
    %cst_25 = arith.constant dense<0.000000e+00> : vector<40xf32>
    %109 = vector.multi_reduction <add>, %108, %cst_25 [1] : vector<40x64xf32> to vector<40xf32>
    %110 = vector.shape_cast %109 : vector<40xf32> to vector<40x1xf32>
    %111 = vector.extract_strided_slice %110 {offsets = [0, 0], sizes = [20, 1], strides = [1, 1]} : vector<40x1xf32> to vector<20x1xf32>
    %112 = vector.extract_strided_slice %110 {offsets = [20, 0], sizes = [20, 1], strides = [1, 1]} : vector<40x1xf32> to vector<20x1xf32>
    %113 = arith.addf %111, %112 : vector<20x1xf32>
    %cst_26 = arith.constant 1.280000e+02 : f32
    %114 = vector.broadcast %cst_26 : f32 to vector<20x1xf32>
    %115 = arith.divf %113, %114 : vector<20x1xf32>
    %cst_27 = arith.constant 9.99999974E-6 : f32
    %116 = vector.broadcast %cst_27 : f32 to vector<20x1xf32>
    %117 = arith.addf %115, %116 : vector<20x1xf32>
    %118 = math.rsqrt %117 : vector<20x1xf32>
    %119 = tpu.concatenate %118, %118 in 0 : vector<20x1xf32>, vector<20x1xf32> -> vector<40x1xf32>
    %120 = vector.broadcast %119 : vector<40x1xf32> to vector<40x64xf32>
    %121 = arith.mulf %107, %120 : vector<40x64xf32>
    %cst_28 = arith.constant 0.000000e+00 : f32
    %122 = vector.broadcast %cst_28 : f32 to vector<40x64xf32>
    %123 = arith.cmpf ogt, %121, %122 : vector<40x64xf32>
    %cst_29 = arith.constant 0.00999999977 : f32
    %124 = vector.broadcast %cst_29 : f32 to vector<40x64xf32>
    %125 = arith.mulf %124, %121 : vector<40x64xf32>
    %126 = arith.select %123, %121, %125 : vector<40x64xi1>, vector<40x64xf32>
    %127 = vector.extract_strided_slice %126 {offsets = [0, 0], sizes = [40, 34], strides = [1, 1]} : vector<40x64xf32> to vector<40x34xf32>
    %128 = vector.extract_strided_slice %126 {offsets = [0, 1], sizes = [40, 34], strides = [1, 1]} : vector<40x64xf32> to vector<40x34xf32>
    %129 = vector.extract_strided_slice %126 {offsets = [0, 2], sizes = [40, 34], strides = [1, 1]} : vector<40x64xf32> to vector<40x34xf32>
    %130 = vector.extract_strided_slice %126 {offsets = [0, 3], sizes = [40, 34], strides = [1, 1]} : vector<40x64xf32> to vector<40x34xf32>
    %131 = vector.extract_strided_slice %126 {offsets = [0, 4], sizes = [40, 34], strides = [1, 1]} : vector<40x64xf32> to vector<40x34xf32>
    %132 = vector.extract_strided_slice %126 {offsets = [0, 5], sizes = [40, 34], strides = [1, 1]} : vector<40x64xf32> to vector<40x34xf32>
    %133 = vector.extract_strided_slice %126 {offsets = [0, 6], sizes = [40, 34], strides = [1, 1]} : vector<40x64xf32> to vector<40x34xf32>
    %134 = vector.extract_strided_slice %126 {offsets = [0, 7], sizes = [40, 34], strides = [1, 1]} : vector<40x64xf32> to vector<40x34xf32>
    %135 = vector.extract_strided_slice %126 {offsets = [0, 8], sizes = [40, 34], strides = [1, 1]} : vector<40x64xf32> to vector<40x34xf32>
    %136 = vector.extract_strided_slice %126 {offsets = [0, 9], sizes = [40, 34], strides = [1, 1]} : vector<40x64xf32> to vector<40x34xf32>
    %137 = vector.extract_strided_slice %126 {offsets = [0, 10], sizes = [40, 34], strides = [1, 1]} : vector<40x64xf32> to vector<40x34xf32>
    %138 = vector.extract_strided_slice %126 {offsets = [0, 11], sizes = [40, 34], strides = [1, 1]} : vector<40x64xf32> to vector<40x34xf32>
    %139 = vector.extract_strided_slice %126 {offsets = [0, 12], sizes = [40, 34], strides = [1, 1]} : vector<40x64xf32> to vector<40x34xf32>
    %140 = vector.extract_strided_slice %126 {offsets = [0, 13], sizes = [40, 34], strides = [1, 1]} : vector<40x64xf32> to vector<40x34xf32>
    %141 = vector.extract_strided_slice %126 {offsets = [0, 14], sizes = [40, 34], strides = [1, 1]} : vector<40x64xf32> to vector<40x34xf32>
    %142 = vector.extract_strided_slice %126 {offsets = [0, 15], sizes = [40, 34], strides = [1, 1]} : vector<40x64xf32> to vector<40x34xf32>
    %143 = vector.extract_strided_slice %126 {offsets = [0, 16], sizes = [40, 34], strides = [1, 1]} : vector<40x64xf32> to vector<40x34xf32>
    %144 = vector.extract_strided_slice %126 {offsets = [0, 17], sizes = [40, 34], strides = [1, 1]} : vector<40x64xf32> to vector<40x34xf32>
    %145 = vector.extract_strided_slice %126 {offsets = [0, 18], sizes = [40, 34], strides = [1, 1]} : vector<40x64xf32> to vector<40x34xf32>
    %146 = vector.extract_strided_slice %126 {offsets = [0, 19], sizes = [40, 34], strides = [1, 1]} : vector<40x64xf32> to vector<40x34xf32>
    %147 = vector.extract_strided_slice %126 {offsets = [0, 20], sizes = [40, 34], strides = [1, 1]} : vector<40x64xf32> to vector<40x34xf32>
    %148 = vector.extract_strided_slice %126 {offsets = [0, 21], sizes = [40, 34], strides = [1, 1]} : vector<40x64xf32> to vector<40x34xf32>
    %149 = vector.extract_strided_slice %126 {offsets = [0, 22], sizes = [40, 34], strides = [1, 1]} : vector<40x64xf32> to vector<40x34xf32>
    %150 = vector.extract_strided_slice %126 {offsets = [0, 23], sizes = [40, 34], strides = [1, 1]} : vector<40x64xf32> to vector<40x34xf32>
    %151 = vector.extract_strided_slice %126 {offsets = [0, 24], sizes = [40, 34], strides = [1, 1]} : vector<40x64xf32> to vector<40x34xf32>
    %152 = vector.extract_strided_slice %126 {offsets = [0, 25], sizes = [40, 34], strides = [1, 1]} : vector<40x64xf32> to vector<40x34xf32>
    %153 = vector.extract_strided_slice %126 {offsets = [0, 26], sizes = [40, 34], strides = [1, 1]} : vector<40x64xf32> to vector<40x34xf32>
    %154 = vector.extract_strided_slice %126 {offsets = [0, 27], sizes = [40, 34], strides = [1, 1]} : vector<40x64xf32> to vector<40x34xf32>
    %155 = vector.extract_strided_slice %126 {offsets = [0, 28], sizes = [40, 34], strides = [1, 1]} : vector<40x64xf32> to vector<40x34xf32>
    %156 = vector.extract_strided_slice %126 {offsets = [0, 29], sizes = [40, 34], strides = [1, 1]} : vector<40x64xf32> to vector<40x34xf32>
    %157 = vector.extract_strided_slice %126 {offsets = [0, 30], sizes = [40, 34], strides = [1, 1]} : vector<40x64xf32> to vector<40x34xf32>
    %158 = tpu.concatenate %127, %128, %129, %130, %131, %132, %133, %134, %135, %136, %137, %138, %139, %140, %141, %142 in 0 : vector<40x34xf32>, vector<40x34xf32>, vector<40x34xf32>, vector<40x34xf32>, vector<40x34xf32>, vector<40x34xf32>, vector<40x34xf32>, vector<40x34xf32>, vector<40x34xf32>, vector<40x34xf32>, vector<40x34xf32>, vector<40x34xf32>, vector<40x34xf32>, vector<40x34xf32>, vector<40x34xf32>, vector<40x34xf32> -> vector<640x34xf32>
    %159 = tpu.concatenate %143, %144, %145, %146, %147, %148, %149, %150, %151, %152, %153, %154, %155, %156, %157 in 0 : vector<40x34xf32>, vector<40x34xf32>, vector<40x34xf32>, vector<40x34xf32>, vector<40x34xf32>, vector<40x34xf32>, vector<40x34xf32>, vector<40x34xf32>, vector<40x34xf32>, vector<40x34xf32>, vector<40x34xf32>, vector<40x34xf32>, vector<40x34xf32>, vector<40x34xf32>, vector<40x34xf32> -> vector<600x34xf32>
    %160 = tpu.concatenate %158, %159 in 0 : vector<640x34xf32>, vector<600x34xf32> -> vector<1240x34xf32>
    %c0_30 = arith.constant 0 : index
    %c0_31 = arith.constant 0 : index
    %161 = vector.load %arg4[%c0_30, %c0_31] : memref<60x1240xf32, #tpu.memory_space<vmem>>, vector<60x1240xf32>
    %cst_32 = arith.constant dense<0.000000e+00> : vector<60x34xf32>
    %162 = tpu.matmul %161, %160, %cst_32 {dimension_numbers = #tpu.dot_dimension_numbers<[1], [0], [0], [1], [0, 0, 1, 1], [], []>} : vector<60x1240xf32>, vector<1240x34xf32>, vector<60x34xf32> -> vector<60x34xf32>
    %cst_33 = arith.constant dense<0.000000e+00> : vector<60xf32>
    %163 = vector.multi_reduction <add>, %162, %cst_33 [1] : vector<60x34xf32> to vector<60xf32>
    %164 = vector.shape_cast %163 : vector<60xf32> to vector<60x1xf32>
    %165 = vector.extract_strided_slice %164 {offsets = [0, 0], sizes = [30, 1], strides = [1, 1]} : vector<60x1xf32> to vector<30x1xf32>
    %166 = vector.extract_strided_slice %164 {offsets = [30, 0], sizes = [30, 1], strides = [1, 1]} : vector<60x1xf32> to vector<30x1xf32>
    %167 = arith.addf %165, %166 : vector<30x1xf32>
    %cst_34 = arith.constant 6.800000e+01 : f32
    %168 = vector.broadcast %cst_34 : f32 to vector<30x1xf32>
    %169 = arith.divf %167, %168 : vector<30x1xf32>
    %170 = tpu.concatenate %169, %169 in 0 : vector<30x1xf32>, vector<30x1xf32> -> vector<60x1xf32>
    %171 = vector.broadcast %170 : vector<60x1xf32> to vector<60x34xf32>
    %172 = arith.subf %162, %171 : vector<60x34xf32>
    %173 = arith.mulf %172, %172 : vector<60x34xf32>
    %cst_35 = arith.constant dense<0.000000e+00> : vector<60xf32>
    %174 = vector.multi_reduction <add>, %173, %cst_35 [1] : vector<60x34xf32> to vector<60xf32>
    %175 = vector.shape_cast %174 : vector<60xf32> to vector<60x1xf32>
    %176 = vector.extract_strided_slice %175 {offsets = [0, 0], sizes = [30, 1], strides = [1, 1]} : vector<60x1xf32> to vector<30x1xf32>
    %177 = vector.extract_strided_slice %175 {offsets = [30, 0], sizes = [30, 1], strides = [1, 1]} : vector<60x1xf32> to vector<30x1xf32>
    %178 = arith.addf %176, %177 : vector<30x1xf32>
    %cst_36 = arith.constant 6.800000e+01 : f32
    %179 = vector.broadcast %cst_36 : f32 to vector<30x1xf32>
    %180 = arith.divf %178, %179 : vector<30x1xf32>
    %cst_37 = arith.constant 9.99999974E-6 : f32
    %181 = vector.broadcast %cst_37 : f32 to vector<30x1xf32>
    %182 = arith.addf %180, %181 : vector<30x1xf32>
    %183 = math.rsqrt %182 : vector<30x1xf32>
    %184 = tpu.concatenate %183, %183 in 0 : vector<30x1xf32>, vector<30x1xf32> -> vector<60x1xf32>
    %185 = vector.broadcast %184 : vector<60x1xf32> to vector<60x34xf32>
    %186 = arith.mulf %172, %185 : vector<60x34xf32>
    %cst_38 = arith.constant 0.000000e+00 : f32
    %187 = vector.broadcast %cst_38 : f32 to vector<60x34xf32>
    %188 = arith.cmpf ogt, %186, %187 : vector<60x34xf32>
    %cst_39 = arith.constant 0.00999999977 : f32
    %189 = vector.broadcast %cst_39 : f32 to vector<60x34xf32>
    %190 = arith.mulf %189, %186 : vector<60x34xf32>
    %191 = arith.select %188, %186, %190 : vector<60x34xi1>, vector<60x34xf32>
    %192 = tpu.iota {dimensions = array<i32: 0>} : vector<60x120xi32>
    %193 = tpu.iota {dimensions = array<i32: 1>} : vector<60x120xi32>
    %c30_i32 = arith.constant 30 : i32
    %194 = vector.broadcast %c30_i32 : i32 to vector<60x120xi32>
    %195 = arith.cmpi sge, %192, %194 : vector<60x120xi32>
    %196 = arith.extui %195 : vector<60x120xi1> to vector<60x120xi32>
    %c30_i32_40 = arith.constant 30 : i32
    %197 = vector.broadcast %c30_i32_40 : i32 to vector<60x120xi32>
    %198 = arith.muli %197, %196 : vector<60x120xi32>
    %199 = arith.subi %192, %198 : vector<60x120xi32>
    %c30_i32_41 = arith.constant 30 : i32
    %200 = vector.broadcast %c30_i32_41 : i32 to vector<60x120xi32>
    %201 = arith.cmpi sge, %193, %200 : vector<60x120xi32>
    %202 = arith.extui %201 : vector<60x120xi1> to vector<60x120xi32>
    %c30_i32_42 = arith.constant 30 : i32
    %203 = vector.broadcast %c30_i32_42 : i32 to vector<60x120xi32>
    %204 = arith.muli %203, %202 : vector<60x120xi32>
    %205 = arith.subi %193, %204 : vector<60x120xi32>
    %c60_i32 = arith.constant 60 : i32
    %206 = vector.broadcast %c60_i32 : i32 to vector<60x120xi32>
    %207 = arith.cmpi sge, %193, %206 : vector<60x120xi32>
    %208 = arith.extui %207 : vector<60x120xi1> to vector<60x120xi32>
    %c30_i32_43 = arith.constant 30 : i32
    %209 = vector.broadcast %c30_i32_43 : i32 to vector<60x120xi32>
    %210 = arith.muli %209, %208 : vector<60x120xi32>
    %211 = arith.subi %205, %210 : vector<60x120xi32>
    %c90_i32 = arith.constant 90 : i32
    %212 = vector.broadcast %c90_i32 : i32 to vector<60x120xi32>
    %213 = arith.cmpi sge, %193, %212 : vector<60x120xi32>
    %214 = arith.extui %213 : vector<60x120xi1> to vector<60x120xi32>
    %c30_i32_44 = arith.constant 30 : i32
    %215 = vector.broadcast %c30_i32_44 : i32 to vector<60x120xi32>
    %216 = arith.muli %215, %214 : vector<60x120xi32>
    %217 = arith.subi %211, %216 : vector<60x120xi32>
    %218 = arith.cmpi eq, %199, %217 : vector<60x120xi32>
    %219 = arith.extui %218 : vector<60x120xi1> to vector<60x120xi32>
    %220 = arith.sitofp %219 : vector<60x120xi32> to vector<60x120xf32>
    %221 = tpu.iota {dimensions = array<i32: 0>} : vector<120x4xi32>
    %222 = tpu.iota {dimensions = array<i32: 1>} : vector<120x4xi32>
    %c0_i32 = arith.constant 0 : i32
    %223 = vector.broadcast %c0_i32 : i32 to vector<120x4xi32>
    %c30_i32_45 = arith.constant 30 : i32
    %224 = vector.broadcast %c30_i32_45 : i32 to vector<120x4xi32>
    %225 = arith.cmpi sge, %221, %224 : vector<120x4xi32>
    %226 = arith.extui %225 : vector<120x4xi1> to vector<120x4xi32>
    %227 = arith.addi %223, %226 : vector<120x4xi32>
    %c60_i32_46 = arith.constant 60 : i32
    %228 = vector.broadcast %c60_i32_46 : i32 to vector<120x4xi32>
    %229 = arith.cmpi sge, %221, %228 : vector<120x4xi32>
    %230 = arith.extui %229 : vector<120x4xi1> to vector<120x4xi32>
    %231 = arith.addi %227, %230 : vector<120x4xi32>
    %c90_i32_47 = arith.constant 90 : i32
    %232 = vector.broadcast %c90_i32_47 : i32 to vector<120x4xi32>
    %233 = arith.cmpi sge, %221, %232 : vector<120x4xi32>
    %234 = arith.extui %233 : vector<120x4xi1> to vector<120x4xi32>
    %235 = arith.addi %231, %234 : vector<120x4xi32>
    %236 = arith.cmpi eq, %235, %222 : vector<120x4xi32>
    %237 = arith.extui %236 : vector<120x4xi1> to vector<120x4xi32>
    %238 = arith.sitofp %237 : vector<120x4xi32> to vector<120x4xf32>
    %239 = tpu.iota {dimensions = array<i32: 0>} : vector<2x60xi32>
    %240 = tpu.iota {dimensions = array<i32: 1>} : vector<2x60xi32>
    %c0_i32_48 = arith.constant 0 : i32
    %241 = vector.broadcast %c0_i32_48 : i32 to vector<2x60xi32>
    %c30_i32_49 = arith.constant 30 : i32
    %242 = vector.broadcast %c30_i32_49 : i32 to vector<2x60xi32>
    %243 = arith.cmpi sge, %240, %242 : vector<2x60xi32>
    %244 = arith.extui %243 : vector<2x60xi1> to vector<2x60xi32>
    %245 = arith.addi %241, %244 : vector<2x60xi32>
    %246 = arith.cmpi eq, %239, %245 : vector<2x60xi32>
    %247 = arith.extui %246 : vector<2x60xi1> to vector<2x60xi32>
    %248 = arith.sitofp %247 : vector<2x60xi32> to vector<2x60xf32>
    %c0_50 = arith.constant 0 : index
    %c0_51 = arith.constant 0 : index
    %249 = vector.load %arg5[%c0_50, %c0_51] : memref<34x120xf32, #tpu.memory_space<vmem>>, vector<34x120xf32>
    %cst_52 = arith.constant dense<0.000000e+00> : vector<60x120xf32>
    %250 = tpu.matmul %191, %249, %cst_52 {dimension_numbers = #tpu.dot_dimension_numbers<[1], [0], [0], [1], [0, 0, 1, 1], [], []>} : vector<60x34xf32>, vector<34x120xf32>, vector<60x120xf32> -> vector<60x120xf32>
    %251 = arith.mulf %250, %220 : vector<60x120xf32>
    %cst_53 = arith.constant dense<0.000000e+00> : vector<60x4xf32>
    %252 = tpu.matmul %251, %238, %cst_53 {dimension_numbers = #tpu.dot_dimension_numbers<[1], [0], [0], [1], [0, 0, 1, 1], [], []>} : vector<60x120xf32>, vector<120x4xf32>, vector<60x4xf32> -> vector<60x4xf32>
    %cst_54 = arith.constant dense<0.000000e+00> : vector<2x4xf32>
    %253 = tpu.matmul %248, %252, %cst_54 {dimension_numbers = #tpu.dot_dimension_numbers<[1], [0], [0], [1], [0, 0, 1, 1], [], []>} : vector<2x60xf32>, vector<60x4xf32>, vector<2x4xf32> -> vector<2x4xf32>
    %c0_55 = arith.constant 0 : index
    %c0_56 = arith.constant 0 : index
    %254 = vector.load %arg6[%c0_55, %c0_56] : memref<1x4xf32, #tpu.memory_space<vmem>>, vector<1x4xf32>
    %255 = vector.broadcast %254 : vector<1x4xf32> to vector<2x4xf32>
    %256 = arith.addf %253, %255 : vector<2x4xf32>
    %cst_57 = arith.constant 0.000000e+00 : f32
    %257 = vector.broadcast %cst_57 : f32 to vector<2x4xf32>
    %258 = arith.cmpf ogt, %256, %257 : vector<2x4xf32>
    %cst_58 = arith.constant 0.00999999977 : f32
    %259 = vector.broadcast %cst_58 : f32 to vector<2x4xf32>
    %260 = arith.mulf %259, %256 : vector<2x4xf32>
    %261 = arith.select %258, %256, %260 : vector<2x4xi1>, vector<2x4xf32>
    %c0_59 = arith.constant 0 : index
    %c0_60 = arith.constant 0 : index
    %262 = vector.load %arg7[%c0_59, %c0_60] : memref<2x4xf32, #tpu.memory_space<vmem>>, vector<2x4xf32>
    tpu.vector_store %arg7[%c0_59, %c0_60], %261 {strides = array<i32>} : memref<2x4xf32, #tpu.memory_space<vmem>>, vector<2x4xf32>,
    return
  }
}

</mosaic_0001>

<llo_original>
// kernel: tpu_custom_call.1
$region0: #{tpu_custom_call.1}
  #allocation0 [shape = 'u32[]', space=smem, size = 0x4, offset = 0x4, fixed_abs, tag = 'smem constant byte address 0x4 - core index']
  #allocation1 [shape = 'u32[144,128]{1,0:T(1,128)}', space=vmem, size = 0x12000, scoped, tag = 'internal scratch']
  %s0 = inlined_call_operand.hbm [shape: f32[4,91], index: 0, kind: input, shape index: {}]
  %s1 = inlined_call_operand.hbm [shape: f32[20,20], index: 1, kind: input, shape index: {}]
  %s2 = inlined_call_operand.hbm [shape: f32[40,200], index: 2, kind: input, shape index: {}]
  %s3 = inlined_call_operand.hbm [shape: f32[40,600], index: 3, kind: input, shape index: {}]
  %s4 = inlined_call_operand.hbm [shape: f32[60,1240], index: 4, kind: input, shape index: {}]
  %s5 = inlined_call_operand.hbm [shape: f32[34,120], index: 5, kind: input, shape index: {}]
  %s6 = inlined_call_operand.vmem [shape: f32[1,4], index: 6, kind: input, shape index: {}]
  %s7 = inlined_call_operand.hbm [shape: f32[2,4], index: 7, kind: output, shape index: {}]
  %s8 = sld [smem:[#allocation0]]
  $region62: #{tpu_custom_call.1} parent=0
    _
  %s10 = ssub.s32 1, %s8
  %s11 = scalar_select 0, %s10, %s8
  $region1: #{tpu_custom_call.1} parent=0
    #allocation2 [shape = 'u8[2048]{0}', space=vmem, size = 0x800, scoped, tag = 'input window, operand 0, single buffered']
    #allocation3 [shape = 's32[1]{0}', space=sflag, size = 0x4, scoped, tag = 'scoped memory for tpu_custom_call.1']
    #allocation4 [shape = 's32[1]{0}', space=sflag, size = 0x4, scoped, tag = 'scoped memory for tpu_custom_call.1']
    #allocation5 [shape = 'u8[12288]{0}', space=vmem, size = 0x3000, scoped, tag = 'input window, operand 1, single buffered']
    #allocation6 [shape = 's32[1]{0}', space=sflag, size = 0x4, scoped, tag = 'scoped memory for tpu_custom_call.1']
    #allocation7 [shape = 'u8[40960]{0}', space=vmem, size = 0xa000, scoped, tag = 'input window, operand 2, single buffered']
    #allocation8 [shape = 'u8[102400]{0}', space=vmem, size = 0x19000, scoped, tag = 'input window, operand 3, single buffered']
    #allocation9 [shape = 's32[1]{0}', space=sflag, size = 0x4, scoped, tag = 'scoped memory for tpu_custom_call.1']
    #allocation10 [shape = 'u8[327680]{0}', space=vmem, size = 0x50000, scoped, tag = 'input window, operand 4, single buffered']
    #allocation11 [shape = 'u8[20480]{0}', space=vmem, size = 0x5000, scoped, tag = 'input window, operand 5, single buffered']
    #allocation12 [shape = 's32[1]{0}', space=sflag, size = 0x4, scoped, tag = 'scoped memory for tpu_custom_call.1']
    #allocation13 [shape = 'u8[1024]{0}', space=vmem, size = 0x400, scoped, tag = 'output window, operand 0, single buffered']
    %12 = vsyncpa [#allocation3], 0
    %13 = vsyncpa [#allocation6], 0
    %14 = vsyncpa [#allocation9], 0
    %15 = vsyncpa [#allocation12], 0
    %16 = vsyncpa [#allocation4], 0
    // Predicated region
    $region2: #{tpu_custom_call.1} parent=1 // pred_check
      _
    $region3: #{tpu_custom_call.1} parent=1 // pred_check_branch
      %18 = sbr.rel (0) target = $region5
    $region4: #{tpu_custom_call.1} parent=1 // pred_region
      %s20 = ssub.s32 64, 64
      %21 = vsyncadd [#allocation3], %s20
      %s23 = sshll.u32 [#allocation2], 4
      %s24 = int_to_ptr.vmem [resolvable:$true] %s23
      %26 = dma.hbm_to_vmem [thread:$0]  %s0, 64, %s24, [#allocation3]
    $region5: #{tpu_custom_call.1} parent=1 // pred_fallthru
      _
    // Predicated region
    $region6: #{tpu_custom_call.1} parent=1 // pred_check
      _
    $region7: #{tpu_custom_call.1} parent=1 // pred_check_branch
      %28 = sbr.rel (0) target = $region9
    $region8: #{tpu_custom_call.1} parent=1 // pred_region
      %s30 = ssub.s32 384, 384
      %31 = vsyncadd [#allocation6], %s30
      %s32 = sshll.u32 [#allocation5], 4
      %s33 = int_to_ptr.vmem [resolvable:$true] %s32
      %38 = dma.hbm_to_vmem [thread:$0]  %s1, 384, %s33, [#allocation6], 128, 128, 8
    $region9: #{tpu_custom_call.1} parent=1 // pred_fallthru
      _
    // Predicated region
    $region10: #{tpu_custom_call.1} parent=1 // pred_check
      _
    $region11: #{tpu_custom_call.1} parent=1 // pred_check_branch
      %40 = sbr.rel (0) target = $region13
    $region12: #{tpu_custom_call.1} parent=1 // pred_region
      %s42 = ssub.s32 1280, 1280
      %43 = vsyncadd [#allocation6], %s42
      %s44 = sshll.u32 [#allocation7], 4
      %s45 = int_to_ptr.vmem [resolvable:$true] %s44
      %50 = dma.hbm_to_vmem [thread:$0]  %s2, 1280, %s45, [#allocation6], 256, 256, 16
    $region13: #{tpu_custom_call.1} parent=1 // pred_fallthru
      _
    // Predicated region
    $region14: #{tpu_custom_call.1} parent=1 // pred_check
      _
    $region15: #{tpu_custom_call.1} parent=1 // pred_check_branch
      %52 = sbr.rel (0) target = $region17
    $region16: #{tpu_custom_call.1} parent=1 // pred_region
      %s54 = ssub.s32 3200, 3200
      %55 = vsyncadd [#allocation9], %s54
      %s56 = sshll.u32 [#allocation8], 4
      %s57 = int_to_ptr.vmem [resolvable:$true] %s56
      %62 = dma.hbm_to_vmem [thread:$0]  %s3, 3200, %s57, [#allocation9], 640, 640, 40
    $region17: #{tpu_custom_call.1} parent=1 // pred_fallthru
      _
    // Predicated region
    $region18: #{tpu_custom_call.1} parent=1 // pred_check
      _
    $region19: #{tpu_custom_call.1} parent=1 // pred_check_branch
      %64 = sbr.rel (0) target = $region21
    $region20: #{tpu_custom_call.1} parent=1 // pred_region
      %s66 = ssub.s32 10240, 10240
      %67 = vsyncadd [#allocation9], %s66
      %s68 = sshll.u32 [#allocation10], 4
      %s69 = int_to_ptr.vmem [resolvable:$true] %s68
      %74 = dma.hbm_to_vmem [thread:$0]  %s4, 10240, %s69, [#allocation9], 1280, 1280, 80
    $region21: #{tpu_custom_call.1} parent=1 // pred_fallthru
      _
    // Predicated region
    $region22: #{tpu_custom_call.1} parent=1 // pred_check
      _
    $region23: #{tpu_custom_call.1} parent=1 // pred_check_branch
      %76 = sbr.rel (0) target = $region25
    $region24: #{tpu_custom_call.1} parent=1 // pred_region
      %s78 = ssub.s32 640, 640
      %79 = vsyncadd [#allocation12], %s78
      %s80 = sshll.u32 [#allocation11], 4
      %s81 = int_to_ptr.vmem [resolvable:$true] %s80
      %86 = dma.hbm_to_vmem [thread:$0]  %s5, 640, %s81, [#allocation12], 128, 128, 8
    $region25: #{tpu_custom_call.1} parent=1 // pred_fallthru
      _
    // Predicated region
    $region26: #{tpu_custom_call.1} parent=1 // pred_check
      _
    $region27: #{tpu_custom_call.1} parent=1 // pred_check_branch
      %88 = sbr.rel (0) target = $region29
    $region28: #{tpu_custom_call.1} parent=1 // pred_region
      _
    $region29: #{tpu_custom_call.1} parent=1 // pred_fallthru
      _
    // Predicated region
    $region30: #{tpu_custom_call.1} parent=1 // pred_check
      _
    $region31: #{tpu_custom_call.1} parent=1 // pred_check_branch
      %90 = sbr.rel (0) target = $region33
    $region32: #{tpu_custom_call.1} parent=1 // pred_region
      %91 = dma.done [#allocation3], 64
    $region33: #{tpu_custom_call.1} parent=1 // pred_fallthru
      _
    // Predicated region
    $region34: #{tpu_custom_call.1} parent=1 // pred_check
      _
    $region35: #{tpu_custom_call.1} parent=1 // pred_check_branch
      %93 = sbr.rel (0) target = $region37
    $region36: #{tpu_custom_call.1} parent=1 // pred_region
      %94 = dma.done [#allocation6], 384
    $region37: #{tpu_custom_call.1} parent=1 // pred_fallthru
      _
    // Predicated region
    $region38: #{tpu_custom_call.1} parent=1 // pred_check
      _
    $region39: #{tpu_custom_call.1} parent=1 // pred_check_branch
      %96 = sbr.rel (0) target = $region41
    $region40: #{tpu_custom_call.1} parent=1 // pred_region
      %97 = dma.done [#allocation6], 1280
    $region41: #{tpu_custom_call.1} parent=1 // pred_fallthru
      _
    // Predicated region
    $region42: #{tpu_custom_call.1} parent=1 // pred_check
      _
    $region43: #{tpu_custom_call.1} parent=1 // pred_check_branch
      %99 = sbr.rel (0) target = $region45
    $region44: #{tpu_custom_call.1} parent=1 // pred_region
      %100 = dma.done [#allocation9], 3200
    $region45: #{tpu_custom_call.1} parent=1 // pred_fallthru
      _
    // Predicated region
    $region46: #{tpu_custom_call.1} parent=1 // pred_check
      _
    $region47: #{tpu_custom_call.1} parent=1 // pred_check_branch
      %102 = sbr.rel (0) target = $region49
    $region48: #{tpu_custom_call.1} parent=1 // pred_region
      %103 = dma.done [#allocation9], 10240
    $region49: #{tpu_custom_call.1} parent=1 // pred_fallthru
      _
    // Predicated region
    $region50: #{tpu_custom_call.1} parent=1 // pred_check
      _
    $region51: #{tpu_custom_call.1} parent=1 // pred_check_branch
      %105 = sbr.rel (0) target = $region53
    $region52: #{tpu_custom_call.1} parent=1 // pred_region
      %106 = dma.done [#allocation12], 640
    $region53: #{tpu_custom_call.1} parent=1 // pred_fallthru
      _
    %v107 = vld [vmem:[#allocation2] sm:$0xf]
    %v109 = vrot.slane %v107, 4
    %110 = vrot.lane.b32.xlu0 %v109, 127
    %v111 = vpop.permute.xlu0 %110
    %113 = vrot.lane.b32.xlu0 %v107, 126
    %v114 = vpop.permute.xlu0 %113
    %116 = vrot.lane.b32.xlu0 %v109, 125
    %v117 = vpop.permute.xlu0 %116
    %119 = vrot.lane.b32.xlu0 %v107, 124
    %v120 = vpop.permute.xlu0 %119
    %vm121 = vcmask 1043456
    %v122 = vsel %vm121, %v107, %v111
    %v123 = vsel %vm121, %v114, %v117
    %v124 = vld [vmem:[#allocation5] sm:$0xff]
    %v125 = vld [vmem:[#allocation5 + $0x8] sm:$0xff]
    %v126 = vld [vmem:[#allocation5 + $0x10] sm:$0xf]
    %vm127 = vcmask 162816
    %v129 = vsel %vm127, %v124, 0
    %v132 = vsel %vm127, %v125, 0
    %v135 = vsel %vm127, %v126, 0
    %v137 = vsel %vm121, %v120, 0
    %139 = vmatprep.subr.mxu0 0.0
    %140 = vmatpush1.msra.mxu0 %v122
    %141 = vmatprep.subr.mxu0 0.0
    %142 = vmatpush1.msra.mxu0 %v123
    %143 = vmatprep.subr.mxu0 0.0
    %144 = vmatpush1.msra.mxu0 %v137
    %145 = vmatprep.subr.mxu0 0.0
    %146 = vmatpush1.msra.mxu0 0.0
    %147 = vmatprep.subr.mxu0 0.0
    %148 = vmatpush1.msra.mxu0 0.0
    %149 = vmatprep.subr.mxu0 0.0
    %150 = vmatpush1.msra.mxu0 0.0
    %151 = vmatprep.subr.mxu0 0.0
    %152 = vmatpush1.msra.mxu0 0.0
    %153 = vmatprep.subr.mxu0 0.0
    %154 = vmatpush1.msra.mxu0 0.0
    %155 = vmatprep.subr.mxu0 0.0
    %156 = vmatpush1.msra.mxu0 0.0
    %157 = vmatprep.subr.mxu0 0.0
    %158 = vmatpush1.msra.mxu0 0.0
    %159 = vmatprep.subr.mxu0 0.0
    %160 = vmatpush1.msra.mxu0 0.0
    %161 = vmatprep.subr.mxu0 0.0
    %162 = vmatpush1.msra.mxu0 0.0
    %163 = vmatprep.subr.mxu0 0.0
    %164 = vmatpush1.msra.mxu0 0.0
    %165 = vmatprep.subr.mxu0 0.0
    %166 = vmatpush1.msra.mxu0 0.0
    %167 = vmatprep.subr.mxu0 0.0
    %168 = vmatpush1.msra.mxu0 0.0
    %169 = vmatprep.subr.mxu0 0.0
    %170 = vmatpush1.msra.mxu0 0.0
    %171 = vmatprep.subr.mxu0 0.0
    %172 = vmatpush1.msra.mxu0 0.0
    %173 = vmatprep.subr.mxu0 0.0
    %174 = vmatpush1.msra.mxu0 0.0
    %175 = vmatprep.subr.mxu0 0.0
    %176 = vmatpush1.msra.mxu0 0.0
    %177 = vmatprep.subr.mxu0 0.0
    %178 = vmatpush1.msra.mxu0 0.0
    %179 = vmatprep.subr.mxu0 0.0
    %180 = vmatpush1.msra.mxu0 0.0
    %181 = vmatprep.subr.mxu0 0.0
    %182 = vmatpush1.msra.mxu0 0.0
    %183 = vmatprep.subr.mxu0 0.0
    %184 = vmatpush1.msra.mxu0 0.0
    %185 = vmatprep.subr.mxu0 0.0
    %186 = vmatpush1.msra.mxu0 0.0
    %187 = vmatprep.subr.mxu0 0.0
    %188 = vmatpush1.msra.mxu0 0.0
    %189 = vmatprep.subr.mxu0 0.0
    %190 = vmatpush1.msra.mxu0 0.0
    %191 = vmatprep.subr.mxu0 0.0
    %192 = vmatpush1.msra.mxu0 0.0
    %193 = vmatprep.subr.mxu0 0.0
    %194 = vmatpush1.msra.mxu0 0.0
    %195 = vmatprep.subr.mxu0 0.0
    %196 = vmatpush1.msra.mxu0 0.0
    %197 = vmatprep.subr.mxu0 0.0
    %198 = vmatpush1.msra.mxu0 0.0
    %199 = vmatprep.subr.mxu0 0.0
    %200 = vmatpush1.msra.mxu0 0.0
    %201 = vmatprep.subr.mxu0 0.0
    %202 = vmatpush1.msra.mxu0 0.0
    %203 = vmatprep.mubr.f32.mxu0 0.0
    %204 = vmatmul.mubr.f32.gmra.mrb[0].mxu0 %v129
    %v205 = vpop.f32.mrb[0].mxu0
    %v206 = vadd.f32 0.0, %v205
    %v207 = vpop.f32.mrb[0].mxu0
    %208 = vmatprep.mubr.f32.mxu0 0.0
    %209 = vmatmul.mubr.f32.gmra.mrb[0].mxu0 %v132
    %v210 = vpop.f32.mrb[0].mxu0
    %v211 = vadd.f32 0.0, %v210
    %v212 = vpop.f32.mrb[0].mxu0
    %213 = vmatprep.mubr.f32.mxu0 0.0
    %214 = vmatmul.mubr.f32.gmra.mrb[0].mxu0 %v135
    %v215 = vpop.f32.mrb[0].mxu0
    %v216 = vadd.f32 0.0, %v215
    %v217 = vpop.f32.mrb[0].mxu0
    %218 = vdwg.mxu0
    %vm219 = vcmask 711680
    %v220 = vsel %vm219, %v206, 0.0
    %221 = vadd.xlane.f32.xlu0 %v220
    %v222 = vpop.xlane.xlu0 %221
    %v223 = vsel %vm219, %v211, 0.0
    %224 = vadd.xlane.f32.xlu0 %v223
    %v225 = vpop.xlane.xlu0 %224
    %vm226 = vcmask 707584
    %v227 = vsel %vm226, %v216, 0.0
    %228 = vadd.xlane.f32.xlu0 %v227
    %v229 = vpop.xlane.xlu0 %228
    %vm232 = vcmask 1045504
    %v233 = vrot.slane %v225, 2
    %v234 = vrot.slane %v229, 2
    %v235 = vsel %vm232, %v233, %v234
    %v238 = vadd.f32 %v222, %v235
    %v239 = vadd.f32 %v225, %v234
    %v240 = vrcp.pop 174.0
    %v241 = vmul.f32 %v238, %v240
    %v242 = vmul.f32 %v239, %v240
    %vm245 = vcmask 1041408
    %v246 = vrot.slane %v241, 6
    %v247 = vrot.slane %v242, 6
    %v248 = vsel %vm245, %v246, %v247
    %v250 = vsel %vm245, %v242, %v246
    %251 = vset.pattern.permute.xlu0 0
    %252 = vperm.xlu0 %251, %v241
    %v253 = vpop.permute.xlu0 %252
    %256 = vset.pattern.permute.xlu0 0
    %257 = vperm.xlu0 %256, %v250
    %v258 = vpop.permute.xlu0 %257
    %260 = vset.pattern.permute.xlu0 0
    %261 = vperm.xlu0 %260, %v248
    %v262 = vpop.permute.xlu0 %261
    %v264 = vsub.f32 %v206, %v253
    %v265 = vsub.f32 %v211, %v258
    %v266 = vsub.f32 %v216, %v262
    %v267 = vmul.f32 %v264, %v264
    %v268 = vmul.f32 %v265, %v265
    %v269 = vmul.f32 %v266, %v266
    %v270 = vsel %vm219, %v267, 0.0
    %271 = vadd.xlane.f32.xlu0 %v270
    %v272 = vpop.xlane.xlu0 %271
    %v273 = vsel %vm219, %v268, 0.0
    %274 = vadd.xlane.f32.xlu0 %v273
    %v275 = vpop.xlane.xlu0 %274
    %v276 = vsel %vm226, %v269, 0.0
    %277 = vadd.xlane.f32.xlu0 %v276
    %v278 = vpop.xlane.xlu0 %277
    %v281 = vrot.slane %v275, 2
    %v282 = vrot.slane %v278, 2
    %v283 = vsel %vm232, %v281, %v282
    %v286 = vadd.f32 %v272, %v283
    %v287 = vadd.f32 %v275, %v282
    %v288 = vmul.f32 %v286, %v240
    %v289 = vmul.f32 %v287, %v240
    %v290 = vadd.f32 %v288, 1e-05
    %v291 = vadd.f32 %v289, 1e-05
    %v292 = vrsqrt.pop %v290
    %v293 = vrsqrt.pop %v291
    %v296 = vrot.slane %v292, 6
    %v297 = vrot.slane %v293, 6
    %v298 = vsel %vm245, %v296, %v297
    %v300 = vsel %vm245, %v293, %v296
    %301 = vset.pattern.permute.xlu0 0
    %302 = vperm.xlu0 %301, %v292
    %v303 = vpop.permute.xlu0 %302
    %306 = vset.pattern.permute.xlu0 0
    %307 = vperm.xlu0 %306, %v300
    %v308 = vpop.permute.xlu0 %307
    %310 = vset.pattern.permute.xlu0 0
    %311 = vperm.xlu0 %310, %v298
    %v312 = vpop.permute.xlu0 %311
    %v314 = vmul.f32 %v264, %v303
    %v315 = vmul.f32 %v265, %v308
    %v316 = vmul.f32 %v266, %v312
    %vm317 = vcmp.gt.f32.partialorder %v314, 0.0
    %vm318 = vcmp.gt.f32.partialorder %v315, 0.0
    %vm319 = vcmp.gt.f32.partialorder %v316, 0.0
    %v320 = vmul.f32 %v314, 0.01
    %v321 = vmul.f32 %v315, 0.01
    %v322 = vmul.f32 %v316, 0.01
    %v323 = vsel %vm317, %v314, %v320
    %v324 = vsel %vm318, %v315, %v321
    %v325 = vsel %vm319, %v316, %v322
    %v329 = vrot.slane %v323, 4
    %v330 = vrot.slane %v324, 4
    %v331 = vsel %vm121, %v329, %v330
    %v332 = vrot.slane %v325, 4
    %v333 = vsel %vm121, %v330, %v332
    %334 = vrot.lane.b32.xlu0 %v329, 127
    %v335 = vpop.permute.xlu0 %334
    %336 = vrot.lane.b32.xlu0 %v331, 127
    %v337 = vpop.permute.xlu0 %336
    %338 = vrot.lane.b32.xlu0 %v333, 127
    %v339 = vpop.permute.xlu0 %338
    %343 = vrot.lane.b32.xlu0 %v323, 126
    %v344 = vpop.permute.xlu0 %343
    %345 = vrot.lane.b32.xlu0 %v324, 126
    %v346 = vpop.permute.xlu0 %345
    %347 = vrot.lane.b32.xlu0 %v325, 126
    %v348 = vpop.permute.xlu0 %347
    %352 = vrot.lane.b32.xlu0 %v329, 125
    %v353 = vpop.permute.xlu0 %352
    %354 = vrot.lane.b32.xlu0 %v331, 125
    %v355 = vpop.permute.xlu0 %354
    %356 = vrot.lane.b32.xlu0 %v333, 125
    %v357 = vpop.permute.xlu0 %356
    %361 = vrot.lane.b32.xlu0 %v323, 124
    %v362 = vpop.permute.xlu0 %361
    %363 = vrot.lane.b32.xlu0 %v324, 124
    %v364 = vpop.permute.xlu0 %363
    %365 = vrot.lane.b32.xlu0 %v325, 124
    %v366 = vpop.permute.xlu0 %365
    %370 = vrot.lane.b32.xlu0 %v329, 123
    %v371 = vpop.permute.xlu0 %370
    %372 = vrot.lane.b32.xlu0 %v331, 123
    %v373 = vpop.permute.xlu0 %372
    %374 = vrot.lane.b32.xlu0 %v333, 123
    %v375 = vpop.permute.xlu0 %374
    %379 = vrot.lane.b32.xlu0 %v323, 122
    %v380 = vpop.permute.xlu0 %379
    %381 = vrot.lane.b32.xlu0 %v324, 122
    %v382 = vpop.permute.xlu0 %381
    %383 = vrot.lane.b32.xlu0 %v325, 122
    %v384 = vpop.permute.xlu0 %383
    %388 = vrot.lane.b32.xlu0 %v329, 121
    %v389 = vpop.permute.xlu0 %388
    %390 = vrot.lane.b32.xlu0 %v331, 121
    %v391 = vpop.permute.xlu0 %390
    %392 = vrot.lane.b32.xlu0 %v333, 121
    %v393 = vpop.permute.xlu0 %392
    %397 = vrot.lane.b32.xlu0 %v323, 120
    %v398 = vpop.permute.xlu0 %397
    %399 = vrot.lane.b32.xlu0 %v324, 120
    %v400 = vpop.permute.xlu0 %399
    %401 = vrot.lane.b32.xlu0 %v325, 120
    %v402 = vpop.permute.xlu0 %401
    %406 = vrot.lane.b32.xlu0 %v329, 119
    %v407 = vpop.permute.xlu0 %406
    %408 = vrot.lane.b32.xlu0 %v331, 119
    %v409 = vpop.permute.xlu0 %408
    %410 = vrot.lane.b32.xlu0 %v333, 119
    %v411 = vpop.permute.xlu0 %410
    %v415 = vsel %vm121, %v325, %v335
    %v416 = vsel %vm121, %v348, %v353
    %v417 = vsel %vm121, %v366, %v371
    %v418 = vsel %vm121, %v384, %v389
    %v419 = vsel %vm121, %v402, %v407
    %v420 = vld [vmem:[#allocation7] sm:$0xff]
    %v421 = vld [vmem:[#allocation7 + $0x8] sm:$0xff]
    %v422 = vld [vmem:[#allocation7 + $0x10] sm:$0xff]
    %v423 = vld [vmem:[#allocation7 + $0x18] sm:$0xff]
    %v424 = vld [vmem:[#allocation7 + $0x20] sm:$0xff]
    %v425 = vld [vmem:[#allocation7 + $0x28] sm:$0xff]
    %v426 = vld [vmem:[#allocation7 + $0x30] sm:$0xff]
    %v427 = vld [vmem:[#allocation7 + $0x38] sm:$0xff]
    %v428 = vld [vmem:[#allocation7 + $0x40] sm:$0xff]
    %v429 = vld [vmem:[#allocation7 + $0x48] sm:$0xff]
    %vm430 = vcmask 588800
    %v432 = vsel %vm430, %v421, 0
    %v435 = vsel %vm430, %v423, 0
    %v438 = vsel %vm430, %v425, 0
    %v441 = vsel %vm430, %v427, 0
    %v444 = vsel %vm430, %v429, 0
    %446 = vmatprep.subr.mxu0 0.0
    %447 = vmatpush1.msra.mxu0 %v323
    %448 = vmatprep.subr.mxu0 0.0
    %449 = vmatpush1.msra.mxu0 %v324
    %450 = vmatprep.subr.mxu0 0.0
    %451 = vmatpush1.msra.mxu0 %v415
    %452 = vmatprep.subr.mxu0 0.0
    %453 = vmatpush1.msra.mxu0 %v337
    %454 = vmatprep.subr.mxu0 0.0
    %455 = vmatpush1.msra.mxu0 %v339
    %456 = vmatprep.subr.mxu0 0.0
    %457 = vmatpush1.msra.mxu0 %v344
    %458 = vmatprep.subr.mxu0 0.0
    %459 = vmatpush1.msra.mxu0 %v346
    %460 = vmatprep.subr.mxu0 0.0
    %461 = vmatpush1.msra.mxu0 %v416
    %462 = vmatprep.subr.mxu0 0.0
    %463 = vmatpush1.msra.mxu0 %v355
    %464 = vmatprep.subr.mxu0 0.0
    %465 = vmatpush1.msra.mxu0 %v357
    %466 = vmatprep.subr.mxu0 0.0
    %467 = vmatpush1.msra.mxu0 %v362
    %468 = vmatprep.subr.mxu0 0.0
    %469 = vmatpush1.msra.mxu0 %v364
    %470 = vmatprep.subr.mxu0 0.0
    %471 = vmatpush1.msra.mxu0 %v417
    %472 = vmatprep.subr.mxu0 0.0
    %473 = vmatpush1.msra.mxu0 %v373
    %474 = vmatprep.subr.mxu0 0.0
    %475 = vmatpush1.msra.mxu0 %v375
    %476 = vmatprep.subr.mxu0 0.0
    %477 = vmatpush1.msra.mxu0 %v380
    %478 = vmatprep.subr.mxu0 0.0
    %479 = vmatpush1.msra.mxu0 %v382
    %480 = vmatprep.subr.mxu0 0.0
    %481 = vmatpush1.msra.mxu0 %v418
    %482 = vmatprep.subr.mxu0 0.0
    %483 = vmatpush1.msra.mxu0 %v391
    %484 = vmatprep.subr.mxu0 0.0
    %485 = vmatpush1.msra.mxu0 %v393
    %486 = vmatprep.subr.mxu0 0.0
    %487 = vmatpush1.msra.mxu0 %v398
    %488 = vmatprep.subr.mxu0 0.0
    %489 = vmatpush1.msra.mxu0 %v400
    %490 = vmatprep.subr.mxu0 0.0
    %491 = vmatpush1.msra.mxu0 %v419
    %492 = vmatprep.subr.mxu0 0.0
    %493 = vmatpush1.msra.mxu0 %v409
    %494 = vmatprep.subr.mxu0 0.0
    %495 = vmatpush1.msra.mxu0 %v411
    %496 = vmatprep.subr.mxu0 0.0
    %497 = vmatpush1.msra.mxu0 0.0
    %498 = vmatprep.subr.mxu0 0.0
    %499 = vmatpush1.msra.mxu0 0.0
    %500 = vmatprep.subr.mxu0 0.0
    %501 = vmatpush1.msra.mxu0 0.0
    %502 = vmatprep.subr.mxu0 0.0
    %503 = vmatpush1.msra.mxu0 0.0
    %504 = vmatprep.subr.mxu0 0.0
    %505 = vmatpush1.msra.mxu0 0.0
    %506 = vmatprep.subr.mxu0 0.0
    %507 = vmatpush1.msra.mxu0 0.0
    %508 = vmatprep.subr.mxu0 0.0
    %509 = vmatpush1.msra.mxu0 0.0
    %510 = vmatprep.mubr.f32.mxu0 %v432
    %511 = vmatmul.mubr.f32.gmra.mrb[0].mxu0 %v420
    %v512 = vpop.f32.mrb[0].mxu0
    %v513 = vadd.f32 0.0, %v512
    %v514 = vpop.f32.mrb[0].mxu0
    %515 = vmatprep.mubr.f32.mxu0 %v435
    %516 = vmatmul.mubr.f32.gmra.mrb[0].mxu0 %v422
    %v517 = vpop.f32.mrb[0].mxu0
    %v518 = vadd.f32 0.0, %v517
    %v519 = vpop.f32.mrb[0].mxu0
    %520 = vmatprep.mubr.f32.mxu0 %v438
    %521 = vmatmul.mubr.f32.gmra.mrb[0].mxu0 %v424
    %v522 = vpop.f32.mrb[0].mxu0
    %v523 = vadd.f32 0.0, %v522
    %v524 = vpop.f32.mrb[0].mxu0
    %525 = vmatprep.mubr.f32.mxu0 %v441
    %526 = vmatmul.mubr.f32.gmra.mrb[0].mxu0 %v426
    %v527 = vpop.f32.mrb[0].mxu0
    %v528 = vadd.f32 0.0, %v527
    %v529 = vpop.f32.mrb[0].mxu0
    %530 = vmatprep.mubr.f32.mxu0 %v444
    %531 = vmatmul.mubr.f32.gmra.mrb[0].mxu0 %v428
    %v532 = vpop.f32.mrb[0].mxu0
    %v533 = vadd.f32 0.0, %v532
    %v534 = vpop.f32.mrb[0].mxu0
    %535 = vdwg.mxu0
    %vm536 = vcmask 637952
    %v537 = vsel %vm536, %v513, 0.0
    %538 = vadd.xlane.f32.xlu0 %v537
    %v539 = vpop.xlane.xlu0 %538
    %v540 = vsel %vm536, %v518, 0.0
    %541 = vadd.xlane.f32.xlu0 %v540
    %v542 = vpop.xlane.xlu0 %541
    %v543 = vsel %vm536, %v523, 0.0
    %544 = vadd.xlane.f32.xlu0 %v543
    %v545 = vpop.xlane.xlu0 %544
    %v546 = vsel %vm536, %v528, 0.0
    %547 = vadd.xlane.f32.xlu0 %v546
    %v548 = vpop.xlane.xlu0 %547
    %v549 = vsel %vm536, %v533, 0.0
    %550 = vadd.xlane.f32.xlu0 %v549
    %v551 = vpop.xlane.xlu0 %550
    %v555 = vrot.slane %v545, 4
    %v556 = vrot.slane %v548, 4
    %v557 = vsel %vm121, %v555, %v556
    %v558 = vrot.slane %v551, 4
    %v559 = vsel %vm121, %v556, %v558
    %v563 = vadd.f32 %v539, %v557
    %v564 = vadd.f32 %v542, %v559
    %v565 = vadd.f32 %v545, %v558
    %v566 = vrcp.pop 156.0
    %v567 = vmul.f32 %v563, %v566
    %v568 = vmul.f32 %v564, %v566
    %v569 = vmul.f32 %v565, %v566
    %v573 = vrot.slane %v567, 4
    %v574 = vrot.slane %v568, 4
    %v575 = vsel %vm121, %v573, %v574
    %v576 = vrot.slane %v569, 4
    %v577 = vsel %vm121, %v574, %v576
    %v579 = vsel %vm121, %v569, %v573
    %580 = vset.pattern.permute.xlu0 0
    %581 = vperm.xlu0 %580, %v567
    %v582 = vpop.permute.xlu0 %581
    %584 = vset.pattern.permute.xlu0 0
    %585 = vperm.xlu0 %584, %v568
    %v586 = vpop.permute.xlu0 %585
    %589 = vset.pattern.permute.xlu0 0
    %590 = vperm.xlu0 %589, %v579
    %v591 = vpop.permute.xlu0 %590
    %593 = vset.pattern.permute.xlu0 0
    %594 = vperm.xlu0 %593, %v575
    %v595 = vpop.permute.xlu0 %594
    %597 = vset.pattern.permute.xlu0 0
    %598 = vperm.xlu0 %597, %v577
    %v599 = vpop.permute.xlu0 %598
    %v601 = vsub.f32 %v513, %v582
    %v602 = vsub.f32 %v518, %v586
    %v603 = vsub.f32 %v523, %v591
    %v604 = vsub.f32 %v528, %v595
    %v605 = vsub.f32 %v533, %v599
    %v606 = vmul.f32 %v601, %v601
    %v607 = vmul.f32 %v602, %v602
    %v608 = vmul.f32 %v603, %v603
    %v609 = vmul.f32 %v604, %v604
    %v610 = vmul.f32 %v605, %v605
    %v611 = vsel %vm536, %v606, 0.0
    %612 = vadd.xlane.f32.xlu0 %v611
    %v613 = vpop.xlane.xlu0 %612
    %v614 = vsel %vm536, %v607, 0.0
    %615 = vadd.xlane.f32.xlu0 %v614
    %v616 = vpop.xlane.xlu0 %615
    %v617 = vsel %vm536, %v608, 0.0
    %618 = vadd.xlane.f32.xlu0 %v617
    %v619 = vpop.xlane.xlu0 %618
    %v620 = vsel %vm536, %v609, 0.0
    %621 = vadd.xlane.f32.xlu0 %v620
    %v622 = vpop.xlane.xlu0 %621
    %v623 = vsel %vm536, %v610, 0.0
    %624 = vadd.xlane.f32.xlu0 %v623
    %v625 = vpop.xlane.xlu0 %624
    %v629 = vrot.slane %v619, 4
    %v630 = vrot.slane %v622, 4
    %v631 = vsel %vm121, %v629, %v630
    %v632 = vrot.slane %v625, 4
    %v633 = vsel %vm121, %v630, %v632
    %v637 = vadd.f32 %v613, %v631
    %v638 = vadd.f32 %v616, %v633
    %v639 = vadd.f32 %v619, %v632
    %v640 = vmul.f32 %v637, %v566
    %v641 = vmul.f32 %v638, %v566
    %v642 = vmul.f32 %v639, %v566
    %v643 = vadd.f32 %v640, 1e-05
    %v644 = vadd.f32 %v641, 1e-05
    %v645 = vadd.f32 %v642, 1e-05
    %v646 = vrsqrt.pop %v643
    %v647 = vrsqrt.pop %v644
    %v648 = vrsqrt.pop %v645
    %v652 = vrot.slane %v646, 4
    %v653 = vrot.slane %v647, 4
    %v654 = vsel %vm121, %v652, %v653
    %v655 = vrot.slane %v648, 4
    %v656 = vsel %vm121, %v653, %v655
    %v658 = vsel %vm121, %v648, %v652
    %659 = vset.pattern.permute.xlu0 0
    %660 = vperm.xlu0 %659, %v646
    %v661 = vpop.permute.xlu0 %660
    %663 = vset.pattern.permute.xlu0 0
    %664 = vperm.xlu0 %663, %v647
    %v665 = vpop.permute.xlu0 %664
    %668 = vset.pattern.permute.xlu0 0
    %669 = vperm.xlu0 %668, %v658
    %v670 = vpop.permute.xlu0 %669
    %672 = vset.pattern.permute.xlu0 0
    %673 = vperm.xlu0 %672, %v654
    %v674 = vpop.permute.xlu0 %673
    %676 = vset.pattern.permute.xlu0 0
    %677 = vperm.xlu0 %676, %v656
    %v678 = vpop.permute.xlu0 %677
    %v680 = vmul.f32 %v601, %v661
    %v681 = vmul.f32 %v602, %v665
    %v682 = vmul.f32 %v603, %v670
    %v683 = vmul.f32 %v604, %v674
    %v684 = vmul.f32 %v605, %v678
    %vm685 = vcmp.gt.f32.partialorder %v680, 0.0
    %vm686 = vcmp.gt.f32.partialorder %v681, 0.0
    %vm687 = vcmp.gt.f32.partialorder %v682, 0.0
    %vm688 = vcmp.gt.f32.partialorder %v683, 0.0
    %vm689 = vcmp.gt.f32.partialorder %v684, 0.0
    %v690 = vmul.f32 %v680, 0.01
    %v691 = vmul.f32 %v681, 0.01
    %v692 = vmul.f32 %v682, 0.01
    %v693 = vmul.f32 %v683, 0.01
    %v694 = vmul.f32 %v684, 0.01
    %v695 = vsel %vm685, %v680, %v690
    %v696 = vsel %vm686, %v681, %v691
    %v697 = vsel %vm687, %v682, %v692
    %v698 = vsel %vm688, %v683, %v693
    %v699 = vsel %vm689, %v684, %v694
    %705 = vrot.lane.b32.xlu0 %v695, 127
    %v706 = vpop.permute.xlu0 %705
    %707 = vrot.lane.b32.xlu0 %v696, 127
    %v708 = vpop.permute.xlu0 %707
    %709 = vrot.lane.b32.xlu0 %v697, 127
    %v710 = vpop.permute.xlu0 %709
    %711 = vrot.lane.b32.xlu0 %v698, 127
    %v712 = vpop.permute.xlu0 %711
    %713 = vrot.lane.b32.xlu0 %v699, 127
    %v714 = vpop.permute.xlu0 %713
    %720 = vrot.lane.b32.xlu0 %v695, 126
    %v721 = vpop.permute.xlu0 %720
    %722 = vrot.lane.b32.xlu0 %v696, 126
    %v723 = vpop.permute.xlu0 %722
    %724 = vrot.lane.b32.xlu0 %v697, 126
    %v725 = vpop.permute.xlu0 %724
    %726 = vrot.lane.b32.xlu0 %v698, 126
    %v727 = vpop.permute.xlu0 %726
    %728 = vrot.lane.b32.xlu0 %v699, 126
    %v729 = vpop.permute.xlu0 %728
    %735 = vrot.lane.b32.xlu0 %v695, 125
    %v736 = vpop.permute.xlu0 %735
    %737 = vrot.lane.b32.xlu0 %v696, 125
    %v738 = vpop.permute.xlu0 %737
    %739 = vrot.lane.b32.xlu0 %v697, 125
    %v740 = vpop.permute.xlu0 %739
    %741 = vrot.lane.b32.xlu0 %v698, 125
    %v742 = vpop.permute.xlu0 %741
    %743 = vrot.lane.b32.xlu0 %v699, 125
    %v744 = vpop.permute.xlu0 %743
    %750 = vrot.lane.b32.xlu0 %v695, 124
    %v751 = vpop.permute.xlu0 %750
    %752 = vrot.lane.b32.xlu0 %v696, 124
    %v753 = vpop.permute.xlu0 %752
    %754 = vrot.lane.b32.xlu0 %v697, 124
    %v755 = vpop.permute.xlu0 %754
    %756 = vrot.lane.b32.xlu0 %v698, 124
    %v757 = vpop.permute.xlu0 %756
    %758 = vrot.lane.b32.xlu0 %v699, 124
    %v759 = vpop.permute.xlu0 %758
    %765 = vrot.lane.b32.xlu0 %v695, 123
    %v766 = vpop.permute.xlu0 %765
    %767 = vrot.lane.b32.xlu0 %v696, 123
    %v768 = vpop.permute.xlu0 %767
    %769 = vrot.lane.b32.xlu0 %v697, 123
    %v770 = vpop.permute.xlu0 %769
    %771 = vrot.lane.b32.xlu0 %v698, 123
    %v772 = vpop.permute.xlu0 %771
    %773 = vrot.lane.b32.xlu0 %v699, 123
    %v774 = vpop.permute.xlu0 %773
    %780 = vrot.lane.b32.xlu0 %v695, 122
    %v781 = vpop.permute.xlu0 %780
    %782 = vrot.lane.b32.xlu0 %v696, 122
    %v783 = vpop.permute.xlu0 %782
    %784 = vrot.lane.b32.xlu0 %v697, 122
    %v785 = vpop.permute.xlu0 %784
    %786 = vrot.lane.b32.xlu0 %v698, 122
    %v787 = vpop.permute.xlu0 %786
    %788 = vrot.lane.b32.xlu0 %v699, 122
    %v789 = vpop.permute.xlu0 %788
    %795 = vrot.lane.b32.xlu0 %v695, 121
    %v796 = vpop.permute.xlu0 %795
    %797 = vrot.lane.b32.xlu0 %v696, 121
    %v798 = vpop.permute.xlu0 %797
    %799 = vrot.lane.b32.xlu0 %v697, 121
    %v800 = vpop.permute.xlu0 %799
    %801 = vrot.lane.b32.xlu0 %v698, 121
    %v802 = vpop.permute.xlu0 %801
    %803 = vrot.lane.b32.xlu0 %v699, 121
    %v804 = vpop.permute.xlu0 %803
    %810 = vrot.lane.b32.xlu0 %v695, 120
    %v811 = vpop.permute.xlu0 %810
    %812 = vrot.lane.b32.xlu0 %v696, 120
    %v813 = vpop.permute.xlu0 %812
    %814 = vrot.lane.b32.xlu0 %v697, 120
    %v815 = vpop.permute.xlu0 %814
    %816 = vrot.lane.b32.xlu0 %v698, 120
    %v817 = vpop.permute.xlu0 %816
    %818 = vrot.lane.b32.xlu0 %v699, 120
    %v819 = vpop.permute.xlu0 %818
    %825 = vrot.lane.b32.xlu0 %v695, 119
    %v826 = vpop.permute.xlu0 %825
    %827 = vrot.lane.b32.xlu0 %v696, 119
    %v828 = vpop.permute.xlu0 %827
    %829 = vrot.lane.b32.xlu0 %v697, 119
    %v830 = vpop.permute.xlu0 %829
    %831 = vrot.lane.b32.xlu0 %v698, 119
    %v832 = vpop.permute.xlu0 %831
    %833 = vrot.lane.b32.xlu0 %v699, 119
    %v834 = vpop.permute.xlu0 %833
    %840 = vrot.lane.b32.xlu0 %v695, 118
    %v841 = vpop.permute.xlu0 %840
    %842 = vrot.lane.b32.xlu0 %v696, 118
    %v843 = vpop.permute.xlu0 %842
    %844 = vrot.lane.b32.xlu0 %v697, 118
    %v845 = vpop.permute.xlu0 %844
    %846 = vrot.lane.b32.xlu0 %v698, 118
    %v847 = vpop.permute.xlu0 %846
    %848 = vrot.lane.b32.xlu0 %v699, 118
    %v849 = vpop.permute.xlu0 %848
    %855 = vrot.lane.b32.xlu0 %v695, 117
    %v856 = vpop.permute.xlu0 %855
    %857 = vrot.lane.b32.xlu0 %v696, 117
    %v858 = vpop.permute.xlu0 %857
    %859 = vrot.lane.b32.xlu0 %v697, 117
    %v860 = vpop.permute.xlu0 %859
    %861 = vrot.lane.b32.xlu0 %v698, 117
    %v862 = vpop.permute.xlu0 %861
    %863 = vrot.lane.b32.xlu0 %v699, 117
    %v864 = vpop.permute.xlu0 %863
    %870 = vrot.lane.b32.xlu0 %v695, 116
    %v871 = vpop.permute.xlu0 %870
    %872 = vrot.lane.b32.xlu0 %v696, 116
    %v873 = vpop.permute.xlu0 %872
    %874 = vrot.lane.b32.xlu0 %v697, 116
    %v875 = vpop.permute.xlu0 %874
    %876 = vrot.lane.b32.xlu0 %v698, 116
    %v877 = vpop.permute.xlu0 %876
    %878 = vrot.lane.b32.xlu0 %v699, 116
    %v879 = vpop.permute.xlu0 %878
    %885 = vrot.lane.b32.xlu0 %v695, 115
    %v886 = vpop.permute.xlu0 %885
    %887 = vrot.lane.b32.xlu0 %v696, 115
    %v888 = vpop.permute.xlu0 %887
    %889 = vrot.lane.b32.xlu0 %v697, 115
    %v890 = vpop.permute.xlu0 %889
    %891 = vrot.lane.b32.xlu0 %v698, 115
    %v892 = vpop.permute.xlu0 %891
    %893 = vrot.lane.b32.xlu0 %v699, 115
    %v894 = vpop.permute.xlu0 %893
    %900 = vrot.lane.b32.xlu0 %v695, 114
    %v901 = vpop.permute.xlu0 %900
    %902 = vrot.lane.b32.xlu0 %v696, 114
    %v903 = vpop.permute.xlu0 %902
    %904 = vrot.lane.b32.xlu0 %v697, 114
    %v905 = vpop.permute.xlu0 %904
    %906 = vrot.lane.b32.xlu0 %v698, 114
    %v907 = vpop.permute.xlu0 %906
    %908 = vrot.lane.b32.xlu0 %v699, 114
    %v909 = vpop.permute.xlu0 %908
    %v915 = vld [vmem:[#allocation8] sm:$0xff]
    %v916 = vld [vmem:[#allocation8 + $0x8] sm:$0xff]
    %v917 = vld [vmem:[#allocation8 + $0x10] sm:$0xff]
    %v918 = vld [vmem:[#allocation8 + $0x18] sm:$0xff]
    %v919 = vld [vmem:[#allocation8 + $0x20] sm:$0xff]
    %v920 = vld [vmem:[#allocation8 + $0x28] sm:$0xff]
    %v921 = vld [vmem:[#allocation8 + $0x30] sm:$0xff]
    %v922 = vld [vmem:[#allocation8 + $0x38] sm:$0xff]
    %v923 = vld [vmem:[#allocation8 + $0x40] sm:$0xff]
    %v924 = vld [vmem:[#allocation8 + $0x48] sm:$0xff]
    %v925 = vld [vmem:[#allocation8 + $0x50] sm:$0xff]
    %v926 = vld [vmem:[#allocation8 + $0x58] sm:$0xff]
    %v927 = vld [vmem:[#allocation8 + $0x60] sm:$0xff]
    %v928 = vld [vmem:[#allocation8 + $0x68] sm:$0xff]
    %v929 = vld [vmem:[#allocation8 + $0x70] sm:$0xff]
    %v930 = vld [vmem:[#allocation8 + $0x78] sm:$0xff]
    %v931 = vld [vmem:[#allocation8 + $0x80] sm:$0xff]
    %v932 = vld [vmem:[#allocation8 + $0x88] sm:$0xff]
    %v933 = vld [vmem:[#allocation8 + $0x90] sm:$0xff]
    %v934 = vld [vmem:[#allocation8 + $0x98] sm:$0xff]
    %v935 = vld [vmem:[#allocation8 + $0xa0] sm:$0xff]
    %v936 = vld [vmem:[#allocation8 + $0xa8] sm:$0xff]
    %v937 = vld [vmem:[#allocation8 + $0xb0] sm:$0xff]
    %v938 = vld [vmem:[#allocation8 + $0xb8] sm:$0xff]
    %v939 = vld [vmem:[#allocation8 + $0xc0] sm:$0xff]
    %vm940 = vcmask 719872
    %v942 = vsel %vm940, %v919, 0
    %v945 = vsel %vm940, %v924, 0
    %v948 = vsel %vm940, %v929, 0
    %v951 = vsel %vm940, %v934, 0
    %v954 = vsel %vm940, %v939, 0
    %956 = vmatprep.subr.mxu0 0.0
    %957 = vmatpush1.msra.mxu0 %v695
    %958 = vmatprep.subr.mxu0 0.0
    %959 = vmatpush1.msra.mxu0 %v696
    %960 = vmatprep.subr.mxu0 0.0
    %961 = vmatpush1.msra.mxu0 %v697
    %962 = vmatprep.subr.mxu0 0.0
    %963 = vmatpush1.msra.mxu0 %v698
    %964 = vmatprep.subr.mxu0 0.0
    %965 = vmatpush1.msra.mxu0 %v699
    %966 = vmatprep.subr.mxu0 0.0
    %967 = vmatpush1.msra.mxu0 %v706
    %968 = vmatprep.subr.mxu0 0.0
    %969 = vmatpush1.msra.mxu0 %v708
    %970 = vmatprep.subr.mxu0 0.0
    %971 = vmatpush1.msra.mxu0 %v710
    %972 = vmatprep.subr.mxu0 0.0
    %973 = vmatpush1.msra.mxu0 %v712
    %974 = vmatprep.subr.mxu0 0.0
    %975 = vmatpush1.msra.mxu0 %v714
    %976 = vmatprep.subr.mxu0 0.0
    %977 = vmatpush1.msra.mxu0 %v721
    %978 = vmatprep.subr.mxu0 0.0
    %979 = vmatpush1.msra.mxu0 %v723
    %980 = vmatprep.subr.mxu0 0.0
    %981 = vmatpush1.msra.mxu0 %v725
    %982 = vmatprep.subr.mxu0 0.0
    %983 = vmatpush1.msra.mxu0 %v727
    %984 = vmatprep.subr.mxu0 0.0
    %985 = vmatpush1.msra.mxu0 %v729
    %986 = vmatprep.subr.mxu0 0.0
    %987 = vmatpush1.msra.mxu0 %v736
    %988 = vmatprep.subr.mxu0 0.0
    %989 = vmatpush1.msra.mxu0 %v738
    %990 = vmatprep.subr.mxu0 0.0
    %991 = vmatpush1.msra.mxu0 %v740
    %992 = vmatprep.subr.mxu0 0.0
    %993 = vmatpush1.msra.mxu0 %v742
    %994 = vmatprep.subr.mxu0 0.0
    %995 = vmatpush1.msra.mxu0 %v744
    %996 = vmatprep.subr.mxu0 0.0
    %997 = vmatpush1.msra.mxu0 %v751
    %998 = vmatprep.subr.mxu0 0.0
    %999 = vmatpush1.msra.mxu0 %v753
    %1000 = vmatprep.subr.mxu0 0.0
    %1001 = vmatpush1.msra.mxu0 %v755
    %1002 = vmatprep.subr.mxu0 0.0
    %1003 = vmatpush1.msra.mxu0 %v757
    %1004 = vmatprep.subr.mxu0 0.0
    %1005 = vmatpush1.msra.mxu0 %v759
    %1006 = vmatprep.subr.mxu0 0.0
    %1007 = vmatpush1.msra.mxu0 %v766
    %1008 = vmatprep.subr.mxu0 0.0
    %1009 = vmatpush1.msra.mxu0 %v768
    %1010 = vmatprep.subr.mxu0 0.0
    %1011 = vmatpush1.msra.mxu0 %v770
    %1012 = vmatprep.subr.mxu0 0.0
    %1013 = vmatpush1.msra.mxu0 %v772
    %1014 = vmatprep.subr.mxu0 0.0
    %1015 = vmatpush1.msra.mxu0 %v774
    %1016 = vmatprep.subr.mxu0 0.0
    %1017 = vmatpush1.msra.mxu0 %v781
    %1018 = vmatprep.subr.mxu0 0.0
    %1019 = vmatpush1.msra.mxu0 %v783
    %1020 = vmatprep.mubr.f32.mxu0 %v916
    %1021 = vmatmul.mubr.f32.gmra.mrb[0].mxu0 %v915
    %v1022 = vpop.f32.mrb[0].mxu0
    %v1023 = vadd.f32 0.0, %v1022
    %v1024 = vpop.f32.mrb[0].mxu0
    %1025 = vmatprep.mubr.f32.mxu0 %v921
    %1026 = vmatmul.mubr.f32.gmra.mrb[0].mxu0 %v920
    %v1027 = vpop.f32.mrb[0].mxu0
    %v1028 = vadd.f32 0.0, %v1027
    %v1029 = vpop.f32.mrb[0].mxu0
    %1030 = vmatprep.mubr.f32.mxu0 %v926
    %1031 = vmatmul.mubr.f32.gmra.mrb[0].mxu0 %v925
    %v1032 = vpop.f32.mrb[0].mxu0
    %v1033 = vadd.f32 0.0, %v1032
    %v1034 = vpop.f32.mrb[0].mxu0
    %1035 = vmatprep.mubr.f32.mxu0 %v931
    %1036 = vmatmul.mubr.f32.gmra.mrb[0].mxu0 %v930
    %v1037 = vpop.f32.mrb[0].mxu0
    %v1038 = vadd.f32 0.0, %v1037
    %v1039 = vpop.f32.mrb[0].mxu0
    %1040 = vmatprep.mubr.f32.mxu0 %v936
    %1041 = vmatmul.mubr.f32.gmra.mrb[0].mxu0 %v935
    %v1042 = vpop.f32.mrb[0].mxu0
    %v1043 = vadd.f32 0.0, %v1042
    %v1044 = vpop.f32.mrb[0].mxu0
    %1045 = vdwg.mxu0
    %1046 = vmatprep.subr.mxu0 0.0
    %1047 = vmatpush1.msra.mxu0 %v785
    %1048 = vmatprep.subr.mxu0 0.0
    %1049 = vmatpush1.msra.mxu0 %v787
    %1050 = vmatprep.subr.mxu0 0.0
    %1051 = vmatpush1.msra.mxu0 %v789
    %1052 = vmatprep.subr.mxu0 0.0
    %1053 = vmatpush1.msra.mxu0 %v796
    %1054 = vmatprep.subr.mxu0 0.0
    %1055 = vmatpush1.msra.mxu0 %v798
    %1056 = vmatprep.subr.mxu0 0.0
    %1057 = vmatpush1.msra.mxu0 %v800
    %1058 = vmatprep.subr.mxu0 0.0
    %1059 = vmatpush1.msra.mxu0 %v802
    %1060 = vmatprep.subr.mxu0 0.0
    %1061 = vmatpush1.msra.mxu0 %v804
    %1062 = vmatprep.subr.mxu0 0.0
    %1063 = vmatpush1.msra.mxu0 %v811
    %1064 = vmatprep.subr.mxu0 0.0
    %1065 = vmatpush1.msra.mxu0 %v813
    %1066 = vmatprep.subr.mxu0 0.0
    %1067 = vmatpush1.msra.mxu0 %v815
    %1068 = vmatprep.subr.mxu0 0.0
    %1069 = vmatpush1.msra.mxu0 %v817
    %1070 = vmatprep.subr.mxu0 0.0
    %1071 = vmatpush1.msra.mxu0 %v819
    %1072 = vmatprep.subr.mxu0 0.0
    %1073 = vmatpush1.msra.mxu0 %v826
    %1074 = vmatprep.subr.mxu0 0.0
    %1075 = vmatpush1.msra.mxu0 %v828
    %1076 = vmatprep.subr.mxu0 0.0
    %1077 = vmatpush1.msra.mxu0 %v830
    %1078 = vmatprep.subr.mxu0 0.0
    %1079 = vmatpush1.msra.mxu0 %v832
    %1080 = vmatprep.subr.mxu0 0.0
    %1081 = vmatpush1.msra.mxu0 %v834
    %1082 = vmatprep.subr.mxu0 0.0
    %1083 = vmatpush1.msra.mxu0 %v841
    %1084 = vmatprep.subr.mxu0 0.0
    %1085 = vmatpush1.msra.mxu0 %v843
    %1086 = vmatprep.subr.mxu0 0.0
    %1087 = vmatpush1.msra.mxu0 %v845
    %1088 = vmatprep.subr.mxu0 0.0
    %1089 = vmatpush1.msra.mxu0 %v847
    %1090 = vmatprep.subr.mxu0 0.0
    %1091 = vmatpush1.msra.mxu0 %v849
    %1092 = vmatprep.subr.mxu0 0.0
    %1093 = vmatpush1.msra.mxu0 %v856
    %1094 = vmatprep.subr.mxu0 0.0
    %1095 = vmatpush1.msra.mxu0 %v858
    %1096 = vmatprep.subr.mxu0 0.0
    %1097 = vmatpush1.msra.mxu0 %v860
    %1098 = vmatprep.subr.mxu0 0.0
    %1099 = vmatpush1.msra.mxu0 %v862
    %1100 = vmatprep.subr.mxu0 0.0
    %1101 = vmatpush1.msra.mxu0 %v864
    %1102 = vmatprep.subr.mxu0 0.0
    %1103 = vmatpush1.msra.mxu0 %v871
    %1104 = vmatprep.subr.mxu0 0.0
    %1105 = vmatpush1.msra.mxu0 %v873
    %1106 = vmatprep.subr.mxu0 0.0
    %1107 = vmatpush1.msra.mxu0 %v875
    %1108 = vmatprep.subr.mxu0 0.0
    %1109 = vmatpush1.msra.mxu0 %v877
    %1110 = vmatprep.mubr.f32.mxu0 %v918
    %1111 = vmatmul.mubr.f32.gmra.mrb[0].mxu0 %v917
    %v1112 = vpop.f32.mrb[0].mxu0
    %v1113 = vadd.f32 %v1023, %v1112
    %v1114 = vpop.f32.mrb[0].mxu0
    %1115 = vmatprep.mubr.f32.mxu0 %v923
    %1116 = vmatmul.mubr.f32.gmra.mrb[0].mxu0 %v922
    %v1117 = vpop.f32.mrb[0].mxu0
    %v1118 = vadd.f32 %v1028, %v1117
    %v1119 = vpop.f32.mrb[0].mxu0
    %1120 = vmatprep.mubr.f32.mxu0 %v928
    %1121 = vmatmul.mubr.f32.gmra.mrb[0].mxu0 %v927
    %v1122 = vpop.f32.mrb[0].mxu0
    %v1123 = vadd.f32 %v1033, %v1122
    %v1124 = vpop.f32.mrb[0].mxu0
    %1125 = vmatprep.mubr.f32.mxu0 %v933
    %1126 = vmatmul.mubr.f32.gmra.mrb[0].mxu0 %v932
    %v1127 = vpop.f32.mrb[0].mxu0
    %v1128 = vadd.f32 %v1038, %v1127
    %v1129 = vpop.f32.mrb[0].mxu0
    %1130 = vmatprep.mubr.f32.mxu0 %v938
    %1131 = vmatmul.mubr.f32.gmra.mrb[0].mxu0 %v937
    %v1132 = vpop.f32.mrb[0].mxu0
    %v1133 = vadd.f32 %v1043, %v1132
    %v1134 = vpop.f32.mrb[0].mxu0
    %1135 = vdwg.mxu0
    %1136 = vmatprep.subr.mxu0 0.0
    %1137 = vmatpush1.msra.mxu0 %v879
    %1138 = vmatprep.subr.mxu0 0.0
    %1139 = vmatpush1.msra.mxu0 %v886
    %1140 = vmatprep.subr.mxu0 0.0
    %1141 = vmatpush1.msra.mxu0 %v888
    %1142 = vmatprep.subr.mxu0 0.0
    %1143 = vmatpush1.msra.mxu0 %v890
    %1144 = vmatprep.subr.mxu0 0.0
    %1145 = vmatpush1.msra.mxu0 %v892
    %1146 = vmatprep.subr.mxu0 0.0
    %1147 = vmatpush1.msra.mxu0 %v894
    %1148 = vmatprep.subr.mxu0 0.0
    %1149 = vmatpush1.msra.mxu0 %v901
    %1150 = vmatprep.subr.mxu0 0.0
    %1151 = vmatpush1.msra.mxu0 %v903
    %1152 = vmatprep.subr.mxu0 0.0
    %1153 = vmatpush1.msra.mxu0 %v905
    %1154 = vmatprep.subr.mxu0 0.0
    %1155 = vmatpush1.msra.mxu0 %v907
    %1156 = vmatprep.subr.mxu0 0.0
    %1157 = vmatpush1.msra.mxu0 %v909
    %1158 = vmatprep.subr.mxu0 0.0
    %1159 = vmatpush1.msra.mxu0 0.0
    %1160 = vmatprep.subr.mxu0 0.0
    %1161 = vmatpush1.msra.mxu0 0.0
    %1162 = vmatprep.subr.mxu0 0.0
    %1163 = vmatpush1.msra.mxu0 0.0
    %1164 = vmatprep.subr.mxu0 0.0
    %1165 = vmatpush1.msra.mxu0 0.0
    %1166 = vmatprep.subr.mxu0 0.0
    %1167 = vmatpush1.msra.mxu0 0.0
    %1168 = vmatprep.subr.mxu0 0.0
    %1169 = vmatpush1.msra.mxu0 0.0
    %1170 = vmatprep.subr.mxu0 0.0
    %1171 = vmatpush1.msra.mxu0 0.0
    %1172 = vmatprep.subr.mxu0 0.0
    %1173 = vmatpush1.msra.mxu0 0.0
    %1174 = vmatprep.subr.mxu0 0.0
    %1175 = vmatpush1.msra.mxu0 0.0
    %1176 = vmatprep.subr.mxu0 0.0
    %1177 = vmatpush1.msra.mxu0 0.0
    %1178 = vmatprep.subr.mxu0 0.0
    %1179 = vmatpush1.msra.mxu0 0.0
    %1180 = vmatprep.subr.mxu0 0.0
    %1181 = vmatpush1.msra.mxu0 0.0
    %1182 = vmatprep.subr.mxu0 0.0
    %1183 = vmatpush1.msra.mxu0 0.0
    %1184 = vmatprep.subr.mxu0 0.0
    %1185 = vmatpush1.msra.mxu0 0.0
    %1186 = vmatprep.subr.mxu0 0.0
    %1187 = vmatpush1.msra.mxu0 0.0
    %1188 = vmatprep.subr.mxu0 0.0
    %1189 = vmatpush1.msra.mxu0 0.0
    %1190 = vmatprep.subr.mxu0 0.0
    %1191 = vmatpush1.msra.mxu0 0.0
    %1192 = vmatprep.subr.mxu0 0.0
    %1193 = vmatpush1.msra.mxu0 0.0
    %1194 = vmatprep.subr.mxu0 0.0
    %1195 = vmatpush1.msra.mxu0 0.0
    %1196 = vmatprep.subr.mxu0 0.0
    %1197 = vmatpush1.msra.mxu0 0.0
    %1198 = vmatprep.subr.mxu0 0.0
    %1199 = vmatpush1.msra.mxu0 0.0
    %1200 = vmatprep.mubr.f32.mxu0 0.0
    %1201 = vmatmul.mubr.f32.gmra.mrb[0].mxu0 %v942
    %v1202 = vpop.f32.mrb[0].mxu0
    %v1203 = vadd.f32 %v1113, %v1202
    %v1204 = vpop.f32.mrb[0].mxu0
    %1205 = vmatprep.mubr.f32.mxu0 0.0
    %1206 = vmatmul.mubr.f32.gmra.mrb[0].mxu0 %v945
    %v1207 = vpop.f32.mrb[0].mxu0
    %v1208 = vadd.f32 %v1118, %v1207
    %v1209 = vpop.f32.mrb[0].mxu0
    %1210 = vmatprep.mubr.f32.mxu0 0.0
    %1211 = vmatmul.mubr.f32.gmra.mrb[0].mxu0 %v948
    %v1212 = vpop.f32.mrb[0].mxu0
    %v1213 = vadd.f32 %v1123, %v1212
    %v1214 = vpop.f32.mrb[0].mxu0
    %1215 = vmatprep.mubr.f32.mxu0 0.0
    %1216 = vmatmul.mubr.f32.gmra.mrb[0].mxu0 %v951
    %v1217 = vpop.f32.mrb[0].mxu0
    %v1218 = vadd.f32 %v1128, %v1217
    %v1219 = vpop.f32.mrb[0].mxu0
    %1220 = vmatprep.mubr.f32.mxu0 0.0
    %1221 = vmatmul.mubr.f32.gmra.mrb[0].mxu0 %v954
    %v1222 = vpop.f32.mrb[0].mxu0
    %v1223 = vadd.f32 %v1133, %v1222
    %v1224 = vpop.f32.mrb[0].mxu0
    %1225 = vdwg.mxu0
    %vm1226 = vcmask 523264
    %v1227 = vsel %vm1226, %v1203, 0.0
    %1228 = vadd.xlane.f32.xlu0 %v1227
    %v1229 = vpop.xlane.xlu0 %1228
    %v1230 = vsel %vm1226, %v1208, 0.0
    %1231 = vadd.xlane.f32.xlu0 %v1230
    %v1232 = vpop.xlane.xlu0 %1231
    %v1233 = vsel %vm1226, %v1213, 0.0
    %1234 = vadd.xlane.f32.xlu0 %v1233
    %v1235 = vpop.xlane.xlu0 %1234
    %v1236 = vsel %vm1226, %v1218, 0.0
    %1237 = vadd.xlane.f32.xlu0 %v1236
    %v1238 = vpop.xlane.xlu0 %1237
    %v1239 = vsel %vm1226, %v1223, 0.0
    %1240 = vadd.xlane.f32.xlu0 %v1239
    %v1241 = vpop.xlane.xlu0 %1240
    %v1245 = vrot.slane %v1235, 4
    %v1246 = vrot.slane %v1238, 4
    %v1247 = vsel %vm121, %v1245, %v1246
    %v1248 = vrot.slane %v1241, 4
    %v1249 = vsel %vm121, %v1246, %v1248
    %v1253 = vadd.f32 %v1229, %v1247
    %v1254 = vadd.f32 %v1232, %v1249
    %v1255 = vadd.f32 %v1235, %v1248
    %v1256 = vrcp.pop 128.0
    %v1257 = vmul.f32 %v1253, %v1256
    %v1258 = vmul.f32 %v1254, %v1256
    %v1259 = vmul.f32 %v1255, %v1256
    %v1263 = vrot.slane %v1257, 4
    %v1264 = vrot.slane %v1258, 4
    %v1265 = vsel %vm121, %v1263, %v1264
    %v1266 = vrot.slane %v1259, 4
    %v1267 = vsel %vm121, %v1264, %v1266
    %v1269 = vsel %vm121, %v1259, %v1263
    %1270 = vset.pattern.permute.xlu0 0
    %1271 = vperm.xlu0 %1270, %v1257
    %v1272 = vpop.permute.xlu0 %1271
    %1274 = vset.pattern.permute.xlu0 0
    %1275 = vperm.xlu0 %1274, %v1258
    %v1276 = vpop.permute.xlu0 %1275
    %1279 = vset.pattern.permute.xlu0 0
    %1280 = vperm.xlu0 %1279, %v1269
    %v1281 = vpop.permute.xlu0 %1280
    %1283 = vset.pattern.permute.xlu0 0
    %1284 = vperm.xlu0 %1283, %v1265
    %v1285 = vpop.permute.xlu0 %1284
    %1287 = vset.pattern.permute.xlu0 0
    %1288 = vperm.xlu0 %1287, %v1267
    %v1289 = vpop.permute.xlu0 %1288
    %v1291 = vsub.f32 %v1203, %v1272
    %v1292 = vsub.f32 %v1208, %v1276
    %v1293 = vsub.f32 %v1213, %v1281
    %v1294 = vsub.f32 %v1218, %v1285
    %v1295 = vsub.f32 %v1223, %v1289
    %v1296 = vmul.f32 %v1291, %v1291
    %v1297 = vmul.f32 %v1292, %v1292
    %v1298 = vmul.f32 %v1293, %v1293
    %v1299 = vmul.f32 %v1294, %v1294
    %v1300 = vmul.f32 %v1295, %v1295
    %v1301 = vsel %vm1226, %v1296, 0.0
    %1302 = vadd.xlane.f32.xlu0 %v1301
    %v1303 = vpop.xlane.xlu0 %1302
    %v1304 = vsel %vm1226, %v1297, 0.0
    %1305 = vadd.xlane.f32.xlu0 %v1304
    %v1306 = vpop.xlane.xlu0 %1305
    %v1307 = vsel %vm1226, %v1298, 0.0
    %1308 = vadd.xlane.f32.xlu0 %v1307
    %v1309 = vpop.xlane.xlu0 %1308
    %v1310 = vsel %vm1226, %v1299, 0.0
    %1311 = vadd.xlane.f32.xlu0 %v1310
    %v1312 = vpop.xlane.xlu0 %1311
    %v1313 = vsel %vm1226, %v1300, 0.0
    %1314 = vadd.xlane.f32.xlu0 %v1313
    %v1315 = vpop.xlane.xlu0 %1314
    %v1319 = vrot.slane %v1309, 4
    %v1320 = vrot.slane %v1312, 4
    %v1321 = vsel %vm121, %v1319, %v1320
    %v1322 = vrot.slane %v1315, 4
    %v1323 = vsel %vm121, %v1320, %v1322
    %v1327 = vadd.f32 %v1303, %v1321
    %v1328 = vadd.f32 %v1306, %v1323
    %v1329 = vadd.f32 %v1309, %v1322
    %v1330 = vmul.f32 %v1327, %v1256
    %v1331 = vmul.f32 %v1328, %v1256
    %v1332 = vmul.f32 %v1329, %v1256
    %v1333 = vadd.f32 %v1330, 1e-05
    %v1334 = vadd.f32 %v1331, 1e-05
    %v1335 = vadd.f32 %v1332, 1e-05
    %v1336 = vrsqrt.pop %v1333
    %v1337 = vrsqrt.pop %v1334
    %v1338 = vrsqrt.pop %v1335
    %v1342 = vrot.slane %v1336, 4
    %v1343 = vrot.slane %v1337, 4
    %v1344 = vsel %vm121, %v1342, %v1343
    %v1345 = vrot.slane %v1338, 4
    %v1346 = vsel %vm121, %v1343, %v1345
    %v1348 = vsel %vm121, %v1338, %v1342
    %1349 = vset.pattern.permute.xlu0 0
    %1350 = vperm.xlu0 %1349, %v1336
    %v1351 = vpop.permute.xlu0 %1350
    %1353 = vset.pattern.permute.xlu0 0
    %1354 = vperm.xlu0 %1353, %v1337
    %v1355 = vpop.permute.xlu0 %1354
    %1358 = vset.pattern.permute.xlu0 0
    %1359 = vperm.xlu0 %1358, %v1348
    %v1360 = vpop.permute.xlu0 %1359
    %1362 = vset.pattern.permute.xlu0 0
    %1363 = vperm.xlu0 %1362, %v1344
    %v1364 = vpop.permute.xlu0 %1363
    %1366 = vset.pattern.permute.xlu0 0
    %1367 = vperm.xlu0 %1366, %v1346
    %v1368 = vpop.permute.xlu0 %1367
    %v1370 = vmul.f32 %v1291, %v1351
    %v1371 = vmul.f32 %v1292, %v1355
    %v1372 = vmul.f32 %v1293, %v1360
    %v1373 = vmul.f32 %v1294, %v1364
    %v1374 = vmul.f32 %v1295, %v1368
    %vm1375 = vcmp.gt.f32.partialorder %v1370, 0.0
    %vm1376 = vcmp.gt.f32.partialorder %v1371, 0.0
    %vm1377 = vcmp.gt.f32.partialorder %v1372, 0.0
    %vm1378 = vcmp.gt.f32.partialorder %v1373, 0.0
    %vm1379 = vcmp.gt.f32.partialorder %v1374, 0.0
    %v1380 = vmul.f32 %v1370, 0.01
    %v1381 = vmul.f32 %v1371, 0.01
    %v1382 = vmul.f32 %v1372, 0.01
    %v1383 = vmul.f32 %v1373, 0.01
    %v1384 = vmul.f32 %v1374, 0.01
    %v1385 = vsel %vm1375, %v1370, %v1380
    %v1386 = vsel %vm1376, %v1371, %v1381
    %v1387 = vsel %vm1377, %v1372, %v1382
    %v1388 = vsel %vm1378, %v1373, %v1383
    %v1389 = vsel %vm1379, %v1374, %v1384
    %1395 = vrot.lane.b32.xlu0 %v1385, 127
    %v1396 = vpop.permute.xlu0 %1395
    %1397 = vrot.lane.b32.xlu0 %v1386, 127
    %v1398 = vpop.permute.xlu0 %1397
    %1399 = vrot.lane.b32.xlu0 %v1387, 127
    %v1400 = vpop.permute.xlu0 %1399
    %1401 = vrot.lane.b32.xlu0 %v1388, 127
    %v1402 = vpop.permute.xlu0 %1401
    %1403 = vrot.lane.b32.xlu0 %v1389, 127
    %v1404 = vpop.permute.xlu0 %1403
    %1410 = vrot.lane.b32.xlu0 %v1385, 126
    %v1411 = vpop.permute.xlu0 %1410
    %1412 = vrot.lane.b32.xlu0 %v1386, 126
    %v1413 = vpop.permute.xlu0 %1412
    %1414 = vrot.lane.b32.xlu0 %v1387, 126
    %v1415 = vpop.permute.xlu0 %1414
    %1416 = vrot.lane.b32.xlu0 %v1388, 126
    %v1417 = vpop.permute.xlu0 %1416
    %1418 = vrot.lane.b32.xlu0 %v1389, 126
    %v1419 = vpop.permute.xlu0 %1418
    %1425 = vrot.lane.b32.xlu0 %v1385, 125
    %v1426 = vpop.permute.xlu0 %1425
    %1427 = vrot.lane.b32.xlu0 %v1386, 125
    %v1428 = vpop.permute.xlu0 %1427
    %1429 = vrot.lane.b32.xlu0 %v1387, 125
    %v1430 = vpop.permute.xlu0 %1429
    %1431 = vrot.lane.b32.xlu0 %v1388, 125
    %v1432 = vpop.permute.xlu0 %1431
    %1433 = vrot.lane.b32.xlu0 %v1389, 125
    %v1434 = vpop.permute.xlu0 %1433
    %1440 = vrot.lane.b32.xlu0 %v1385, 124
    %v1441 = vpop.permute.xlu0 %1440
    %1442 = vrot.lane.b32.xlu0 %v1386, 124
    %v1443 = vpop.permute.xlu0 %1442
    %1444 = vrot.lane.b32.xlu0 %v1387, 124
    %v1445 = vpop.permute.xlu0 %1444
    %1446 = vrot.lane.b32.xlu0 %v1388, 124
    %v1447 = vpop.permute.xlu0 %1446
    %1448 = vrot.lane.b32.xlu0 %v1389, 124
    %v1449 = vpop.permute.xlu0 %1448
    %1455 = vrot.lane.b32.xlu0 %v1385, 123
    %v1456 = vpop.permute.xlu0 %1455
    %1457 = vrot.lane.b32.xlu0 %v1386, 123
    %v1458 = vpop.permute.xlu0 %1457
    %1459 = vrot.lane.b32.xlu0 %v1387, 123
    %v1460 = vpop.permute.xlu0 %1459
    %1461 = vrot.lane.b32.xlu0 %v1388, 123
    %v1462 = vpop.permute.xlu0 %1461
    %1463 = vrot.lane.b32.xlu0 %v1389, 123
    %v1464 = vpop.permute.xlu0 %1463
    %1470 = vrot.lane.b32.xlu0 %v1385, 122
    %v1471 = vpop.permute.xlu0 %1470
    %1472 = vrot.lane.b32.xlu0 %v1386, 122
    %v1473 = vpop.permute.xlu0 %1472
    %1474 = vrot.lane.b32.xlu0 %v1387, 122
    %v1475 = vpop.permute.xlu0 %1474
    %1476 = vrot.lane.b32.xlu0 %v1388, 122
    %v1477 = vpop.permute.xlu0 %1476
    %1478 = vrot.lane.b32.xlu0 %v1389, 122
    %v1479 = vpop.permute.xlu0 %1478
    %1485 = vrot.lane.b32.xlu0 %v1385, 121
    %v1486 = vpop.permute.xlu0 %1485
    %1487 = vrot.lane.b32.xlu0 %v1386, 121
    %v1488 = vpop.permute.xlu0 %1487
    %1489 = vrot.lane.b32.xlu0 %v1387, 121
    %v1490 = vpop.permute.xlu0 %1489
    %1491 = vrot.lane.b32.xlu0 %v1388, 121
    %v1492 = vpop.permute.xlu0 %1491
    %1493 = vrot.lane.b32.xlu0 %v1389, 121
    %v1494 = vpop.permute.xlu0 %1493
    %1500 = vrot.lane.b32.xlu0 %v1385, 120
    %v1501 = vpop.permute.xlu0 %1500
    %1502 = vrot.lane.b32.xlu0 %v1386, 120
    %v1503 = vpop.permute.xlu0 %1502
    %1504 = vrot.lane.b32.xlu0 %v1387, 120
    %v1505 = vpop.permute.xlu0 %1504
    %1506 = vrot.lane.b32.xlu0 %v1388, 120
    %v1507 = vpop.permute.xlu0 %1506
    %1508 = vrot.lane.b32.xlu0 %v1389, 120
    %v1509 = vpop.permute.xlu0 %1508
    %1515 = vrot.lane.b32.xlu0 %v1385, 119
    %v1516 = vpop.permute.xlu0 %1515
    %1517 = vrot.lane.b32.xlu0 %v1386, 119
    %v1518 = vpop.permute.xlu0 %1517
    %1519 = vrot.lane.b32.xlu0 %v1387, 119
    %v1520 = vpop.permute.xlu0 %1519
    %1521 = vrot.lane.b32.xlu0 %v1388, 119
    %v1522 = vpop.permute.xlu0 %1521
    %1523 = vrot.lane.b32.xlu0 %v1389, 119
    %v1524 = vpop.permute.xlu0 %1523
    %1530 = vrot.lane.b32.xlu0 %v1385, 118
    %v1531 = vpop.permute.xlu0 %1530
    %1532 = vrot.lane.b32.xlu0 %v1386, 118
    %v1533 = vpop.permute.xlu0 %1532
    %1534 = vrot.lane.b32.xlu0 %v1387, 118
    %v1535 = vpop.permute.xlu0 %1534
    %1536 = vrot.lane.b32.xlu0 %v1388, 118
    %v1537 = vpop.permute.xlu0 %1536
    %1538 = vrot.lane.b32.xlu0 %v1389, 118
    %v1539 = vpop.permute.xlu0 %1538
    %1545 = vrot.lane.b32.xlu0 %v1385, 117
    %v1546 = vpop.permute.xlu0 %1545
    %1547 = vrot.lane.b32.xlu0 %v1386, 117
    %v1548 = vpop.permute.xlu0 %1547
    %1549 = vrot.lane.b32.xlu0 %v1387, 117
    %v1550 = vpop.permute.xlu0 %1549
    %1551 = vrot.lane.b32.xlu0 %v1388, 117
    %v1552 = vpop.permute.xlu0 %1551
    %1553 = vrot.lane.b32.xlu0 %v1389, 117
    %v1554 = vpop.permute.xlu0 %1553
    %1560 = vrot.lane.b32.xlu0 %v1385, 116
    %v1561 = vpop.permute.xlu0 %1560
    %1562 = vrot.lane.b32.xlu0 %v1386, 116
    %v1563 = vpop.permute.xlu0 %1562
    %1564 = vrot.lane.b32.xlu0 %v1387, 116
    %v1565 = vpop.permute.xlu0 %1564
    %1566 = vrot.lane.b32.xlu0 %v1388, 116
    %v1567 = vpop.permute.xlu0 %1566
    %1568 = vrot.lane.b32.xlu0 %v1389, 116
    %v1569 = vpop.permute.xlu0 %1568
    %1575 = vrot.lane.b32.xlu0 %v1385, 115
    %v1576 = vpop.permute.xlu0 %1575
    %1577 = vrot.lane.b32.xlu0 %v1386, 115
    %v1578 = vpop.permute.xlu0 %1577
    %1579 = vrot.lane.b32.xlu0 %v1387, 115
    %v1580 = vpop.permute.xlu0 %1579
    %1581 = vrot.lane.b32.xlu0 %v1388, 115
    %v1582 = vpop.permute.xlu0 %1581
    %1583 = vrot.lane.b32.xlu0 %v1389, 115
    %v1584 = vpop.permute.xlu0 %1583
    %1590 = vrot.lane.b32.xlu0 %v1385, 114
    %v1591 = vpop.permute.xlu0 %1590
    %1592 = vrot.lane.b32.xlu0 %v1386, 114
    %v1593 = vpop.permute.xlu0 %1592
    %1594 = vrot.lane.b32.xlu0 %v1387, 114
    %v1595 = vpop.permute.xlu0 %1594
    %1596 = vrot.lane.b32.xlu0 %v1388, 114
    %v1597 = vpop.permute.xlu0 %1596
    %1598 = vrot.lane.b32.xlu0 %v1389, 114
    %v1599 = vpop.permute.xlu0 %1598
    %1605 = vrot.lane.b32.xlu0 %v1385, 113
    %v1606 = vpop.permute.xlu0 %1605
    %1607 = vrot.lane.b32.xlu0 %v1386, 113
    %v1608 = vpop.permute.xlu0 %1607
    %1609 = vrot.lane.b32.xlu0 %v1387, 113
    %v1610 = vpop.permute.xlu0 %1609
    %1611 = vrot.lane.b32.xlu0 %v1388, 113
    %v1612 = vpop.permute.xlu0 %1611
    %1613 = vrot.lane.b32.xlu0 %v1389, 113
    %v1614 = vpop.permute.xlu0 %1613
    %1620 = vrot.lane.b32.xlu0 %v1385, 112
    %v1621 = vpop.permute.xlu0 %1620
    %1622 = vrot.lane.b32.xlu0 %v1386, 112
    %v1623 = vpop.permute.xlu0 %1622
    %1624 = vrot.lane.b32.xlu0 %v1387, 112
    %v1625 = vpop.permute.xlu0 %1624
    %1626 = vrot.lane.b32.xlu0 %v1388, 112
    %v1627 = vpop.permute.xlu0 %1626
    %1628 = vrot.lane.b32.xlu0 %v1389, 112
    %v1629 = vpop.permute.xlu0 %1628
    %1630 = vrot.lane.b32.xlu0 %v1396, 112
    %v1631 = vpop.permute.xlu0 %1630
    %1632 = vrot.lane.b32.xlu0 %v1398, 112
    %v1633 = vpop.permute.xlu0 %1632
    %1634 = vrot.lane.b32.xlu0 %v1400, 112
    %v1635 = vpop.permute.xlu0 %1634
    %1636 = vrot.lane.b32.xlu0 %v1402, 112
    %v1637 = vpop.permute.xlu0 %1636
    %1638 = vrot.lane.b32.xlu0 %v1404, 112
    %v1639 = vpop.permute.xlu0 %1638
    %1640 = vrot.lane.b32.xlu0 %v1411, 112
    %v1641 = vpop.permute.xlu0 %1640
    %1642 = vrot.lane.b32.xlu0 %v1413, 112
    %v1643 = vpop.permute.xlu0 %1642
    %1644 = vrot.lane.b32.xlu0 %v1415, 112
    %v1645 = vpop.permute.xlu0 %1644
    %1646 = vrot.lane.b32.xlu0 %v1417, 112
    %v1647 = vpop.permute.xlu0 %1646
    %1648 = vrot.lane.b32.xlu0 %v1419, 112
    %v1649 = vpop.permute.xlu0 %1648
    %1650 = vrot.lane.b32.xlu0 %v1426, 112
    %v1651 = vpop.permute.xlu0 %1650
    %1652 = vrot.lane.b32.xlu0 %v1428, 112
    %v1653 = vpop.permute.xlu0 %1652
    %1654 = vrot.lane.b32.xlu0 %v1430, 112
    %v1655 = vpop.permute.xlu0 %1654
    %1656 = vrot.lane.b32.xlu0 %v1432, 112
    %v1657 = vpop.permute.xlu0 %1656
    %1658 = vrot.lane.b32.xlu0 %v1434, 112
    %v1659 = vpop.permute.xlu0 %1658
    %1660 = vrot.lane.b32.xlu0 %v1441, 112
    %v1661 = vpop.permute.xlu0 %1660
    %1662 = vrot.lane.b32.xlu0 %v1443, 112
    %v1663 = vpop.permute.xlu0 %1662
    %1664 = vrot.lane.b32.xlu0 %v1445, 112
    %v1665 = vpop.permute.xlu0 %1664
    %1666 = vrot.lane.b32.xlu0 %v1447, 112
    %v1667 = vpop.permute.xlu0 %1666
    %1668 = vrot.lane.b32.xlu0 %v1449, 112
    %v1669 = vpop.permute.xlu0 %1668
    %1670 = vrot.lane.b32.xlu0 %v1456, 112
    %v1671 = vpop.permute.xlu0 %1670
    %1672 = vrot.lane.b32.xlu0 %v1458, 112
    %v1673 = vpop.permute.xlu0 %1672
    %1674 = vrot.lane.b32.xlu0 %v1460, 112
    %v1675 = vpop.permute.xlu0 %1674
    %1676 = vrot.lane.b32.xlu0 %v1462, 112
    %v1677 = vpop.permute.xlu0 %1676
    %1678 = vrot.lane.b32.xlu0 %v1464, 112
    %v1679 = vpop.permute.xlu0 %1678
    %1680 = vrot.lane.b32.xlu0 %v1471, 112
    %v1681 = vpop.permute.xlu0 %1680
    %1682 = vrot.lane.b32.xlu0 %v1473, 112
    %v1683 = vpop.permute.xlu0 %1682
    %1684 = vrot.lane.b32.xlu0 %v1475, 112
    %v1685 = vpop.permute.xlu0 %1684
    %1686 = vrot.lane.b32.xlu0 %v1477, 112
    %v1687 = vpop.permute.xlu0 %1686
    %1688 = vrot.lane.b32.xlu0 %v1479, 112
    %v1689 = vpop.permute.xlu0 %1688
    %1690 = vrot.lane.b32.xlu0 %v1486, 112
    %v1691 = vpop.permute.xlu0 %1690
    %1692 = vrot.lane.b32.xlu0 %v1488, 112
    %v1693 = vpop.permute.xlu0 %1692
    %1694 = vrot.lane.b32.xlu0 %v1490, 112
    %v1695 = vpop.permute.xlu0 %1694
    %1696 = vrot.lane.b32.xlu0 %v1492, 112
    %v1697 = vpop.permute.xlu0 %1696
    %1698 = vrot.lane.b32.xlu0 %v1494, 112
    %v1699 = vpop.permute.xlu0 %1698
    %1700 = vrot.lane.b32.xlu0 %v1501, 112
    %v1701 = vpop.permute.xlu0 %1700
    %1702 = vrot.lane.b32.xlu0 %v1503, 112
    %v1703 = vpop.permute.xlu0 %1702
    %1704 = vrot.lane.b32.xlu0 %v1505, 112
    %v1705 = vpop.permute.xlu0 %1704
    %1706 = vrot.lane.b32.xlu0 %v1507, 112
    %v1707 = vpop.permute.xlu0 %1706
    %1708 = vrot.lane.b32.xlu0 %v1509, 112
    %v1709 = vpop.permute.xlu0 %1708
    %1710 = vrot.lane.b32.xlu0 %v1516, 112
    %v1711 = vpop.permute.xlu0 %1710
    %1712 = vrot.lane.b32.xlu0 %v1518, 112
    %v1713 = vpop.permute.xlu0 %1712
    %1714 = vrot.lane.b32.xlu0 %v1520, 112
    %v1715 = vpop.permute.xlu0 %1714
    %1716 = vrot.lane.b32.xlu0 %v1522, 112
    %v1717 = vpop.permute.xlu0 %1716
    %1718 = vrot.lane.b32.xlu0 %v1524, 112
    %v1719 = vpop.permute.xlu0 %1718
    %1720 = vrot.lane.b32.xlu0 %v1531, 112
    %v1721 = vpop.permute.xlu0 %1720
    %1722 = vrot.lane.b32.xlu0 %v1533, 112
    %v1723 = vpop.permute.xlu0 %1722
    %1724 = vrot.lane.b32.xlu0 %v1535, 112
    %v1725 = vpop.permute.xlu0 %1724
    %1726 = vrot.lane.b32.xlu0 %v1537, 112
    %v1727 = vpop.permute.xlu0 %1726
    %1728 = vrot.lane.b32.xlu0 %v1539, 112
    %v1729 = vpop.permute.xlu0 %1728
    %1730 = vrot.lane.b32.xlu0 %v1546, 112
    %v1731 = vpop.permute.xlu0 %1730
    %1732 = vrot.lane.b32.xlu0 %v1548, 112
    %v1733 = vpop.permute.xlu0 %1732
    %1734 = vrot.lane.b32.xlu0 %v1550, 112
    %v1735 = vpop.permute.xlu0 %1734
    %1736 = vrot.lane.b32.xlu0 %v1552, 112
    %v1737 = vpop.permute.xlu0 %1736
    %1738 = vrot.lane.b32.xlu0 %v1554, 112
    %v1739 = vpop.permute.xlu0 %1738
    %1740 = vrot.lane.b32.xlu0 %v1561, 112
    %v1741 = vpop.permute.xlu0 %1740
    %1742 = vrot.lane.b32.xlu0 %v1563, 112
    %v1743 = vpop.permute.xlu0 %1742
    %1744 = vrot.lane.b32.xlu0 %v1565, 112
    %v1745 = vpop.permute.xlu0 %1744
    %1746 = vrot.lane.b32.xlu0 %v1567, 112
    %v1747 = vpop.permute.xlu0 %1746
    %1748 = vrot.lane.b32.xlu0 %v1569, 112
    %v1749 = vpop.permute.xlu0 %1748
    %1750 = vrot.lane.b32.xlu0 %v1576, 112
    %v1751 = vpop.permute.xlu0 %1750
    %1752 = vrot.lane.b32.xlu0 %v1578, 112
    %v1753 = vpop.permute.xlu0 %1752
    %1754 = vrot.lane.b32.xlu0 %v1580, 112
    %v1755 = vpop.permute.xlu0 %1754
    %1756 = vrot.lane.b32.xlu0 %v1582, 112
    %v1757 = vpop.permute.xlu0 %1756
    %1758 = vrot.lane.b32.xlu0 %v1584, 112
    %v1759 = vpop.permute.xlu0 %1758
    %1760 = vrot.lane.b32.xlu0 %v1591, 112
    %v1761 = vpop.permute.xlu0 %1760
    %1762 = vrot.lane.b32.xlu0 %v1593, 112
    %v1763 = vpop.permute.xlu0 %1762
    %1764 = vrot.lane.b32.xlu0 %v1595, 112
    %v1765 = vpop.permute.xlu0 %1764
    %1766 = vrot.lane.b32.xlu0 %v1597, 112
    %v1767 = vpop.permute.xlu0 %1766
    %1768 = vrot.lane.b32.xlu0 %v1599, 112
    %v1769 = vpop.permute.xlu0 %1768
    %v1845 = vld [vmem:[#allocation10] sm:$0xff]
    %v1846 = vld [vmem:[#allocation10 + $0x8] sm:$0xff]
    %v1847 = vld [vmem:[#allocation10 + $0x10] sm:$0xff]
    %v1848 = vld [vmem:[#allocation10 + $0x18] sm:$0xff]
    %v1849 = vld [vmem:[#allocation10 + $0x20] sm:$0xff]
    %v1850 = vld [vmem:[#allocation10 + $0x28] sm:$0xff]
    %v1851 = vld [vmem:[#allocation10 + $0x30] sm:$0xff]
    %v1852 = vld [vmem:[#allocation10 + $0x38] sm:$0xff]
    %v1853 = vld [vmem:[#allocation10 + $0x40] sm:$0xff]
    %v1854 = vld [vmem:[#allocation10 + $0x48] sm:$0xff]
    %v1855 = vld [vmem:[#allocation10 + $0x50] sm:$0xff]
    %v1856 = vld [vmem:[#allocation10 + $0x58] sm:$0xff]
    %v1857 = vld [vmem:[#allocation10 + $0x60] sm:$0xff]
    %v1858 = vld [vmem:[#allocation10 + $0x68] sm:$0xff]
    %v1859 = vld [vmem:[#allocation10 + $0x70] sm:$0xff]
    %v1860 = vld [vmem:[#allocation10 + $0x78] sm:$0xff]
    %v1861 = vld [vmem:[#allocation10 + $0x80] sm:$0xff]
    %v1862 = vld [vmem:[#allocation10 + $0x88] sm:$0xff]
    %v1863 = vld [vmem:[#allocation10 + $0x90] sm:$0xff]
    %v1864 = vld [vmem:[#allocation10 + $0x98] sm:$0xff]
    %v1865 = vld [vmem:[#allocation10 + $0xa0] sm:$0xff]
    %v1866 = vld [vmem:[#allocation10 + $0xa8] sm:$0xff]
    %v1867 = vld [vmem:[#allocation10 + $0xb0] sm:$0xff]
    %v1868 = vld [vmem:[#allocation10 + $0xb8] sm:$0xff]
    %v1869 = vld [vmem:[#allocation10 + $0xc0] sm:$0xff]
    %v1870 = vld [vmem:[#allocation10 + $0xc8] sm:$0xff]
    %v1871 = vld [vmem:[#allocation10 + $0xd0] sm:$0xff]
    %v1872 = vld [vmem:[#allocation10 + $0xd8] sm:$0xff]
    %v1873 = vld [vmem:[#allocation10 + $0xe0] sm:$0xff]
    %v1874 = vld [vmem:[#allocation10 + $0xe8] sm:$0xff]
    %v1875 = vld [vmem:[#allocation10 + $0xf0] sm:$0xff]
    %v1876 = vld [vmem:[#allocation10 + $0xf8] sm:$0xff]
    %v1877 = vld [vmem:[#allocation10 + $0x100] sm:$0xff]
    %v1878 = vld [vmem:[#allocation10 + $0x108] sm:$0xff]
    %v1879 = vld [vmem:[#allocation10 + $0x110] sm:$0xff]
    %v1880 = vld [vmem:[#allocation10 + $0x118] sm:$0xff]
    %v1881 = vld [vmem:[#allocation10 + $0x120] sm:$0xff]
    %v1882 = vld [vmem:[#allocation10 + $0x128] sm:$0xff]
    %v1883 = vld [vmem:[#allocation10 + $0x130] sm:$0xff]
    %v1884 = vld [vmem:[#allocation10 + $0x138] sm:$0xff]
    %v1885 = vld [vmem:[#allocation10 + $0x140] sm:$0xff]
    %v1886 = vld [vmem:[#allocation10 + $0x148] sm:$0xff]
    %v1887 = vld [vmem:[#allocation10 + $0x150] sm:$0xff]
    %v1888 = vld [vmem:[#allocation10 + $0x158] sm:$0xff]
    %v1889 = vld [vmem:[#allocation10 + $0x160] sm:$0xff]
    %v1890 = vld [vmem:[#allocation10 + $0x168] sm:$0xff]
    %v1891 = vld [vmem:[#allocation10 + $0x170] sm:$0xff]
    %v1892 = vld [vmem:[#allocation10 + $0x178] sm:$0xff]
    %v1893 = vld [vmem:[#allocation10 + $0x180] sm:$0xff]
    %v1894 = vld [vmem:[#allocation10 + $0x188] sm:$0xff]
    %v1895 = vld [vmem:[#allocation10 + $0x190] sm:$0xff]
    %v1896 = vld [vmem:[#allocation10 + $0x198] sm:$0xff]
    %v1897 = vld [vmem:[#allocation10 + $0x1a0] sm:$0xff]
    %v1898 = vld [vmem:[#allocation10 + $0x1a8] sm:$0xff]
    %v1899 = vld [vmem:[#allocation10 + $0x1b0] sm:$0xff]
    %v1900 = vld [vmem:[#allocation10 + $0x1b8] sm:$0xff]
    %v1901 = vld [vmem:[#allocation10 + $0x1c0] sm:$0xff]
    %v1902 = vld [vmem:[#allocation10 + $0x1c8] sm:$0xff]
    %v1903 = vld [vmem:[#allocation10 + $0x1d0] sm:$0xff]
    %v1904 = vld [vmem:[#allocation10 + $0x1d8] sm:$0xff]
    %v1905 = vld [vmem:[#allocation10 + $0x1e0] sm:$0xff]
    %v1906 = vld [vmem:[#allocation10 + $0x1e8] sm:$0xff]
    %v1907 = vld [vmem:[#allocation10 + $0x1f0] sm:$0xff]
    %v1908 = vld [vmem:[#allocation10 + $0x1f8] sm:$0xff]
    %v1909 = vld [vmem:[#allocation10 + $0x200] sm:$0xff]
    %v1910 = vld [vmem:[#allocation10 + $0x208] sm:$0xff]
    %v1911 = vld [vmem:[#allocation10 + $0x210] sm:$0xff]
    %v1912 = vld [vmem:[#allocation10 + $0x218] sm:$0xff]
    %v1913 = vld [vmem:[#allocation10 + $0x220] sm:$0xff]
    %v1914 = vld [vmem:[#allocation10 + $0x228] sm:$0xff]
    %v1915 = vld [vmem:[#allocation10 + $0x230] sm:$0xf]
    %v1916 = vld [vmem:[#allocation10 + $0x238] sm:$0xf]
    %v1917 = vld [vmem:[#allocation10 + $0x240] sm:$0xf]
    %v1918 = vld [vmem:[#allocation10 + $0x248] sm:$0xf]
    %v1919 = vld [vmem:[#allocation10 + $0x250] sm:$0xf]
    %v1920 = vld [vmem:[#allocation10 + $0x258] sm:$0xf]
    %v1921 = vld [vmem:[#allocation10 + $0x260] sm:$0xf]
    %v1922 = vld [vmem:[#allocation10 + $0x268] sm:$0xf]
    %v1923 = vld [vmem:[#allocation10 + $0x270] sm:$0xf]
    %v1924 = vld [vmem:[#allocation10 + $0x278] sm:$0xf]
    %v1926 = vsel %vm940, %v1854, 0
    %v1929 = vsel %vm940, %v1864, 0
    %v1932 = vsel %vm940, %v1874, 0
    %v1935 = vsel %vm940, %v1884, 0
    %v1938 = vsel %vm940, %v1894, 0
    %v1941 = vsel %vm940, %v1904, 0
    %v1944 = vsel %vm940, %v1914, 0
    %v1947 = vsel %vm940, %v1924, 0
    %1949 = vmatprep.subr.mxu0 0.0
    %1950 = vmatpush1.msra.mxu0 %v1385
    %1951 = vmatprep.subr.mxu0 0.0
    %1952 = vmatpush1.msra.mxu0 %v1386
    %1953 = vmatprep.subr.mxu0 0.0
    %1954 = vmatpush1.msra.mxu0 %v1387
    %1955 = vmatprep.subr.mxu0 0.0
    %1956 = vmatpush1.msra.mxu0 %v1388
    %1957 = vmatprep.subr.mxu0 0.0
    %1958 = vmatpush1.msra.mxu0 %v1389
    %1959 = vmatprep.subr.mxu0 0.0
    %1960 = vmatpush1.msra.mxu0 %v1396
    %1961 = vmatprep.subr.mxu0 0.0
    %1962 = vmatpush1.msra.mxu0 %v1398
    %1963 = vmatprep.subr.mxu0 0.0
    %1964 = vmatpush1.msra.mxu0 %v1400
    %1965 = vmatprep.subr.mxu0 0.0
    %1966 = vmatpush1.msra.mxu0 %v1402
    %1967 = vmatprep.subr.mxu0 0.0
    %1968 = vmatpush1.msra.mxu0 %v1404
    %1969 = vmatprep.subr.mxu0 0.0
    %1970 = vmatpush1.msra.mxu0 %v1411
    %1971 = vmatprep.subr.mxu0 0.0
    %1972 = vmatpush1.msra.mxu0 %v1413
    %1973 = vmatprep.subr.mxu0 0.0
    %1974 = vmatpush1.msra.mxu0 %v1415
    %1975 = vmatprep.subr.mxu0 0.0
    %1976 = vmatpush1.msra.mxu0 %v1417
    %1977 = vmatprep.subr.mxu0 0.0
    %1978 = vmatpush1.msra.mxu0 %v1419
    %1979 = vmatprep.subr.mxu0 0.0
    %1980 = vmatpush1.msra.mxu0 %v1426
    %1981 = vmatprep.subr.mxu0 0.0
    %1982 = vmatpush1.msra.mxu0 %v1428
    %1983 = vmatprep.subr.mxu0 0.0
    %1984 = vmatpush1.msra.mxu0 %v1430
    %1985 = vmatprep.subr.mxu0 0.0
    %1986 = vmatpush1.msra.mxu0 %v1432
    %1987 = vmatprep.subr.mxu0 0.0
    %1988 = vmatpush1.msra.mxu0 %v1434
    %1989 = vmatprep.subr.mxu0 0.0
    %1990 = vmatpush1.msra.mxu0 %v1441
    %1991 = vmatprep.subr.mxu0 0.0
    %1992 = vmatpush1.msra.mxu0 %v1443
    %1993 = vmatprep.subr.mxu0 0.0
    %1994 = vmatpush1.msra.mxu0 %v1445
    %1995 = vmatprep.subr.mxu0 0.0
    %1996 = vmatpush1.msra.mxu0 %v1447
    %1997 = vmatprep.subr.mxu0 0.0
    %1998 = vmatpush1.msra.mxu0 %v1449
    %1999 = vmatprep.subr.mxu0 0.0
    %2000 = vmatpush1.msra.mxu0 %v1456
    %2001 = vmatprep.subr.mxu0 0.0
    %2002 = vmatpush1.msra.mxu0 %v1458
    %2003 = vmatprep.subr.mxu0 0.0
    %2004 = vmatpush1.msra.mxu0 %v1460
    %2005 = vmatprep.subr.mxu0 0.0
    %2006 = vmatpush1.msra.mxu0 %v1462
    %2007 = vmatprep.subr.mxu0 0.0
    %2008 = vmatpush1.msra.mxu0 %v1464
    %2009 = vmatprep.subr.mxu0 0.0
    %2010 = vmatpush1.msra.mxu0 %v1471
    %2011 = vmatprep.subr.mxu0 0.0
    %2012 = vmatpush1.msra.mxu0 %v1473
    %2013 = vmatprep.mubr.f32.mxu0 %v1846
    %2014 = vmatmul.mubr.f32.gmra.mrb[0].mxu0 %v1845
    %v2015 = vpop.f32.mrb[0].mxu0
    %v2016 = vadd.f32 0.0, %v2015
    %v2017 = vpop.f32.mrb[0].mxu0
    %2018 = vmatprep.mubr.f32.mxu0 %v1856
    %2019 = vmatmul.mubr.f32.gmra.mrb[0].mxu0 %v1855
    %v2020 = vpop.f32.mrb[0].mxu0
    %v2021 = vadd.f32 0.0, %v2020
    %v2022 = vpop.f32.mrb[0].mxu0
    %2023 = vmatprep.mubr.f32.mxu0 %v1866
    %2024 = vmatmul.mubr.f32.gmra.mrb[0].mxu0 %v1865
    %v2025 = vpop.f32.mrb[0].mxu0
    %v2026 = vadd.f32 0.0, %v2025
    %v2027 = vpop.f32.mrb[0].mxu0
    %2028 = vmatprep.mubr.f32.mxu0 %v1876
    %2029 = vmatmul.mubr.f32.gmra.mrb[0].mxu0 %v1875
    %v2030 = vpop.f32.mrb[0].mxu0
    %v2031 = vadd.f32 0.0, %v2030
    %v2032 = vpop.f32.mrb[0].mxu0
    %2033 = vmatprep.mubr.f32.mxu0 %v1886
    %2034 = vmatmul.mubr.f32.gmra.mrb[0].mxu0 %v1885
    %v2035 = vpop.f32.mrb[0].mxu0
    %v2036 = vadd.f32 0.0, %v2035
    %v2037 = vpop.f32.mrb[0].mxu0
    %2038 = vmatprep.mubr.f32.mxu0 %v1896
    %2039 = vmatmul.mubr.f32.gmra.mrb[0].mxu0 %v1895
    %v2040 = vpop.f32.mrb[0].mxu0
    %v2041 = vadd.f32 0.0, %v2040
    %v2042 = vpop.f32.mrb[0].mxu0
    %2043 = vmatprep.mubr.f32.mxu0 %v1906
    %2044 = vmatmul.mubr.f32.gmra.mrb[0].mxu0 %v1905
    %v2045 = vpop.f32.mrb[0].mxu0
    %v2046 = vadd.f32 0.0, %v2045
    %v2047 = vpop.f32.mrb[0].mxu0
    %2048 = vmatprep.mubr.f32.mxu0 %v1916
    %2049 = vmatmul.mubr.f32.gmra.mrb[0].mxu0 %v1915
    %v2050 = vpop.f32.mrb[0].mxu0
    %v2051 = vadd.f32 0.0, %v2050
    %v2052 = vpop.f32.mrb[0].mxu0
    %2053 = vdwg.mxu0
    %2054 = vmatprep.subr.mxu0 0.0
    %2055 = vmatpush1.msra.mxu0 %v1475
    %2056 = vmatprep.subr.mxu0 0.0
    %2057 = vmatpush1.msra.mxu0 %v1477
    %2058 = vmatprep.subr.mxu0 0.0
    %2059 = vmatpush1.msra.mxu0 %v1479
    %2060 = vmatprep.subr.mxu0 0.0
    %2061 = vmatpush1.msra.mxu0 %v1486
    %2062 = vmatprep.subr.mxu0 0.0
    %2063 = vmatpush1.msra.mxu0 %v1488
    %2064 = vmatprep.subr.mxu0 0.0
    %2065 = vmatpush1.msra.mxu0 %v1490
    %2066 = vmatprep.subr.mxu0 0.0
    %2067 = vmatpush1.msra.mxu0 %v1492
    %2068 = vmatprep.subr.mxu0 0.0
    %2069 = vmatpush1.msra.mxu0 %v1494
    %2070 = vmatprep.subr.mxu0 0.0
    %2071 = vmatpush1.msra.mxu0 %v1501
    %2072 = vmatprep.subr.mxu0 0.0
    %2073 = vmatpush1.msra.mxu0 %v1503
    %2074 = vmatprep.subr.mxu0 0.0
    %2075 = vmatpush1.msra.mxu0 %v1505
    %2076 = vmatprep.subr.mxu0 0.0
    %2077 = vmatpush1.msra.mxu0 %v1507
    %2078 = vmatprep.subr.mxu0 0.0
    %2079 = vmatpush1.msra.mxu0 %v1509
    %2080 = vmatprep.subr.mxu0 0.0
    %2081 = vmatpush1.msra.mxu0 %v1516
    %2082 = vmatprep.subr.mxu0 0.0
    %2083 = vmatpush1.msra.mxu0 %v1518
    %2084 = vmatprep.subr.mxu0 0.0
    %2085 = vmatpush1.msra.mxu0 %v1520
    %2086 = vmatprep.subr.mxu0 0.0
    %2087 = vmatpush1.msra.mxu0 %v1522
    %2088 = vmatprep.subr.mxu0 0.0
    %2089 = vmatpush1.msra.mxu0 %v1524
    %2090 = vmatprep.subr.mxu0 0.0
    %2091 = vmatpush1.msra.mxu0 %v1531
    %2092 = vmatprep.subr.mxu0 0.0
    %2093 = vmatpush1.msra.mxu0 %v1533
    %2094 = vmatprep.subr.mxu0 0.0
    %2095 = vmatpush1.msra.mxu0 %v1535
    %2096 = vmatprep.subr.mxu0 0.0
    %2097 = vmatpush1.msra.mxu0 %v1537
    %2098 = vmatprep.subr.mxu0 0.0
    %2099 = vmatpush1.msra.mxu0 %v1539
    %2100 = vmatprep.subr.mxu0 0.0
    %2101 = vmatpush1.msra.mxu0 %v1546
    %2102 = vmatprep.subr.mxu0 0.0
    %2103 = vmatpush1.msra.mxu0 %v1548
    %2104 = vmatprep.subr.mxu0 0.0
    %2105 = vmatpush1.msra.mxu0 %v1550
    %2106 = vmatprep.subr.mxu0 0.0
    %2107 = vmatpush1.msra.mxu0 %v1552
    %2108 = vmatprep.subr.mxu0 0.0
    %2109 = vmatpush1.msra.mxu0 %v1554
    %2110 = vmatprep.subr.mxu0 0.0
    %2111 = vmatpush1.msra.mxu0 %v1561
    %2112 = vmatprep.subr.mxu0 0.0
    %2113 = vmatpush1.msra.mxu0 %v1563
    %2114 = vmatprep.subr.mxu0 0.0
    %2115 = vmatpush1.msra.mxu0 %v1565
    %2116 = vmatprep.subr.mxu0 0.0
    %2117 = vmatpush1.msra.mxu0 %v1567
    %2118 = vmatprep.mubr.f32.mxu0 %v1848
    %2119 = vmatmul.mubr.f32.gmra.mrb[0].mxu0 %v1847
    %v2120 = vpop.f32.mrb[0].mxu0
    %v2121 = vadd.f32 %v2016, %v2120
    %v2122 = vpop.f32.mrb[0].mxu0
    %2123 = vmatprep.mubr.f32.mxu0 %v1858
    %2124 = vmatmul.mubr.f32.gmra.mrb[0].mxu0 %v1857
    %v2125 = vpop.f32.mrb[0].mxu0
    %v2126 = vadd.f32 %v2021, %v2125
    %v2127 = vpop.f32.mrb[0].mxu0
    %2128 = vmatprep.mubr.f32.mxu0 %v1868
    %2129 = vmatmul.mubr.f32.gmra.mrb[0].mxu0 %v1867
    %v2130 = vpop.f32.mrb[0].mxu0
    %v2131 = vadd.f32 %v2026, %v2130
    %v2132 = vpop.f32.mrb[0].mxu0
    %2133 = vmatprep.mubr.f32.mxu0 %v1878
    %2134 = vmatmul.mubr.f32.gmra.mrb[0].mxu0 %v1877
    %v2135 = vpop.f32.mrb[0].mxu0
    %v2136 = vadd.f32 %v2031, %v2135
    %v2137 = vpop.f32.mrb[0].mxu0
    %2138 = vmatprep.mubr.f32.mxu0 %v1888
    %2139 = vmatmul.mubr.f32.gmra.mrb[0].mxu0 %v1887
    %v2140 = vpop.f32.mrb[0].mxu0
    %v2141 = vadd.f32 %v2036, %v2140
    %v2142 = vpop.f32.mrb[0].mxu0
    %2143 = vmatprep.mubr.f32.mxu0 %v1898
    %2144 = vmatmul.mubr.f32.gmra.mrb[0].mxu0 %v1897
    %v2145 = vpop.f32.mrb[0].mxu0
    %v2146 = vadd.f32 %v2041, %v2145
    %v2147 = vpop.f32.mrb[0].mxu0
    %2148 = vmatprep.mubr.f32.mxu0 %v1908
    %2149 = vmatmul.mubr.f32.gmra.mrb[0].mxu0 %v1907
    %v2150 = vpop.f32.mrb[0].mxu0
    %v2151 = vadd.f32 %v2046, %v2150
    %v2152 = vpop.f32.mrb[0].mxu0
    %2153 = vmatprep.mubr.f32.mxu0 %v1918
    %2154 = vmatmul.mubr.f32.gmra.mrb[0].mxu0 %v1917
    %v2155 = vpop.f32.mrb[0].mxu0
    %v2156 = vadd.f32 %v2051, %v2155
    %v2157 = vpop.f32.mrb[0].mxu0
    %2158 = vdwg.mxu0
    %2159 = vmatprep.subr.mxu0 0.0
    %2160 = vmatpush1.msra.mxu0 %v1569
    %2161 = vmatprep.subr.mxu0 0.0
    %2162 = vmatpush1.msra.mxu0 %v1576
    %2163 = vmatprep.subr.mxu0 0.0
    %2164 = vmatpush1.msra.mxu0 %v1578
    %2165 = vmatprep.subr.mxu0 0.0
    %2166 = vmatpush1.msra.mxu0 %v1580
    %2167 = vmatprep.subr.mxu0 0.0
    %2168 = vmatpush1.msra.mxu0 %v1582
    %2169 = vmatprep.subr.mxu0 0.0
    %2170 = vmatpush1.msra.mxu0 %v1584
    %2171 = vmatprep.subr.mxu0 0.0
    %2172 = vmatpush1.msra.mxu0 %v1591
    %2173 = vmatprep.subr.mxu0 0.0
    %2174 = vmatpush1.msra.mxu0 %v1593
    %2175 = vmatprep.subr.mxu0 0.0
    %2176 = vmatpush1.msra.mxu0 %v1595
    %2177 = vmatprep.subr.mxu0 0.0
    %2178 = vmatpush1.msra.mxu0 %v1597
    %2179 = vmatprep.subr.mxu0 0.0
    %2180 = vmatpush1.msra.mxu0 %v1599
    %2181 = vmatprep.subr.mxu0 0.0
    %2182 = vmatpush1.msra.mxu0 %v1606
    %2183 = vmatprep.subr.mxu0 0.0
    %2184 = vmatpush1.msra.mxu0 %v1608
    %2185 = vmatprep.subr.mxu0 0.0
    %2186 = vmatpush1.msra.mxu0 %v1610
    %2187 = vmatprep.subr.mxu0 0.0
    %2188 = vmatpush1.msra.mxu0 %v1612
    %2189 = vmatprep.subr.mxu0 0.0
    %2190 = vmatpush1.msra.mxu0 %v1614
    %2191 = vmatprep.subr.mxu0 0.0
    %2192 = vmatpush1.msra.mxu0 %v1621
    %2193 = vmatprep.subr.mxu0 0.0
    %2194 = vmatpush1.msra.mxu0 %v1623
    %2195 = vmatprep.subr.mxu0 0.0
    %2196 = vmatpush1.msra.mxu0 %v1625
    %2197 = vmatprep.subr.mxu0 0.0
    %2198 = vmatpush1.msra.mxu0 %v1627
    %2199 = vmatprep.subr.mxu0 0.0
    %2200 = vmatpush1.msra.mxu0 %v1629
    %2201 = vmatprep.subr.mxu0 0.0
    %2202 = vmatpush1.msra.mxu0 %v1631
    %2203 = vmatprep.subr.mxu0 0.0
    %2204 = vmatpush1.msra.mxu0 %v1633
    %2205 = vmatprep.subr.mxu0 0.0
    %2206 = vmatpush1.msra.mxu0 %v1635
    %2207 = vmatprep.subr.mxu0 0.0
    %2208 = vmatpush1.msra.mxu0 %v1637
    %2209 = vmatprep.subr.mxu0 0.0
    %2210 = vmatpush1.msra.mxu0 %v1639
    %2211 = vmatprep.subr.mxu0 0.0
    %2212 = vmatpush1.msra.mxu0 %v1641
    %2213 = vmatprep.subr.mxu0 0.0
    %2214 = vmatpush1.msra.mxu0 %v1643
    %2215 = vmatprep.subr.mxu0 0.0
    %2216 = vmatpush1.msra.mxu0 %v1645
    %2217 = vmatprep.subr.mxu0 0.0
    %2218 = vmatpush1.msra.mxu0 %v1647
    %2219 = vmatprep.subr.mxu0 0.0
    %2220 = vmatpush1.msra.mxu0 %v1649
    %2221 = vmatprep.subr.mxu0 0.0
    %2222 = vmatpush1.msra.mxu0 %v1651
    %2223 = vmatprep.mubr.f32.mxu0 %v1850
    %2224 = vmatmul.mubr.f32.gmra.mrb[0].mxu0 %v1849
    %v2225 = vpop.f32.mrb[0].mxu0
    %v2226 = vadd.f32 %v2121, %v2225
    %v2227 = vpop.f32.mrb[0].mxu0
    %2228 = vmatprep.mubr.f32.mxu0 %v1860
    %2229 = vmatmul.mubr.f32.gmra.mrb[0].mxu0 %v1859
    %v2230 = vpop.f32.mrb[0].mxu0
    %v2231 = vadd.f32 %v2126, %v2230
    %v2232 = vpop.f32.mrb[0].mxu0
    %2233 = vmatprep.mubr.f32.mxu0 %v1870
    %2234 = vmatmul.mubr.f32.gmra.mrb[0].mxu0 %v1869
    %v2235 = vpop.f32.mrb[0].mxu0
    %v2236 = vadd.f32 %v2131, %v2235
    %v2237 = vpop.f32.mrb[0].mxu0
    %2238 = vmatprep.mubr.f32.mxu0 %v1880
    %2239 = vmatmul.mubr.f32.gmra.mrb[0].mxu0 %v1879
    %v2240 = vpop.f32.mrb[0].mxu0
    %v2241 = vadd.f32 %v2136, %v2240
    %v2242 = vpop.f32.mrb[0].mxu0
    %2243 = vmatprep.mubr.f32.mxu0 %v1890
    %2244 = vmatmul.mubr.f32.gmra.mrb[0].mxu0 %v1889
    %v2245 = vpop.f32.mrb[0].mxu0
    %v2246 = vadd.f32 %v2141, %v2245
    %v2247 = vpop.f32.mrb[0].mxu0
    %2248 = vmatprep.mubr.f32.mxu0 %v1900
    %2249 = vmatmul.mubr.f32.gmra.mrb[0].mxu0 %v1899
    %v2250 = vpop.f32.mrb[0].mxu0
    %v2251 = vadd.f32 %v2146, %v2250
    %v2252 = vpop.f32.mrb[0].mxu0
    %2253 = vmatprep.mubr.f32.mxu0 %v1910
    %2254 = vmatmul.mubr.f32.gmra.mrb[0].mxu0 %v1909
    %v2255 = vpop.f32.mrb[0].mxu0
    %v2256 = vadd.f32 %v2151, %v2255
    %v2257 = vpop.f32.mrb[0].mxu0
    %2258 = vmatprep.mubr.f32.mxu0 %v1920
    %2259 = vmatmul.mubr.f32.gmra.mrb[0].mxu0 %v1919
    %v2260 = vpop.f32.mrb[0].mxu0
    %v2261 = vadd.f32 %v2156, %v2260
    %v2262 = vpop.f32.mrb[0].mxu0
    %2263 = vdwg.mxu0
    %2264 = vmatprep.subr.mxu0 0.0
    %2265 = vmatpush1.msra.mxu0 %v1653
    %2266 = vmatprep.subr.mxu0 0.0
    %2267 = vmatpush1.msra.mxu0 %v1655
    %2268 = vmatprep.subr.mxu0 0.0
    %2269 = vmatpush1.msra.mxu0 %v1657
    %2270 = vmatprep.subr.mxu0 0.0
    %2271 = vmatpush1.msra.mxu0 %v1659
    %2272 = vmatprep.subr.mxu0 0.0
    %2273 = vmatpush1.msra.mxu0 %v1661
    %2274 = vmatprep.subr.mxu0 0.0
    %2275 = vmatpush1.msra.mxu0 %v1663
    %2276 = vmatprep.subr.mxu0 0.0
    %2277 = vmatpush1.msra.mxu0 %v1665
    %2278 = vmatprep.subr.mxu0 0.0
    %2279 = vmatpush1.msra.mxu0 %v1667
    %2280 = vmatprep.subr.mxu0 0.0
    %2281 = vmatpush1.msra.mxu0 %v1669
    %2282 = vmatprep.subr.mxu0 0.0
    %2283 = vmatpush1.msra.mxu0 %v1671
    %2284 = vmatprep.subr.mxu0 0.0
    %2285 = vmatpush1.msra.mxu0 %v1673
    %2286 = vmatprep.subr.mxu0 0.0
    %2287 = vmatpush1.msra.mxu0 %v1675
    %2288 = vmatprep.subr.mxu0 0.0
    %2289 = vmatpush1.msra.mxu0 %v1677
    %2290 = vmatprep.subr.mxu0 0.0
    %2291 = vmatpush1.msra.mxu0 %v1679
    %2292 = vmatprep.subr.mxu0 0.0
    %2293 = vmatpush1.msra.mxu0 %v1681
    %2294 = vmatprep.subr.mxu0 0.0
    %2295 = vmatpush1.msra.mxu0 %v1683
    %2296 = vmatprep.subr.mxu0 0.0
    %2297 = vmatpush1.msra.mxu0 %v1685
    %2298 = vmatprep.subr.mxu0 0.0
    %2299 = vmatpush1.msra.mxu0 %v1687
    %2300 = vmatprep.subr.mxu0 0.0
    %2301 = vmatpush1.msra.mxu0 %v1689
    %2302 = vmatprep.subr.mxu0 0.0
    %2303 = vmatpush1.msra.mxu0 %v1691
    %2304 = vmatprep.subr.mxu0 0.0
    %2305 = vmatpush1.msra.mxu0 %v1693
    %2306 = vmatprep.subr.mxu0 0.0
    %2307 = vmatpush1.msra.mxu0 %v1695
    %2308 = vmatprep.subr.mxu0 0.0
    %2309 = vmatpush1.msra.mxu0 %v1697
    %2310 = vmatprep.subr.mxu0 0.0
    %2311 = vmatpush1.msra.mxu0 %v1699
    %2312 = vmatprep.subr.mxu0 0.0
    %2313 = vmatpush1.msra.mxu0 %v1701
    %2314 = vmatprep.subr.mxu0 0.0
    %2315 = vmatpush1.msra.mxu0 %v1703
    %2316 = vmatprep.subr.mxu0 0.0
    %2317 = vmatpush1.msra.mxu0 %v1705
    %2318 = vmatprep.subr.mxu0 0.0
    %2319 = vmatpush1.msra.mxu0 %v1707
    %2320 = vmatprep.subr.mxu0 0.0
    %2321 = vmatpush1.msra.mxu0 %v1709
    %2322 = vmatprep.subr.mxu0 0.0
    %2323 = vmatpush1.msra.mxu0 %v1711
    %2324 = vmatprep.subr.mxu0 0.0
    %2325 = vmatpush1.msra.mxu0 %v1713
    %2326 = vmatprep.subr.mxu0 0.0
    %2327 = vmatpush1.msra.mxu0 %v1715
    %2328 = vmatprep.mubr.f32.mxu0 %v1852
    %2329 = vmatmul.mubr.f32.gmra.mrb[0].mxu0 %v1851
    %v2330 = vpop.f32.mrb[0].mxu0
    %v2331 = vadd.f32 %v2226, %v2330
    %v2332 = vpop.f32.mrb[0].mxu0
    %2333 = vmatprep.mubr.f32.mxu0 %v1862
    %2334 = vmatmul.mubr.f32.gmra.mrb[0].mxu0 %v1861
    %v2335 = vpop.f32.mrb[0].mxu0
    %v2336 = vadd.f32 %v2231, %v2335
    %v2337 = vpop.f32.mrb[0].mxu0
    %2338 = vmatprep.mubr.f32.mxu0 %v1872
    %2339 = vmatmul.mubr.f32.gmra.mrb[0].mxu0 %v1871
    %v2340 = vpop.f32.mrb[0].mxu0
    %v2341 = vadd.f32 %v2236, %v2340
    %v2342 = vpop.f32.mrb[0].mxu0
    %2343 = vmatprep.mubr.f32.mxu0 %v1882
    %2344 = vmatmul.mubr.f32.gmra.mrb[0].mxu0 %v1881
    %v2345 = vpop.f32.mrb[0].mxu0
    %v2346 = vadd.f32 %v2241, %v2345
    %v2347 = vpop.f32.mrb[0].mxu0
    %2348 = vmatprep.mubr.f32.mxu0 %v1892
    %2349 = vmatmul.mubr.f32.gmra.mrb[0].mxu0 %v1891
    %v2350 = vpop.f32.mrb[0].mxu0
    %v2351 = vadd.f32 %v2246, %v2350
    %v2352 = vpop.f32.mrb[0].mxu0
    %2353 = vmatprep.mubr.f32.mxu0 %v1902
    %2354 = vmatmul.mubr.f32.gmra.mrb[0].mxu0 %v1901
    %v2355 = vpop.f32.mrb[0].mxu0
    %v2356 = vadd.f32 %v2251, %v2355
    %v2357 = vpop.f32.mrb[0].mxu0
    %2358 = vmatprep.mubr.f32.mxu0 %v1912
    %2359 = vmatmul.mubr.f32.gmra.mrb[0].mxu0 %v1911
    %v2360 = vpop.f32.mrb[0].mxu0
    %v2361 = vadd.f32 %v2256, %v2360
    %v2362 = vpop.f32.mrb[0].mxu0
    %2363 = vmatprep.mubr.f32.mxu0 %v1922
    %2364 = vmatmul.mubr.f32.gmra.mrb[0].mxu0 %v1921
    %v2365 = vpop.f32.mrb[0].mxu0
    %v2366 = vadd.f32 %v2261, %v2365
    %v2367 = vpop.f32.mrb[0].mxu0
    %2368 = vdwg.mxu0
    %2369 = vmatprep.subr.mxu0 0.0
    %2370 = vmatpush1.msra.mxu0 %v1717
    %2371 = vmatprep.subr.mxu0 0.0
    %2372 = vmatpush1.msra.mxu0 %v1719
    %2373 = vmatprep.subr.mxu0 0.0
    %2374 = vmatpush1.msra.mxu0 %v1721
    %2375 = vmatprep.subr.mxu0 0.0
    %2376 = vmatpush1.msra.mxu0 %v1723
    %2377 = vmatprep.subr.mxu0 0.0
    %2378 = vmatpush1.msra.mxu0 %v1725
    %2379 = vmatprep.subr.mxu0 0.0
    %2380 = vmatpush1.msra.mxu0 %v1727
    %2381 = vmatprep.subr.mxu0 0.0
    %2382 = vmatpush1.msra.mxu0 %v1729
    %2383 = vmatprep.subr.mxu0 0.0
    %2384 = vmatpush1.msra.mxu0 %v1731
    %2385 = vmatprep.subr.mxu0 0.0
    %2386 = vmatpush1.msra.mxu0 %v1733
    %2387 = vmatprep.subr.mxu0 0.0
    %2388 = vmatpush1.msra.mxu0 %v1735
    %2389 = vmatprep.subr.mxu0 0.0
    %2390 = vmatpush1.msra.mxu0 %v1737
    %2391 = vmatprep.subr.mxu0 0.0
    %2392 = vmatpush1.msra.mxu0 %v1739
    %2393 = vmatprep.subr.mxu0 0.0
    %2394 = vmatpush1.msra.mxu0 %v1741
    %2395 = vmatprep.subr.mxu0 0.0
    %2396 = vmatpush1.msra.mxu0 %v1743
    %2397 = vmatprep.subr.mxu0 0.0
    %2398 = vmatpush1.msra.mxu0 %v1745
    %2399 = vmatprep.subr.mxu0 0.0
    %2400 = vmatpush1.msra.mxu0 %v1747
    %2401 = vmatprep.subr.mxu0 0.0
    %2402 = vmatpush1.msra.mxu0 %v1749
    %2403 = vmatprep.subr.mxu0 0.0
    %2404 = vmatpush1.msra.mxu0 %v1751
    %2405 = vmatprep.subr.mxu0 0.0
    %2406 = vmatpush1.msra.mxu0 %v1753
    %2407 = vmatprep.subr.mxu0 0.0
    %2408 = vmatpush1.msra.mxu0 %v1755
    %2409 = vmatprep.subr.mxu0 0.0
    %2410 = vmatpush1.msra.mxu0 %v1757
    %2411 = vmatprep.subr.mxu0 0.0
    %2412 = vmatpush1.msra.mxu0 %v1759
    %2413 = vmatprep.subr.mxu0 0.0
    %2414 = vmatpush1.msra.mxu0 %v1761
    %2415 = vmatprep.subr.mxu0 0.0
    %2416 = vmatpush1.msra.mxu0 %v1763
    %2417 = vmatprep.subr.mxu0 0.0
    %2418 = vmatpush1.msra.mxu0 %v1765
    %2419 = vmatprep.subr.mxu0 0.0
    %2420 = vmatpush1.msra.mxu0 %v1767
    %2421 = vmatprep.subr.mxu0 0.0
    %2422 = vmatpush1.msra.mxu0 %v1769
    %2423 = vmatprep.subr.mxu0 0.0
    %2424 = vmatpush1.msra.mxu0 0.0
    %2425 = vmatprep.subr.mxu0 0.0
    %2426 = vmatpush1.msra.mxu0 0.0
    %2427 = vmatprep.subr.mxu0 0.0
    %2428 = vmatpush1.msra.mxu0 0.0
    %2429 = vmatprep.subr.mxu0 0.0
    %2430 = vmatpush1.msra.mxu0 0.0
    %2431 = vmatprep.subr.mxu0 0.0
    %2432 = vmatpush1.msra.mxu0 0.0
    %2433 = vmatprep.mubr.f32.mxu0 %v1926
    %2434 = vmatmul.mubr.f32.gmra.mrb[0].mxu0 %v1853
    %v2435 = vpop.f32.mrb[0].mxu0
    %v2436 = vadd.f32 %v2331, %v2435
    %v2437 = vpop.f32.mrb[0].mxu0
    %2438 = vmatprep.mubr.f32.mxu0 %v1929
    %2439 = vmatmul.mubr.f32.gmra.mrb[0].mxu0 %v1863
    %v2440 = vpop.f32.mrb[0].mxu0
    %v2441 = vadd.f32 %v2336, %v2440
    %v2442 = vpop.f32.mrb[0].mxu0
    %2443 = vmatprep.mubr.f32.mxu0 %v1932
    %2444 = vmatmul.mubr.f32.gmra.mrb[0].mxu0 %v1873
    %v2445 = vpop.f32.mrb[0].mxu0
    %v2446 = vadd.f32 %v2341, %v2445
    %v2447 = vpop.f32.mrb[0].mxu0
    %2448 = vmatprep.mubr.f32.mxu0 %v1935
    %2449 = vmatmul.mubr.f32.gmra.mrb[0].mxu0 %v1883
    %v2450 = vpop.f32.mrb[0].mxu0
    %v2451 = vadd.f32 %v2346, %v2450
    %v2452 = vpop.f32.mrb[0].mxu0
    %2453 = vmatprep.mubr.f32.mxu0 %v1938
    %2454 = vmatmul.mubr.f32.gmra.mrb[0].mxu0 %v1893
    %v2455 = vpop.f32.mrb[0].mxu0
    %v2456 = vadd.f32 %v2351, %v2455
    %v2457 = vpop.f32.mrb[0].mxu0
    %2458 = vmatprep.mubr.f32.mxu0 %v1941
    %2459 = vmatmul.mubr.f32.gmra.mrb[0].mxu0 %v1903
    %v2460 = vpop.f32.mrb[0].mxu0
    %v2461 = vadd.f32 %v2356, %v2460
    %v2462 = vpop.f32.mrb[0].mxu0
    %2463 = vmatprep.mubr.f32.mxu0 %v1944
    %2464 = vmatmul.mubr.f32.gmra.mrb[0].mxu0 %v1913
    %v2465 = vpop.f32.mrb[0].mxu0
    %v2466 = vadd.f32 %v2361, %v2465
    %v2467 = vpop.f32.mrb[0].mxu0
    %2468 = vmatprep.mubr.f32.mxu0 %v1947
    %2469 = vmatmul.mubr.f32.gmra.mrb[0].mxu0 %v1923
    %v2470 = vpop.f32.mrb[0].mxu0
    %v2471 = vadd.f32 %v2366, %v2470
    %v2472 = vpop.f32.mrb[0].mxu0
    %2473 = vdwg.mxu0
    %vm2474 = vcmask 277504
    %v2475 = vsel %vm2474, %v2436, 0.0
    %2476 = vadd.xlane.f32.xlu0 %v2475
    %v2477 = vpop.xlane.xlu0 %2476
    %v2478 = vsel %vm2474, %v2441, 0.0
    %2479 = vadd.xlane.f32.xlu0 %v2478
    %v2480 = vpop.xlane.xlu0 %2479
    %v2481 = vsel %vm2474, %v2446, 0.0
    %2482 = vadd.xlane.f32.xlu0 %v2481
    %v2483 = vpop.xlane.xlu0 %2482
    %v2484 = vsel %vm2474, %v2451, 0.0
    %2485 = vadd.xlane.f32.xlu0 %v2484
    %v2486 = vpop.xlane.xlu0 %2485
    %v2487 = vsel %vm2474, %v2456, 0.0
    %2488 = vadd.xlane.f32.xlu0 %v2487
    %v2489 = vpop.xlane.xlu0 %2488
    %v2490 = vsel %vm2474, %v2461, 0.0
    %2491 = vadd.xlane.f32.xlu0 %v2490
    %v2492 = vpop.xlane.xlu0 %2491
    %v2493 = vsel %vm2474, %v2466, 0.0
    %2494 = vadd.xlane.f32.xlu0 %v2493
    %v2495 = vpop.xlane.xlu0 %2494
    %vm2496 = vcmask 273408
    %v2497 = vsel %vm2496, %v2471, 0.0
    %2498 = vadd.xlane.f32.xlu0 %v2497
    %v2499 = vpop.xlane.xlu0 %2498
    %v2505 = vrot.slane %v2486, 6
    %v2506 = vrot.slane %v2489, 6
    %v2507 = vsel %vm245, %v2505, %v2506
    %v2508 = vrot.slane %v2492, 6
    %v2509 = vsel %vm245, %v2506, %v2508
    %v2510 = vrot.slane %v2495, 6
    %v2511 = vsel %vm245, %v2508, %v2510
    %v2512 = vrot.slane %v2499, 6
    %v2513 = vsel %vm245, %v2510, %v2512
    %v2518 = vadd.f32 %v2477, %v2507
    %v2519 = vadd.f32 %v2480, %v2509
    %v2520 = vadd.f32 %v2483, %v2511
    %v2521 = vadd.f32 %v2486, %v2513
    %v2522 = vrcp.pop 68.0
    %v2523 = vmul.f32 %v2518, %v2522
    %v2524 = vmul.f32 %v2519, %v2522
    %v2525 = vmul.f32 %v2520, %v2522
    %v2526 = vmul.f32 %v2521, %v2522
    %v2531 = vrot.slane %v2523, 2
    %v2532 = vrot.slane %v2524, 2
    %v2533 = vsel %vm232, %v2531, %v2532
    %v2534 = vrot.slane %v2525, 2
    %v2535 = vsel %vm232, %v2532, %v2534
    %v2536 = vrot.slane %v2526, 2
    %v2537 = vsel %vm232, %v2534, %v2536
    %v2539 = vsel %vm232, %v2526, %v2531
    %2540 = vset.pattern.permute.xlu0 0
    %2541 = vperm.xlu0 %2540, %v2523
    %v2542 = vpop.permute.xlu0 %2541
    %2544 = vset.pattern.permute.xlu0 0
    %2545 = vperm.xlu0 %2544, %v2524
    %v2546 = vpop.permute.xlu0 %2545
    %2548 = vset.pattern.permute.xlu0 0
    %2549 = vperm.xlu0 %2548, %v2525
    %v2550 = vpop.permute.xlu0 %2549
    %2553 = vset.pattern.permute.xlu0 0
    %2554 = vperm.xlu0 %2553, %v2539
    %v2555 = vpop.permute.xlu0 %2554
    %2557 = vset.pattern.permute.xlu0 0
    %2558 = vperm.xlu0 %2557, %v2533
    %v2559 = vpop.permute.xlu0 %2558
    %2561 = vset.pattern.permute.xlu0 0
    %2562 = vperm.xlu0 %2561, %v2535
    %v2563 = vpop.permute.xlu0 %2562
    %2565 = vset.pattern.permute.xlu0 0
    %2566 = vperm.xlu0 %2565, %v2537
    %v2567 = vpop.permute.xlu0 %2566
    %2569 = vset.pattern.permute.xlu0 0
    %2570 = vperm.xlu0 %2569, %v2536
    %v2571 = vpop.permute.xlu0 %2570
    %v2573 = vsub.f32 %v2436, %v2542
    %v2574 = vsub.f32 %v2441, %v2546
    %v2575 = vsub.f32 %v2446, %v2550
    %v2576 = vsub.f32 %v2451, %v2555
    %v2577 = vsub.f32 %v2456, %v2559
    %v2578 = vsub.f32 %v2461, %v2563
    %v2579 = vsub.f32 %v2466, %v2567
    %v2580 = vsub.f32 %v2471, %v2571
    %v2581 = vmul.f32 %v2573, %v2573
    %v2582 = vmul.f32 %v2574, %v2574
    %v2583 = vmul.f32 %v2575, %v2575
    %v2584 = vmul.f32 %v2576, %v2576
    %v2585 = vmul.f32 %v2577, %v2577
    %v2586 = vmul.f32 %v2578, %v2578
    %v2587 = vmul.f32 %v2579, %v2579
    %v2588 = vmul.f32 %v2580, %v2580
    %v2589 = vsel %vm2474, %v2581, 0.0
    %2590 = vadd.xlane.f32.xlu0 %v2589
    %v2591 = vpop.xlane.xlu0 %2590
    %v2592 = vsel %vm2474, %v2582, 0.0
    %2593 = vadd.xlane.f32.xlu0 %v2592
    %v2594 = vpop.xlane.xlu0 %2593
    %v2595 = vsel %vm2474, %v2583, 0.0
    %2596 = vadd.xlane.f32.xlu0 %v2595
    %v2597 = vpop.xlane.xlu0 %2596
    %v2598 = vsel %vm2474, %v2584, 0.0
    %2599 = vadd.xlane.f32.xlu0 %v2598
    %v2600 = vpop.xlane.xlu0 %2599
    %v2601 = vsel %vm2474, %v2585, 0.0
    %2602 = vadd.xlane.f32.xlu0 %v2601
    %v2603 = vpop.xlane.xlu0 %2602
    %v2604 = vsel %vm2474, %v2586, 0.0
    %2605 = vadd.xlane.f32.xlu0 %v2604
    %v2606 = vpop.xlane.xlu0 %2605
    %v2607 = vsel %vm2474, %v2587, 0.0
    %2608 = vadd.xlane.f32.xlu0 %v2607
    %v2609 = vpop.xlane.xlu0 %2608
    %v2610 = vsel %vm2496, %v2588, 0.0
    %2611 = vadd.xlane.f32.xlu0 %v2610
    %v2612 = vpop.xlane.xlu0 %2611
    %v2618 = vrot.slane %v2600, 6
    %v2619 = vrot.slane %v2603, 6
    %v2620 = vsel %vm245, %v2618, %v2619
    %v2621 = vrot.slane %v2606, 6
    %v2622 = vsel %vm245, %v2619, %v2621
    %v2623 = vrot.slane %v2609, 6
    %v2624 = vsel %vm245, %v2621, %v2623
    %v2625 = vrot.slane %v2612, 6
    %v2626 = vsel %vm245, %v2623, %v2625
    %v2631 = vadd.f32 %v2591, %v2620
    %v2632 = vadd.f32 %v2594, %v2622
    %v2633 = vadd.f32 %v2597, %v2624
    %v2634 = vadd.f32 %v2600, %v2626
    %v2635 = vmul.f32 %v2631, %v2522
    %v2636 = vmul.f32 %v2632, %v2522
    %v2637 = vmul.f32 %v2633, %v2522
    %v2638 = vmul.f32 %v2634, %v2522
    %v2639 = vadd.f32 %v2635, 1e-05
    %v2640 = vadd.f32 %v2636, 1e-05
    %v2641 = vadd.f32 %v2637, 1e-05
    %v2642 = vadd.f32 %v2638, 1e-05
    %v2643 = vrsqrt.pop %v2639
    %v2644 = vrsqrt.pop %v2640
    %v2645 = vrsqrt.pop %v2641
    %v2646 = vrsqrt.pop %v2642
    %v2651 = vrot.slane %v2643, 2
    %v2652 = vrot.slane %v2644, 2
    %v2653 = vsel %vm232, %v2651, %v2652
    %v2654 = vrot.slane %v2645, 2
    %v2655 = vsel %vm232, %v2652, %v2654
    %v2656 = vrot.slane %v2646, 2
    %v2657 = vsel %vm232, %v2654, %v2656
    %v2659 = vsel %vm232, %v2646, %v2651
    %2660 = vset.pattern.permute.xlu0 0
    %2661 = vperm.xlu0 %2660, %v2643
    %v2662 = vpop.permute.xlu0 %2661
    %2664 = vset.pattern.permute.xlu0 0
    %2665 = vperm.xlu0 %2664, %v2644
    %v2666 = vpop.permute.xlu0 %2665
    %2668 = vset.pattern.permute.xlu0 0
    %2669 = vperm.xlu0 %2668, %v2645
    %v2670 = vpop.permute.xlu0 %2669
    %2673 = vset.pattern.permute.xlu0 0
    %2674 = vperm.xlu0 %2673, %v2659
    %v2675 = vpop.permute.xlu0 %2674
    %2677 = vset.pattern.permute.xlu0 0
    %2678 = vperm.xlu0 %2677, %v2653
    %v2679 = vpop.permute.xlu0 %2678
    %2681 = vset.pattern.permute.xlu0 0
    %2682 = vperm.xlu0 %2681, %v2655
    %v2683 = vpop.permute.xlu0 %2682
    %2685 = vset.pattern.permute.xlu0 0
    %2686 = vperm.xlu0 %2685, %v2657
    %v2687 = vpop.permute.xlu0 %2686
    %2689 = vset.pattern.permute.xlu0 0
    %2690 = vperm.xlu0 %2689, %v2656
    %v2691 = vpop.permute.xlu0 %2690
    %v2693 = vmul.f32 %v2573, %v2662
    %v2694 = vmul.f32 %v2574, %v2666
    %v2695 = vmul.f32 %v2575, %v2670
    %v2696 = vmul.f32 %v2576, %v2675
    %v2697 = vmul.f32 %v2577, %v2679
    %v2698 = vmul.f32 %v2578, %v2683
    %v2699 = vmul.f32 %v2579, %v2687
    %v2700 = vmul.f32 %v2580, %v2691
    %vm2701 = vcmp.gt.f32.partialorder %v2693, 0.0
    %vm2702 = vcmp.gt.f32.partialorder %v2694, 0.0
    %vm2703 = vcmp.gt.f32.partialorder %v2695, 0.0
    %vm2704 = vcmp.gt.f32.partialorder %v2696, 0.0
    %vm2705 = vcmp.gt.f32.partialorder %v2697, 0.0
    %vm2706 = vcmp.gt.f32.partialorder %v2698, 0.0
    %vm2707 = vcmp.gt.f32.partialorder %v2699, 0.0
    %vm2708 = vcmp.gt.f32.partialorder %v2700, 0.0
    %v2709 = vmul.f32 %v2693, 0.01
    %v2710 = vmul.f32 %v2694, 0.01
    %v2711 = vmul.f32 %v2695, 0.01
    %v2712 = vmul.f32 %v2696, 0.01
    %v2713 = vmul.f32 %v2697, 0.01
    %v2714 = vmul.f32 %v2698, 0.01
    %v2715 = vmul.f32 %v2699, 0.01
    %v2716 = vmul.f32 %v2700, 0.01
    %v2717 = vsel %vm2701, %v2693, %v2709
    %v2718 = vsel %vm2702, %v2694, %v2710
    %v2719 = vsel %vm2703, %v2695, %v2711
    %v2720 = vsel %vm2704, %v2696, %v2712
    %v2721 = vsel %vm2705, %v2697, %v2713
    %v2722 = vsel %vm2706, %v2698, %v2714
    %v2723 = vsel %vm2707, %v2699, %v2715
    %v2724 = vsel %vm2708, %v2700, %v2716
    %v2725 = vlaneseq
    %v2726 = vshrl.u32 %v2725, 7
    %v2727 = vadd.s32 %v2726, 8
    %v2728 = vadd.s32 %v2726, 16
    %v2729 = vadd.s32 %v2726, 24
    %v2730 = vadd.s32 %v2726, 32
    %v2731 = vadd.s32 %v2726, 40
    %v2732 = vadd.s32 %v2726, 48
    %v2733 = vadd.s32 %v2726, 56
    %v2734 = vlaneseq
    %v2735 = vand.u32 %v2734, 127
    %vm2736 = vcmp.ge.s32.totalorder %v2726, 30
    %vm2737 = vcmp.ge.s32.totalorder %v2727, 30
    %vm2738 = vcmp.ge.s32.totalorder %v2728, 30
    %vm2739 = vcmp.ge.s32.totalorder %v2729, 30
    %vm2740 = vcmp.ge.s32.totalorder %v2730, 30
    %vm2741 = vcmp.ge.s32.totalorder %v2731, 30
    %vm2742 = vcmp.ge.s32.totalorder %v2732, 30
    %vm2743 = vcmp.ge.s32.totalorder %v2733, 30
    %v2744 = vsel %vm2736, 1, 0
    %v2745 = vsel %vm2737, 1, 0
    %v2746 = vsel %vm2738, 1, 0
    %v2747 = vsel %vm2739, 1, 0
    %v2748 = vsel %vm2740, 1, 0
    %v2749 = vsel %vm2741, 1, 0
    %v2750 = vsel %vm2742, 1, 0
    %v2751 = vsel %vm2743, 1, 0
    %v2752 = vmul.u32 %v2744, 30
    %v2753 = vmul.u32 %v2745, 30
    %v2754 = vmul.u32 %v2746, 30
    %v2755 = vmul.u32 %v2747, 30
    %v2756 = vmul.u32 %v2748, 30
    %v2757 = vmul.u32 %v2749, 30
    %v2758 = vmul.u32 %v2750, 30
    %v2759 = vmul.u32 %v2751, 30
    %v2760 = vsub.s32 %v2726, %v2752
    %v2761 = vsub.s32 %v2727, %v2753
    %v2762 = vsub.s32 %v2728, %v2754
    %v2763 = vsub.s32 %v2729, %v2755
    %v2764 = vsub.s32 %v2730, %v2756
    %v2765 = vsub.s32 %v2731, %v2757
    %v2766 = vsub.s32 %v2732, %v2758
    %v2767 = vsub.s32 %v2733, %v2759
    %vm2768 = vcmp.ge.s32.totalorder %v2735, 30
    %v2769 = vsel %vm2768, 1, 0
    %v2770 = vmul.u32 %v2769, 30
    %v2771 = vsub.s32 %v2735, %v2770
    %vm2772 = vcmp.ge.s32.totalorder %v2735, 60
    %v2773 = vsel %vm2772, 1, 0
    %v2774 = vmul.u32 %v2773, 30
    %v2775 = vsub.s32 %v2771, %v2774
    %vm2776 = vcmp.ge.s32.totalorder %v2735, 90
    %v2777 = vsel %vm2776, 1, 0
    %v2778 = vmul.u32 %v2777, 30
    %v2779 = vsub.s32 %v2775, %v2778
    %vm2780 = vcmp.eq.s32.totalorder %v2760, %v2779
    %vm2781 = vcmp.eq.s32.totalorder %v2761, %v2779
    %vm2782 = vcmp.eq.s32.totalorder %v2762, %v2779
    %vm2783 = vcmp.eq.s32.totalorder %v2763, %v2779
    %vm2784 = vcmp.eq.s32.totalorder %v2764, %v2779
    %vm2785 = vcmp.eq.s32.totalorder %v2765, %v2779
    %vm2786 = vcmp.eq.s32.totalorder %v2766, %v2779
    %vm2787 = vcmp.eq.s32.totalorder %v2767, %v2779
    %v2788 = vsel %vm2780, 1, 0
    %v2789 = vsel %vm2781, 1, 0
    %v2790 = vsel %vm2782, 1, 0
    %v2791 = vsel %vm2783, 1, 0
    %v2792 = vsel %vm2784, 1, 0
    %v2793 = vsel %vm2785, 1, 0
    %v2794 = vsel %vm2786, 1, 0
    %v2795 = vsel %vm2787, 1, 0
    %v2796 = vcvt.s32.f32 %v2788
    %v2797 = vcvt.s32.f32 %v2789
    %v2798 = vcvt.s32.f32 %v2790
    %v2799 = vcvt.s32.f32 %v2791
    %v2800 = vcvt.s32.f32 %v2792
    %v2801 = vcvt.s32.f32 %v2793
    %v2802 = vcvt.s32.f32 %v2794
    %v2803 = vcvt.s32.f32 %v2795
    %v2804 = vadd.s32 %v2726, 64
    %v2805 = vadd.s32 %v2726, 72
    %v2806 = vadd.s32 %v2726, 80
    %v2807 = vadd.s32 %v2726, 88
    %v2808 = vadd.s32 %v2726, 96
    %v2809 = vadd.s32 %v2726, 104
    %v2810 = vadd.s32 %v2726, 112
    %vm2811 = vcmp.ge.s32.totalorder %v2804, 30
    %vm2812 = vcmp.ge.s32.totalorder %v2805, 30
    %vm2813 = vcmp.ge.s32.totalorder %v2806, 30
    %vm2814 = vcmp.ge.s32.totalorder %v2807, 30
    %vm2815 = vcmp.ge.s32.totalorder %v2808, 30
    %vm2816 = vcmp.ge.s32.totalorder %v2809, 30
    %vm2817 = vcmp.ge.s32.totalorder %v2810, 30
    %v2818 = vsel %vm2811, 1, 0
    %v2819 = vsel %vm2812, 1, 0
    %v2820 = vsel %vm2813, 1, 0
    %v2821 = vsel %vm2814, 1, 0
    %v2822 = vsel %vm2815, 1, 0
    %v2823 = vsel %vm2816, 1, 0
    %v2824 = vsel %vm2817, 1, 0
    %vm2825 = vcmp.ge.s32.totalorder %v2726, 60
    %vm2826 = vcmp.ge.s32.totalorder %v2727, 60
    %vm2827 = vcmp.ge.s32.totalorder %v2728, 60
    %vm2828 = vcmp.ge.s32.totalorder %v2729, 60
    %vm2829 = vcmp.ge.s32.totalorder %v2730, 60
    %vm2830 = vcmp.ge.s32.totalorder %v2731, 60
    %vm2831 = vcmp.ge.s32.totalorder %v2732, 60
    %vm2832 = vcmp.ge.s32.totalorder %v2733, 60
    %vm2833 = vcmp.ge.s32.totalorder %v2804, 60
    %vm2834 = vcmp.ge.s32.totalorder %v2805, 60
    %vm2835 = vcmp.ge.s32.totalorder %v2806, 60
    %vm2836 = vcmp.ge.s32.totalorder %v2807, 60
    %vm2837 = vcmp.ge.s32.totalorder %v2808, 60
    %vm2838 = vcmp.ge.s32.totalorder %v2809, 60
    %vm2839 = vcmp.ge.s32.totalorder %v2810, 60
    %v2840 = vsel %vm2825, 1, 0
    %v2841 = vsel %vm2826, 1, 0
    %v2842 = vsel %vm2827, 1, 0
    %v2843 = vsel %vm2828, 1, 0
    %v2844 = vsel %vm2829, 1, 0
    %v2845 = vsel %vm2830, 1, 0
    %v2846 = vsel %vm2831, 1, 0
    %v2847 = vsel %vm2832, 1, 0
    %v2848 = vsel %vm2833, 1, 0
    %v2849 = vsel %vm2834, 1, 0
    %v2850 = vsel %vm2835, 1, 0
    %v2851 = vsel %vm2836, 1, 0
    %v2852 = vsel %vm2837, 1, 0
    %v2853 = vsel %vm2838, 1, 0
    %v2854 = vsel %vm2839, 1, 0
    %v2855 = vadd.s32 %v2744, %v2840
    %v2856 = vadd.s32 %v2745, %v2841
    %v2857 = vadd.s32 %v2746, %v2842
    %v2858 = vadd.s32 %v2747, %v2843
    %v2859 = vadd.s32 %v2748, %v2844
    %v2860 = vadd.s32 %v2749, %v2845
    %v2861 = vadd.s32 %v2750, %v2846
    %v2862 = vadd.s32 %v2751, %v2847
    %v2863 = vadd.s32 %v2818, %v2848
    %v2864 = vadd.s32 %v2819, %v2849
    %v2865 = vadd.s32 %v2820, %v2850
    %v2866 = vadd.s32 %v2821, %v2851
    %v2867 = vadd.s32 %v2822, %v2852
    %v2868 = vadd.s32 %v2823, %v2853
    %v2869 = vadd.s32 %v2824, %v2854
    %vm2870 = vcmp.ge.s32.totalorder %v2726, 90
    %vm2871 = vcmp.ge.s32.totalorder %v2727, 90
    %vm2872 = vcmp.ge.s32.totalorder %v2728, 90
    %vm2873 = vcmp.ge.s32.totalorder %v2729, 90
    %vm2874 = vcmp.ge.s32.totalorder %v2730, 90
    %vm2875 = vcmp.ge.s32.totalorder %v2731, 90
    %vm2876 = vcmp.ge.s32.totalorder %v2732, 90
    %vm2877 = vcmp.ge.s32.totalorder %v2733, 90
    %vm2878 = vcmp.ge.s32.totalorder %v2804, 90
    %vm2879 = vcmp.ge.s32.totalorder %v2805, 90
    %vm2880 = vcmp.ge.s32.totalorder %v2806, 90
    %vm2881 = vcmp.ge.s32.totalorder %v2807, 90
    %vm2882 = vcmp.ge.s32.totalorder %v2808, 90
    %vm2883 = vcmp.ge.s32.totalorder %v2809, 90
    %vm2884 = vcmp.ge.s32.totalorder %v2810, 90
    %v2885 = vsel %vm2870, 1, 0
    %v2886 = vsel %vm2871, 1, 0
    %v2887 = vsel %vm2872, 1, 0
    %v2888 = vsel %vm2873, 1, 0
    %v2889 = vsel %vm2874, 1, 0
    %v2890 = vsel %vm2875, 1, 0
    %v2891 = vsel %vm2876, 1, 0
    %v2892 = vsel %vm2877, 1, 0
    %v2893 = vsel %vm2878, 1, 0
    %v2894 = vsel %vm2879, 1, 0
    %v2895 = vsel %vm2880, 1, 0
    %v2896 = vsel %vm2881, 1, 0
    %v2897 = vsel %vm2882, 1, 0
    %v2898 = vsel %vm2883, 1, 0
    %v2899 = vsel %vm2884, 1, 0
    %v2900 = vadd.s32 %v2855, %v2885
    %v2901 = vadd.s32 %v2856, %v2886
    %v2902 = vadd.s32 %v2857, %v2887
    %v2903 = vadd.s32 %v2858, %v2888
    %v2904 = vadd.s32 %v2859, %v2889
    %v2905 = vadd.s32 %v2860, %v2890
    %v2906 = vadd.s32 %v2861, %v2891
    %v2907 = vadd.s32 %v2862, %v2892
    %v2908 = vadd.s32 %v2863, %v2893
    %v2909 = vadd.s32 %v2864, %v2894
    %v2910 = vadd.s32 %v2865, %v2895
    %v2911 = vadd.s32 %v2866, %v2896
    %v2912 = vadd.s32 %v2867, %v2897
    %v2913 = vadd.s32 %v2868, %v2898
    %v2914 = vadd.s32 %v2869, %v2899
    %vm2915 = vcmp.eq.s32.totalorder %v2900, %v2735
    %vm2916 = vcmp.eq.s32.totalorder %v2901, %v2735
    %vm2917 = vcmp.eq.s32.totalorder %v2902, %v2735
    %vm2918 = vcmp.eq.s32.totalorder %v2903, %v2735
    %vm2919 = vcmp.eq.s32.totalorder %v2904, %v2735
    %vm2920 = vcmp.eq.s32.totalorder %v2905, %v2735
    %vm2921 = vcmp.eq.s32.totalorder %v2906, %v2735
    %vm2922 = vcmp.eq.s32.totalorder %v2907, %v2735
    %vm2923 = vcmp.eq.s32.totalorder %v2908, %v2735
    %vm2924 = vcmp.eq.s32.totalorder %v2909, %v2735
    %vm2925 = vcmp.eq.s32.totalorder %v2910, %v2735
    %vm2926 = vcmp.eq.s32.totalorder %v2911, %v2735
    %vm2927 = vcmp.eq.s32.totalorder %v2912, %v2735
    %vm2928 = vcmp.eq.s32.totalorder %v2913, %v2735
    %vm2929 = vcmp.eq.s32.totalorder %v2914, %v2735
    %v2930 = vsel %vm2915, 1, 0
    %v2931 = vsel %vm2916, 1, 0
    %v2932 = vsel %vm2917, 1, 0
    %v2933 = vsel %vm2918, 1, 0
    %v2934 = vsel %vm2919, 1, 0
    %v2935 = vsel %vm2920, 1, 0
    %v2936 = vsel %vm2921, 1, 0
    %v2937 = vsel %vm2922, 1, 0
    %v2938 = vsel %vm2923, 1, 0
    %v2939 = vsel %vm2924, 1, 0
    %v2940 = vsel %vm2925, 1, 0
    %v2941 = vsel %vm2926, 1, 0
    %v2942 = vsel %vm2927, 1, 0
    %v2943 = vsel %vm2928, 1, 0
    %v2944 = vsel %vm2929, 1, 0
    %v2945 = vcvt.s32.f32 %v2930
    %v2946 = vcvt.s32.f32 %v2931
    %v2947 = vcvt.s32.f32 %v2932
    %v2948 = vcvt.s32.f32 %v2933
    %v2949 = vcvt.s32.f32 %v2934
    %v2950 = vcvt.s32.f32 %v2935
    %v2951 = vcvt.s32.f32 %v2936
    %v2952 = vcvt.s32.f32 %v2937
    %v2953 = vcvt.s32.f32 %v2938
    %v2954 = vcvt.s32.f32 %v2939
    %v2955 = vcvt.s32.f32 %v2940
    %v2956 = vcvt.s32.f32 %v2941
    %v2957 = vcvt.s32.f32 %v2942
    %v2958 = vcvt.s32.f32 %v2943
    %v2959 = vcvt.s32.f32 %v2944
    %vm2960 = vcmp.eq.s32.totalorder %v2726, %v2769
    %v2961 = vsel %vm2960, 1, 0
    %v2962 = vcvt.s32.f32 %v2961
    %v2963 = vld [vmem:[#allocation11] sm:$0xff]
    %v2964 = vld [vmem:[#allocation11 + $0x8] sm:$0xff]
    %v2965 = vld [vmem:[#allocation11 + $0x10] sm:$0xff]
    %v2966 = vld [vmem:[#allocation11 + $0x18] sm:$0xff]
    %v2967 = vld [vmem:[#allocation11 + $0x20] sm:$0x3]
    %v2969 = vsel %vm2474, %v2717, 0
    %v2972 = vsel %vm2474, %v2718, 0
    %v2975 = vsel %vm2474, %v2719, 0
    %v2978 = vsel %vm2474, %v2720, 0
    %v2981 = vsel %vm2474, %v2721, 0
    %v2984 = vsel %vm2474, %v2722, 0
    %v2987 = vsel %vm2474, %v2723, 0
    %v2990 = vsel %vm2474, %v2724, 0
    %v2993 = vsel %vm245, %v2967, 0
    %2995 = vmatprep.subr.mxu0 0.0
    %2996 = vmatpush1.msra.mxu0 %v2963
    %2997 = vmatprep.subr.mxu0 0.0
    %2998 = vmatpush1.msra.mxu0 %v2964
    %2999 = vmatprep.subr.mxu0 0.0
    %3000 = vmatpush1.msra.mxu0 %v2965
    %3001 = vmatprep.subr.mxu0 0.0
    %3002 = vmatpush1.msra.mxu0 %v2966
    %3003 = vmatprep.subr.mxu0 0.0
    %3004 = vmatpush1.msra.mxu0 %v2993
    %3005 = vmatprep.subr.mxu0 0.0
    %3006 = vmatpush1.msra.mxu0 0.0
    %3007 = vmatprep.subr.mxu0 0.0
    %3008 = vmatpush1.msra.mxu0 0.0
    %3009 = vmatprep.subr.mxu0 0.0
    %3010 = vmatpush1.msra.mxu0 0.0
    %3011 = vmatprep.subr.mxu0 0.0
    %3012 = vmatpush1.msra.mxu0 0.0
    %3013 = vmatprep.subr.mxu0 0.0
    %3014 = vmatpush1.msra.mxu0 0.0
    %3015 = vmatprep.subr.mxu0 0.0
    %3016 = vmatpush1.msra.mxu0 0.0
    %3017 = vmatprep.subr.mxu0 0.0
    %3018 = vmatpush1.msra.mxu0 0.0
    %3019 = vmatprep.subr.mxu0 0.0
    %3020 = vmatpush1.msra.mxu0 0.0
    %3021 = vmatprep.subr.mxu0 0.0
    %3022 = vmatpush1.msra.mxu0 0.0
    %3023 = vmatprep.subr.mxu0 0.0
    %3024 = vmatpush1.msra.mxu0 0.0
    %3025 = vmatprep.subr.mxu0 0.0
    %3026 = vmatpush1.msra.mxu0 0.0
    %3027 = vmatprep.subr.mxu0 0.0
    %3028 = vmatpush1.msra.mxu0 0.0
    %3029 = vmatprep.subr.mxu0 0.0
    %3030 = vmatpush1.msra.mxu0 0.0
    %3031 = vmatprep.subr.mxu0 0.0
    %3032 = vmatpush1.msra.mxu0 0.0
    %3033 = vmatprep.subr.mxu0 0.0
    %3034 = vmatpush1.msra.mxu0 0.0
    %3035 = vmatprep.subr.mxu0 0.0
    %3036 = vmatpush1.msra.mxu0 0.0
    %3037 = vmatprep.subr.mxu0 0.0
    %3038 = vmatpush1.msra.mxu0 0.0
    %3039 = vmatprep.subr.mxu0 0.0
    %3040 = vmatpush1.msra.mxu0 0.0
    %3041 = vmatprep.subr.mxu0 0.0
    %3042 = vmatpush1.msra.mxu0 0.0
    %3043 = vmatprep.subr.mxu0 0.0
    %3044 = vmatpush1.msra.mxu0 0.0
    %3045 = vmatprep.subr.mxu0 0.0
    %3046 = vmatpush1.msra.mxu0 0.0
    %3047 = vmatprep.subr.mxu0 0.0
    %3048 = vmatpush1.msra.mxu0 0.0
    %3049 = vmatprep.subr.mxu0 0.0
    %3050 = vmatpush1.msra.mxu0 0.0
    %3051 = vmatprep.subr.mxu0 0.0
    %3052 = vmatpush1.msra.mxu0 0.0
    %3053 = vmatprep.subr.mxu0 0.0
    %3054 = vmatpush1.msra.mxu0 0.0
    %3055 = vmatprep.subr.mxu0 0.0
    %3056 = vmatpush1.msra.mxu0 0.0
    %3057 = vmatprep.subr.mxu0 0.0
    %3058 = vmatpush1.msra.mxu0 0.0
    %3059 = vmatprep.mubr.f32.mxu0 0.0
    %3060 = vmatmul.mubr.f32.gmra.mrb[0].mxu0 %v2969
    %v3061 = vpop.f32.mrb[0].mxu0
    %v3062 = vadd.f32 0.0, %v3061
    %v3063 = vpop.f32.mrb[0].mxu0
    %3064 = vmatprep.mubr.f32.mxu0 0.0
    %3065 = vmatmul.mubr.f32.gmra.mrb[0].mxu0 %v2972
    %v3066 = vpop.f32.mrb[0].mxu0
    %v3067 = vadd.f32 0.0, %v3066
    %v3068 = vpop.f32.mrb[0].mxu0
    %3069 = vmatprep.mubr.f32.mxu0 0.0
    %3070 = vmatmul.mubr.f32.gmra.mrb[0].mxu0 %v2975
    %v3071 = vpop.f32.mrb[0].mxu0
    %v3072 = vadd.f32 0.0, %v3071
    %v3073 = vpop.f32.mrb[0].mxu0
    %3074 = vmatprep.mubr.f32.mxu0 0.0
    %3075 = vmatmul.mubr.f32.gmra.mrb[0].mxu0 %v2978
    %v3076 = vpop.f32.mrb[0].mxu0
    %v3077 = vadd.f32 0.0, %v3076
    %v3078 = vpop.f32.mrb[0].mxu0
    %3079 = vmatprep.mubr.f32.mxu0 0.0
    %3080 = vmatmul.mubr.f32.gmra.mrb[0].mxu0 %v2981
    %v3081 = vpop.f32.mrb[0].mxu0
    %v3082 = vadd.f32 0.0, %v3081
    %v3083 = vpop.f32.mrb[0].mxu0
    %3084 = vmatprep.mubr.f32.mxu0 0.0
    %3085 = vmatmul.mubr.f32.gmra.mrb[0].mxu0 %v2984
    %v3086 = vpop.f32.mrb[0].mxu0
    %v3087 = vadd.f32 0.0, %v3086
    %v3088 = vpop.f32.mrb[0].mxu0
    %3089 = vmatprep.mubr.f32.mxu0 0.0
    %3090 = vmatmul.mubr.f32.gmra.mrb[0].mxu0 %v2987
    %v3091 = vpop.f32.mrb[0].mxu0
    %v3092 = vadd.f32 0.0, %v3091
    %v3093 = vpop.f32.mrb[0].mxu0
    %3094 = vmatprep.mubr.f32.mxu0 0.0
    %3095 = vmatmul.mubr.f32.gmra.mrb[0].mxu0 %v2990
    %v3096 = vpop.f32.mrb[0].mxu0
    %v3097 = vadd.f32 0.0, %v3096
    %v3098 = vpop.f32.mrb[0].mxu0
    %3099 = vdwg.mxu0
    %v3100 = vmul.f32 %v3062, %v2796
    %v3101 = vmul.f32 %v3067, %v2797
    %v3102 = vmul.f32 %v3072, %v2798
    %v3103 = vmul.f32 %v3077, %v2799
    %v3104 = vmul.f32 %v3082, %v2800
    %v3105 = vmul.f32 %v3087, %v2801
    %v3106 = vmul.f32 %v3092, %v2802
    %v3107 = vmul.f32 %v3097, %v2803
    %vm3108 = vcmask 982016
    %v3110 = vsel %vm3108, %v3100, 0
    %v3113 = vsel %vm3108, %v3101, 0
    %v3116 = vsel %vm3108, %v3102, 0
    %v3119 = vsel %vm3108, %v3103, 0
    %v3122 = vsel %vm3108, %v3104, 0
    %v3125 = vsel %vm3108, %v3105, 0
    %v3128 = vsel %vm3108, %v3106, 0
    %v3131 = vsel %vm3108, %v3107, 0
    %3133 = vmatprep.subr.mxu0 0.0
    %3134 = vmatpush1.msra.mxu0 %v2945
    %3135 = vmatprep.subr.mxu0 0.0
    %3136 = vmatpush1.msra.mxu0 %v2946
    %3137 = vmatprep.subr.mxu0 0.0
    %3138 = vmatpush1.msra.mxu0 %v2947
    %3139 = vmatprep.subr.mxu0 0.0
    %3140 = vmatpush1.msra.mxu0 %v2948
    %3141 = vmatprep.subr.mxu0 0.0
    %3142 = vmatpush1.msra.mxu0 %v2949
    %3143 = vmatprep.subr.mxu0 0.0
    %3144 = vmatpush1.msra.mxu0 %v2950
    %3145 = vmatprep.subr.mxu0 0.0
    %3146 = vmatpush1.msra.mxu0 %v2951
    %3147 = vmatprep.subr.mxu0 0.0
    %3148 = vmatpush1.msra.mxu0 %v2952
    %3149 = vmatprep.subr.mxu0 0.0
    %3150 = vmatpush1.msra.mxu0 %v2953
    %3151 = vmatprep.subr.mxu0 0.0
    %3152 = vmatpush1.msra.mxu0 %v2954
    %3153 = vmatprep.subr.mxu0 0.0
    %3154 = vmatpush1.msra.mxu0 %v2955
    %3155 = vmatprep.subr.mxu0 0.0
    %3156 = vmatpush1.msra.mxu0 %v2956
    %3157 = vmatprep.subr.mxu0 0.0
    %3158 = vmatpush1.msra.mxu0 %v2957
    %3159 = vmatprep.subr.mxu0 0.0
    %3160 = vmatpush1.msra.mxu0 %v2958
    %3161 = vmatprep.subr.mxu0 0.0
    %3162 = vmatpush1.msra.mxu0 %v2959
    %3163 = vmatprep.subr.mxu0 0.0
    %3164 = vmatpush1.msra.mxu0 0.0
    %3165 = vmatprep.subr.mxu0 0.0
    %3166 = vmatpush1.msra.mxu0 0.0
    %3167 = vmatprep.subr.mxu0 0.0
    %3168 = vmatpush1.msra.mxu0 0.0
    %3169 = vmatprep.subr.mxu0 0.0
    %3170 = vmatpush1.msra.mxu0 0.0
    %3171 = vmatprep.subr.mxu0 0.0
    %3172 = vmatpush1.msra.mxu0 0.0
    %3173 = vmatprep.subr.mxu0 0.0
    %3174 = vmatpush1.msra.mxu0 0.0
    %3175 = vmatprep.subr.mxu0 0.0
    %3176 = vmatpush1.msra.mxu0 0.0
    %3177 = vmatprep.subr.mxu0 0.0
    %3178 = vmatpush1.msra.mxu0 0.0
    %3179 = vmatprep.subr.mxu0 0.0
    %3180 = vmatpush1.msra.mxu0 0.0
    %3181 = vmatprep.subr.mxu0 0.0
    %3182 = vmatpush1.msra.mxu0 0.0
    %3183 = vmatprep.subr.mxu0 0.0
    %3184 = vmatpush1.msra.mxu0 0.0
    %3185 = vmatprep.subr.mxu0 0.0
    %3186 = vmatpush1.msra.mxu0 0.0
    %3187 = vmatprep.subr.mxu0 0.0
    %3188 = vmatpush1.msra.mxu0 0.0
    %3189 = vmatprep.subr.mxu0 0.0
    %3190 = vmatpush1.msra.mxu0 0.0
    %3191 = vmatprep.subr.mxu0 0.0
    %3192 = vmatpush1.msra.mxu0 0.0
    %3193 = vmatprep.subr.mxu0 0.0
    %3194 = vmatpush1.msra.mxu0 0.0
    %3195 = vmatprep.subr.mxu0 0.0
    %3196 = vmatpush1.msra.mxu0 0.0
    %3197 = vmatprep.mubr.f32.mxu0 0.0
    %3198 = vmatmul.mubr.f32.gmra.mrb[0].mxu0 %v3110
    %v3199 = vpop.f32.mrb[0].mxu0
    %v3200 = vadd.f32 0.0, %v3199
    %v3201 = vpop.f32.mrb[0].mxu0
    %3202 = vmatprep.mubr.f32.mxu0 0.0
    %3203 = vmatmul.mubr.f32.gmra.mrb[0].mxu0 %v3113
    %v3204 = vpop.f32.mrb[0].mxu0
    %v3205 = vadd.f32 0.0, %v3204
    %v3206 = vpop.f32.mrb[0].mxu0
    %3207 = vmatprep.mubr.f32.mxu0 0.0
    %3208 = vmatmul.mubr.f32.gmra.mrb[0].mxu0 %v3116
    %v3209 = vpop.f32.mrb[0].mxu0
    %v3210 = vadd.f32 0.0, %v3209
    %v3211 = vpop.f32.mrb[0].mxu0
    %3212 = vmatprep.mubr.f32.mxu0 0.0
    %3213 = vmatmul.mubr.f32.gmra.mrb[0].mxu0 %v3119
    %v3214 = vpop.f32.mrb[0].mxu0
    %v3215 = vadd.f32 0.0, %v3214
    %v3216 = vpop.f32.mrb[0].mxu0
    %3217 = vmatprep.mubr.f32.mxu0 0.0
    %3218 = vmatmul.mubr.f32.gmra.mrb[0].mxu0 %v3122
    %v3219 = vpop.f32.mrb[0].mxu0
    %v3220 = vadd.f32 0.0, %v3219
    %v3221 = vpop.f32.mrb[0].mxu0
    %3222 = vmatprep.mubr.f32.mxu0 0.0
    %3223 = vmatmul.mubr.f32.gmra.mrb[0].mxu0 %v3125
    %v3224 = vpop.f32.mrb[0].mxu0
    %v3225 = vadd.f32 0.0, %v3224
    %v3226 = vpop.f32.mrb[0].mxu0
    %3227 = vmatprep.mubr.f32.mxu0 0.0
    %3228 = vmatmul.mubr.f32.gmra.mrb[0].mxu0 %v3128
    %v3229 = vpop.f32.mrb[0].mxu0
    %v3230 = vadd.f32 0.0, %v3229
    %v3231 = vpop.f32.mrb[0].mxu0
    %3232 = vmatprep.mubr.f32.mxu0 0.0
    %3233 = vmatmul.mubr.f32.gmra.mrb[0].mxu0 %v3131
    %v3234 = vpop.f32.mrb[0].mxu0
    %v3235 = vadd.f32 0.0, %v3234
    %v3236 = vpop.f32.mrb[0].mxu0
    %3237 = vdwg.mxu0
    %v3238 = vld [vmem:[%s6] sm:$0x1]
    %v3240 = vlaneseq
    %v3241 = vshrl.u32 %v3240, 7
    %v3242 = vsub.s32 0, %v3241
    %v3243 = vrot.slane %v3238, %v3242
    %vm3245 = vcmask 490496
    %v3247 = vsel %vm3245, %v2962, 0
    %v3250 = vsel %vm121, %v3235, 0
    %3252 = vmatprep.subr.mxu0 0.0
    %3253 = vmatpush1.msra.mxu0 %v3200
    %3254 = vmatprep.subr.mxu0 0.0
    %3255 = vmatpush1.msra.mxu0 %v3205
    %3256 = vmatprep.subr.mxu0 0.0
    %3257 = vmatpush1.msra.mxu0 %v3210
    %3258 = vmatprep.subr.mxu0 0.0
    %3259 = vmatpush1.msra.mxu0 %v3215
    %3260 = vmatprep.subr.mxu0 0.0
    %3261 = vmatpush1.msra.mxu0 %v3220
    %3262 = vmatprep.subr.mxu0 0.0
    %3263 = vmatpush1.msra.mxu0 %v3225
    %3264 = vmatprep.subr.mxu0 0.0
    %3265 = vmatpush1.msra.mxu0 %v3230
    %3266 = vmatprep.subr.mxu0 0.0
    %3267 = vmatpush1.msra.mxu0 %v3250
    %3268 = vmatprep.subr.mxu0 0.0
    %3269 = vmatpush1.msra.mxu0 0.0
    %3270 = vmatprep.subr.mxu0 0.0
    %3271 = vmatpush1.msra.mxu0 0.0
    %3272 = vmatprep.subr.mxu0 0.0
    %3273 = vmatpush1.msra.mxu0 0.0
    %3274 = vmatprep.subr.mxu0 0.0
    %3275 = vmatpush1.msra.mxu0 0.0
    %3276 = vmatprep.subr.mxu0 0.0
    %3277 = vmatpush1.msra.mxu0 0.0
    %3278 = vmatprep.subr.mxu0 0.0
    %3279 = vmatpush1.msra.mxu0 0.0
    %3280 = vmatprep.subr.mxu0 0.0
    %3281 = vmatpush1.msra.mxu0 0.0
    %3282 = vmatprep.subr.mxu0 0.0
    %3283 = vmatpush1.msra.mxu0 0.0
    %3284 = vmatprep.subr.mxu0 0.0
    %3285 = vmatpush1.msra.mxu0 0.0
    %3286 = vmatprep.subr.mxu0 0.0
    %3287 = vmatpush1.msra.mxu0 0.0
    %3288 = vmatprep.subr.mxu0 0.0
    %3289 = vmatpush1.msra.mxu0 0.0
    %3290 = vmatprep.subr.mxu0 0.0
    %3291 = vmatpush1.msra.mxu0 0.0
    %3292 = vmatprep.subr.mxu0 0.0
    %3293 = vmatpush1.msra.mxu0 0.0
    %3294 = vmatprep.subr.mxu0 0.0
    %3295 = vmatpush1.msra.mxu0 0.0
    %3296 = vmatprep.subr.mxu0 0.0
    %3297 = vmatpush1.msra.mxu0 0.0
    %3298 = vmatprep.subr.mxu0 0.0
    %3299 = vmatpush1.msra.mxu0 0.0
    %3300 = vmatprep.subr.mxu0 0.0
    %3301 = vmatpush1.msra.mxu0 0.0
    %3302 = vmatprep.subr.mxu0 0.0
    %3303 = vmatpush1.msra.mxu0 0.0
    %3304 = vmatprep.subr.mxu0 0.0
    %3305 = vmatpush1.msra.mxu0 0.0
    %3306 = vmatprep.subr.mxu0 0.0
    %3307 = vmatpush1.msra.mxu0 0.0
    %3308 = vmatprep.subr.mxu0 0.0
    %3309 = vmatpush1.msra.mxu0 0.0
    %3310 = vmatprep.subr.mxu0 0.0
    %3311 = vmatpush1.msra.mxu0 0.0
    %3312 = vmatprep.subr.mxu0 0.0
    %3313 = vmatpush1.msra.mxu0 0.0
    %3314 = vmatprep.subr.mxu0 0.0
    %3315 = vmatpush1.msra.mxu0 0.0
    %3316 = vmatprep.mubr.f32.mxu0 0.0
    %3317 = vmatmul.mubr.f32.gmra.mrb[0].mxu0 %v3247
    %v3318 = vpop.f32.mrb[0].mxu0
    %v3319 = vadd.f32 %v3243, %v3318
    %v3320 = vpop.f32.mrb[0].mxu0
    %3321 = vdwg.mxu0
    %vm3322 = vcmp.gt.f32.partialorder %v3319, 0.0
    %v3323 = vmul.f32 %v3319, 0.01
    %v3324 = vsel %vm3322, %v3319, %v3323
    %vm3325 = vcmask 25600
    %3326 = vst.msk [vmem:[#allocation13] sm:$0x3] %vm3325, %v3324
    // Predicated region
    $region54: #{tpu_custom_call.1} parent=1 // pred_check
      _
    $region55: #{tpu_custom_call.1} parent=1 // pred_check_branch
      %3328 = sbr.rel (0) target = $region57
    $region56: #{tpu_custom_call.1} parent=1 // pred_region
      %s3330 = ssub.s32 32, 32
      %3331 = vsyncadd [#allocation4], %s3330
      %s3333 = sshll.u32 [#allocation13], 4
      %s3334 = int_to_ptr.vmem [resolvable:$true] %s3333
      %3336 = dma.vmem_to_hbm [thread:$0]  %s3334, 32, %s7, [#allocation4]
    $region57: #{tpu_custom_call.1} parent=1 // pred_fallthru
      _
    // Predicated region
    $region58: #{tpu_custom_call.1} parent=1 // pred_check
      _
    $region59: #{tpu_custom_call.1} parent=1 // pred_check_branch
      %3338 = sbr.rel (0) target = $region61
    $region60: #{tpu_custom_call.1} parent=1 // pred_region
      %3339 = dma.done [#allocation4], 32
    $region61: #{tpu_custom_call.1} parent=1 // pred_fallthru
      _
    %3340 = vsyncpa [#allocation3], 1
    %3341 = vsyncpa [#allocation6], 1
    %3342 = vsyncpa [#allocation9], 1
    %3343 = vsyncpa [#allocation12], 1
    %3344 = vsyncpa [#allocation4], 1

</llo_original>
